<compile_context>
chip_gen: v7x
topology: tpu7x:2x2x1
jax: 0.10.0
libtpu: 0.0.40
codegen_flags: <defaults>
</compile_context>

<pallas_src>
import jax
import jax.numpy as jnp
from jax import lax
from jax.experimental import pallas as pl
from jax.experimental.pallas import tpu as pltpu  # noqa: F401  (TPU backend)


def encoder_kernel(x_series_ref, x_tm_ref,
                   wehs_wh_ref, wehs_wc_ref, wehs_b_ref,
                   ue_wt_ref, ue_b_ref,
                   ve_w_ref, ve_b_ref,
                   wih_t_ref, whh_t_ref, b_ref,
                   iw_ref, ie_ref):
    """Full encoder forward: T-1 input-attention + LSTM steps in one program.

    Shapes (all resident in VMEM):
      x_series_ref : (B*n, Tm1)   per-driving-series rows (U_e input)
      x_tm_ref     : (Tm1, B, n)  time-major input slabs
      iw_ref       : (Tm1, B, n)  input_weighted (time-major)
      ie_ref       : (Tm1, B, H)  input_encoded  (time-major)
    """
    Tm1, B, n = x_tm_ref.shape
    H = whh_t_ref.shape[0]

    # ---- hoisted, time-invariant work ------------------------------------
    # U_e(x_k) over the full series of each driving variable: computed once.
    ue_x = (jnp.dot(x_series_ref[...], ue_wt_ref[...],
                    preferred_element_type=jnp.float32)
            + ue_b_ref[...]).reshape(B, n, Tm1)               # (B, n, Tm1)

    wehs_wh = wehs_wh_ref[...]       # (H, Tm1)   h-half of W_ehs, pre-transposed
    wehs_wc = wehs_wc_ref[...]       # (H, Tm1)   c-half of W_ehs, pre-transposed
    wehs_b = wehs_b_ref[...]         # (1, Tm1)
    ve_w = ve_w_ref[...]             # (1, Tm1)
    ve_b = ve_b_ref[...]             # (1, 1)
    wih_t = wih_t_ref[...]           # (n, 4H)
    whh_t = whh_t_ref[...]           # (H, 4H)
    b = b_ref[...]                   # (1, 4H)   b_ih + b_hh

    def step(t, carry):
        h, c = carry                 # (B, H), (B, H)

        # ---- input attention: W_ehs([h;c]) as two split dots (no concat) --
        we_h = (jnp.dot(h, wehs_wh, preferred_element_type=jnp.float32)
                + jnp.dot(c, wehs_wc, preferred_element_type=jnp.float32)
                + wehs_b)                                     # (B, Tm1)
        z = jnp.tanh(we_h[:, None, :] + ue_x)                 # (B, n, Tm1)
        e = jnp.sum(z * ve_w, axis=-1) + ve_b                 # (B, n)

        # softmax over the input_size axis (F.softmax default dim=1 for 2-D)
        e = e - jnp.max(e, axis=-1, keepdims=True)
        p = jnp.exp(e)
        a = p * pl.reciprocal(jnp.sum(p, axis=-1, keepdims=True), approx=True)

        x_hat = a * x_tm_ref[t]                               # (B, n)

        # ---- LSTM cell (PyTorch gate order: i, f, g, o) --------------------
        gates = (jnp.dot(x_hat, wih_t, preferred_element_type=jnp.float32)
                 + jnp.dot(h, whh_t, preferred_element_type=jnp.float32)
                 + b)                                         # (B, 4H)
        i_g = jax.nn.sigmoid(gates[:, 0:H])
        f_g = jax.nn.sigmoid(gates[:, H:2 * H])
        g_g = jnp.tanh(gates[:, 2 * H:3 * H])
        o_g = jax.nn.sigmoid(gates[:, 3 * H:4 * H])
        c_new = f_g * c + i_g * g_g
        h_new = o_g * jnp.tanh(c_new)

        iw_ref[t] = x_hat.astype(iw_ref.dtype)                # input_weighted[:, t, :]
        ie_ref[t] = h_new.astype(ie_ref.dtype)                # input_encoded[:, t, :]
        return h_new, c_new

    h0 = jnp.zeros((B, H), jnp.float32)
    c0 = jnp.zeros((B, H), jnp.float32)
    # Tm1 is static -> fully unrolled in-kernel loop (no grid-step overhead).
    lax.fori_loop(0, Tm1, step, (h0, c0), unroll=True)


def encoder_forward(x, params):
    """x: (B, T-1, input_size) float32 -> (input_weighted, input_encoded)."""
    B, Tm1, n = x.shape
    H = params['whh'].shape[1]

    # glue: layout plumbing only (transposes / reshapes; no compute hoisted
    # out of the kernel other than the constant b_ih + b_hh fold)
    x_tm = jnp.transpose(x, (1, 0, 2))                          # (Tm1, B, n)
    x_series = jnp.transpose(x, (0, 2, 1)).reshape(B * n, Tm1)  # (B*n, Tm1)
    wehs_wh_t = params['wehs_w'][:, :H].T                       # (H, Tm1)
    wehs_wc_t = params['wehs_w'][:, H:].T                       # (H, Tm1)
    wehs_b = params['wehs_b'].reshape(1, Tm1)
    ue_wt = params['ue_w'].T                                    # (Tm1, Tm1)
    ue_b = params['ue_b'].reshape(1, Tm1)
    ve_w = params['ve_w'].reshape(1, Tm1)
    ve_b = params['ve_b'].reshape(1, 1)
    wih_t = params['wih'].T                                     # (n, 4H)
    whh_t = params['whh'].T                                     # (H, 4H)
    b = (params['b_ih'] + params['b_hh']).reshape(1, 4 * H)

    # Single invocation (no grid): every operand is a full-array VMEM block,
    # outputs are written once per time step inside the unrolled loop and
    # DMA'd back to HBM once at kernel exit.
    iw_tm, ie_tm = pl.pallas_call(
        encoder_kernel,
        out_shape=(jax.ShapeDtypeStruct((Tm1, B, n), jnp.float32),
                   jax.ShapeDtypeStruct((Tm1, B, H), jnp.float32)),
    )(x_series, x_tm, wehs_wh_t, wehs_wc_t, wehs_b, ue_wt, ue_b,
      ve_w, ve_b, wih_t, whh_t, b)

    input_weighted = jnp.transpose(iw_tm, (1, 0, 2))   # (B, Tm1, n)
    input_encoded = jnp.transpose(ie_tm, (1, 0, 2))    # (B, Tm1, H)
    return input_weighted, input_encoded


def encoder_ref(x, params, H):
    """Pure-JAX reference mirroring the PyTorch forward."""
    B, Tm1, n = x.shape
    h = jnp.zeros((B, H), jnp.float32)
    c = jnp.zeros((B, H), jnp.float32)
    xk = jnp.transpose(x, (0, 2, 1)).reshape(B * n, Tm1)
    iw, ie = [], []
    for t in range(Tm1):
        hc = jnp.concatenate([h, c], axis=-1)
        we_h = hc @ params['wehs_w'].T + params['wehs_b']
        ue_x = xk @ params['ue_w'].T + params['ue_b']
        z = jnp.tanh(we_h[:, None, :] + ue_x.reshape(B, n, Tm1))
        e = jnp.sum(z * params['ve_w'].reshape(1, 1, Tm1), axis=-1) + params['ve_b'][0]
        a = jax.nn.softmax(e, axis=-1)
        x_hat = a * x[:, t, :]
        gates = (x_hat @ params['wih'].T + params['b_ih']
                 + h @ params['whh'].T + params['b_hh'])
        i_g = jax.nn.sigmoid(gates[:, :H])
        f_g = jax.nn.sigmoid(gates[:, H:2 * H])
        g_g = jnp.tanh(gates[:, 2 * H:3 * H])
        o_g = jax.nn.sigmoid(gates[:, 3 * H:])
        c = f_g * c + i_g * g_g
        h = o_g * jnp.tanh(c)
        iw.append(x_hat)
        ie.append(h)
    return jnp.stack(iw, axis=1), jnp.stack(ie, axis=1)


if __name__ == "__main__":
    B, input_size, hidden_size, T = 2, 4, 32, 9
    Tm1 = T - 1

    key = jax.random.PRNGKey(0)
    keys = jax.random.split(key, 11)

    def u(k, shape, scale=0.1):
        return jax.random.uniform(k, shape, jnp.float32, -scale, scale)

    params = {
        'wehs_w': u(keys[0], (Tm1, 2 * hidden_size)),
        'wehs_b': u(keys[1], (Tm1,)),
        'ue_w':   u(keys[2], (Tm1, Tm1)),
        'ue_b':   u(keys[3], (Tm1,)),
        've_w':   u(keys[4], (1, Tm1)),
        've_b':   u(keys[5], (1,)),
        'wih':    u(keys[6], (4 * hidden_size, input_size)),
        'whh':    u(keys[7], (4 * hidden_size, hidden_size)),
        'b_ih':   u(keys[8], (4 * hidden_size,)),
        'b_hh':   u(keys[9], (4 * hidden_size,)),
    }
    x = jax.random.normal(keys[10], (B, Tm1, input_size), jnp.float32)

    iw, ie = jax.jit(encoder_forward)(x, params)
    jax.block_until_ready((iw, ie))

    iw_ref, ie_ref = encoder_ref(x, params, hidden_size)
    assert iw.shape == (B, Tm1, input_size) and ie.shape == (B, Tm1, hidden_size)
    assert jnp.allclose(iw, iw_ref, atol=1e-3, rtol=1e-3), "input_weighted mismatch"
    assert jnp.allclose(ie, ie_ref, atol=1e-3, rtol=1e-3), "input_encoded mismatch"

    print("KERNEL_OK")
</pallas_src>

<mosaic_0001>
module attributes {stable_mosaic.version = 11 : i64} {
  func.func @encoder_kernel(%arg0: memref<8x8xf32, #tpu.memory_space<vmem>>, %arg1: memref<8x2x4xf32, #tpu.memory_space<vmem>>, %arg2: memref<32x8xf32, #tpu.memory_space<vmem>>, %arg3: memref<32x8xf32, #tpu.memory_space<vmem>>, %arg4: memref<1x8xf32, #tpu.memory_space<vmem>>, %arg5: memref<8x8xf32, #tpu.memory_space<vmem>>, %arg6: memref<1x8xf32, #tpu.memory_space<vmem>>, %arg7: memref<1x8xf32, #tpu.memory_space<vmem>>, %arg8: memref<1x1xf32, #tpu.memory_space<vmem>>, %arg9: memref<4x128xf32, #tpu.memory_space<vmem>>, %arg10: memref<32x128xf32, #tpu.memory_space<vmem>>, %arg11: memref<1x128xf32, #tpu.memory_space<vmem>>, %arg12: memref<8x2x4xf32, #tpu.memory_space<vmem>>, %arg13: memref<8x2x32xf32, #tpu.memory_space<vmem>>) attributes {dimension_semantics = [], scalar_prefetch = 0 : i64, scratch_operands = 0 : i64, tpu.core_type = #tpu.core_type<tc>} {
    %c0 = arith.constant 0 : index
    %c0_0 = arith.constant 0 : index
    %0 = vector.load %arg0[%c0, %c0_0] : memref<8x8xf32, #tpu.memory_space<vmem>>, vector<8x8xf32>
    %c0_1 = arith.constant 0 : index
    %c0_2 = arith.constant 0 : index
    %1 = vector.load %arg5[%c0_1, %c0_2] : memref<8x8xf32, #tpu.memory_space<vmem>>, vector<8x8xf32>
    %cst = arith.constant dense<0.000000e+00> : vector<8x8xf32>
    %2 = tpu.matmul %0, %1, %cst {dimension_numbers = #tpu.dot_dimension_numbers<[1], [0], [0], [1], [0, 0, 1, 1], [], []>} : vector<8x8xf32>, vector<8x8xf32>, vector<8x8xf32> -> vector<8x8xf32>
    %c0_3 = arith.constant 0 : index
    %c0_4 = arith.constant 0 : index
    %3 = vector.load %arg6[%c0_3, %c0_4] : memref<1x8xf32, #tpu.memory_space<vmem>>, vector<1x8xf32>
    %4 = vector.broadcast %3 : vector<1x8xf32> to vector<8x8xf32>
    %5 = arith.addf %2, %4 : vector<8x8xf32>
    %6 = vector.shape_cast %5 : vector<8x8xf32> to vector<2x4x8xf32>
    %c0_5 = arith.constant 0 : index
    %c0_6 = arith.constant 0 : index
    %7 = vector.load %arg2[%c0_5, %c0_6] : memref<32x8xf32, #tpu.memory_space<vmem>>, vector<32x8xf32>
    %c0_7 = arith.constant 0 : index
    %c0_8 = arith.constant 0 : index
    %8 = vector.load %arg3[%c0_7, %c0_8] : memref<32x8xf32, #tpu.memory_space<vmem>>, vector<32x8xf32>
    %c0_9 = arith.constant 0 : index
    %c0_10 = arith.constant 0 : index
    %9 = vector.load %arg4[%c0_9, %c0_10] : memref<1x8xf32, #tpu.memory_space<vmem>>, vector<1x8xf32>
    %c0_11 = arith.constant 0 : index
    %c0_12 = arith.constant 0 : index
    %10 = vector.load %arg7[%c0_11, %c0_12] : memref<1x8xf32, #tpu.memory_space<vmem>>, vector<1x8xf32>
    %c0_13 = arith.constant 0 : index
    %c0_14 = arith.constant 0 : index
    %11 = vector.load %arg8[%c0_13, %c0_14] : memref<1x1xf32, #tpu.memory_space<vmem>>, vector<1x1xf32>
    %c0_15 = arith.constant 0 : index
    %c0_16 = arith.constant 0 : index
    %12 = vector.load %arg9[%c0_15, %c0_16] : memref<4x128xf32, #tpu.memory_space<vmem>>, vector<4x128xf32>
    %c0_17 = arith.constant 0 : index
    %c0_18 = arith.constant 0 : index
    %13 = vector.load %arg10[%c0_17, %c0_18] : memref<32x128xf32, #tpu.memory_space<vmem>>, vector<32x128xf32>
    %c0_19 = arith.constant 0 : index
    %c0_20 = arith.constant 0 : index
    %14 = vector.load %arg11[%c0_19, %c0_20] : memref<1x128xf32, #tpu.memory_space<vmem>>, vector<1x128xf32>
    %cst_21 = arith.constant 0.000000e+00 : f32
    %15 = vector.broadcast %cst_21 : f32 to vector<2x32xf32>
    %cst_22 = arith.constant 0.000000e+00 : f32
    %16 = vector.broadcast %cst_22 : f32 to vector<2x32xf32>
    %c0_i32 = arith.constant 0 : i32
    %cst_23 = arith.constant dense<0.000000e+00> : vector<2x8xf32>
    %17 = tpu.matmul %15, %7, %cst_23 {dimension_numbers = #tpu.dot_dimension_numbers<[1], [0], [0], [1], [0, 0, 1, 1], [], []>} : vector<2x32xf32>, vector<32x8xf32>, vector<2x8xf32> -> vector<2x8xf32>
    %cst_24 = arith.constant dense<0.000000e+00> : vector<2x8xf32>
    %18 = tpu.matmul %16, %8, %cst_24 {dimension_numbers = #tpu.dot_dimension_numbers<[1], [0], [0], [1], [0, 0, 1, 1], [], []>} : vector<2x32xf32>, vector<32x8xf32>, vector<2x8xf32> -> vector<2x8xf32>
    %19 = arith.addf %17, %18 : vector<2x8xf32>
    %20 = vector.broadcast %9 : vector<1x8xf32> to vector<2x8xf32>
    %21 = arith.addf %19, %20 : vector<2x8xf32>
    %22 = vector.shape_cast %21 : vector<2x8xf32> to vector<2x1x8xf32>
    %23 = vector.broadcast %22 : vector<2x1x8xf32> to vector<2x4x8xf32>
    %24 = arith.addf %23, %6 : vector<2x4x8xf32>
    %25 = math.tanh %24 : vector<2x4x8xf32>
    %26 = vector.shape_cast %10 : vector<1x8xf32> to vector<1x1x8xf32>
    %27 = vector.broadcast %26 : vector<1x1x8xf32> to vector<2x4x8xf32>
    %28 = arith.mulf %25, %27 : vector<2x4x8xf32>
    %cst_25 = arith.constant dense<0.000000e+00> : vector<2x4xf32>
    %29 = vector.multi_reduction <add>, %28, %cst_25 [2] : vector<2x4x8xf32> to vector<2x4xf32>
    %30 = vector.broadcast %11 : vector<1x1xf32> to vector<2x4xf32>
    %31 = arith.addf %29, %30 : vector<2x4xf32>
    %cst_26 = arith.constant dense<0xFF800000> : vector<2xf32>
    %32 = vector.multi_reduction <maximumf>, %31, %cst_26 [1] : vector<2x4xf32> to vector<2xf32>
    %33 = vector.shape_cast %32 : vector<2xf32> to vector<2x1xf32>
    %34 = vector.broadcast %33 : vector<2x1xf32> to vector<2x4xf32>
    %35 = arith.subf %31, %34 : vector<2x4xf32>
    %36 = math.exp %35 : vector<2x4xf32>
    %cst_27 = arith.constant dense<0.000000e+00> : vector<2xf32>
    %37 = vector.multi_reduction <add>, %36, %cst_27 [1] : vector<2x4xf32> to vector<2xf32>
    %38 = vector.shape_cast %37 : vector<2xf32> to vector<2x1xf32>
    %39 = tpu.reciprocal %38 {approx = true} : vector<2x1xf32> -> vector<2x1xf32>
    %40 = vector.broadcast %39 : vector<2x1xf32> to vector<2x4xf32>
    %41 = arith.mulf %36, %40 : vector<2x4xf32>
    %42 = arith.index_cast %c0_i32 : i32 to index
    %c0_28 = arith.constant 0 : index
    %c0_29 = arith.constant 0 : index
    %43 = vector.load %arg1[%42, %c0_28, %c0_29] : memref<8x2x4xf32, #tpu.memory_space<vmem>>, vector<1x2x4xf32>
    %44 = vector.shape_cast %43 : vector<1x2x4xf32> to vector<2x4xf32>
    %45 = arith.mulf %41, %44 : vector<2x4xf32>
    %cst_30 = arith.constant dense<0.000000e+00> : vector<2x128xf32>
    %46 = tpu.matmul %45, %12, %cst_30 {dimension_numbers = #tpu.dot_dimension_numbers<[1], [0], [0], [1], [0, 0, 1, 1], [], []>} : vector<2x4xf32>, vector<4x128xf32>, vector<2x128xf32> -> vector<2x128xf32>
    %cst_31 = arith.constant dense<0.000000e+00> : vector<2x128xf32>
    %47 = tpu.matmul %15, %13, %cst_31 {dimension_numbers = #tpu.dot_dimension_numbers<[1], [0], [0], [1], [0, 0, 1, 1], [], []>} : vector<2x32xf32>, vector<32x128xf32>, vector<2x128xf32> -> vector<2x128xf32>
    %48 = arith.addf %46, %47 : vector<2x128xf32>
    %49 = vector.broadcast %14 : vector<1x128xf32> to vector<2x128xf32>
    %50 = arith.addf %48, %49 : vector<2x128xf32>
    %51 = vector.extract_strided_slice %50 {offsets = [0, 0], sizes = [2, 32], strides = [1, 1]} : vector<2x128xf32> to vector<2x32xf32>
    %52 = arith.negf %51 : vector<2x32xf32>
    %53 = math.exp %52 : vector<2x32xf32>
    %cst_32 = arith.constant 1.000000e+00 : f32
    %54 = vector.broadcast %cst_32 : f32 to vector<2x32xf32>
    %55 = arith.addf %54, %53 : vector<2x32xf32>
    %56 = arith.divf %54, %55 : vector<2x32xf32>
    %57 = vector.extract_strided_slice %50 {offsets = [0, 32], sizes = [2, 32], strides = [1, 1]} : vector<2x128xf32> to vector<2x32xf32>
    %58 = arith.negf %57 : vector<2x32xf32>
    %59 = math.exp %58 : vector<2x32xf32>
    %cst_33 = arith.constant 1.000000e+00 : f32
    %60 = vector.broadcast %cst_33 : f32 to vector<2x32xf32>
    %61 = arith.addf %60, %59 : vector<2x32xf32>
    %62 = arith.divf %60, %61 : vector<2x32xf32>
    %63 = vector.extract_strided_slice %50 {offsets = [0, 64], sizes = [2, 32], strides = [1, 1]} : vector<2x128xf32> to vector<2x32xf32>
    %64 = math.tanh %63 : vector<2x32xf32>
    %65 = vector.extract_strided_slice %50 {offsets = [0, 96], sizes = [2, 32], strides = [1, 1]} : vector<2x128xf32> to vector<2x32xf32>
    %66 = arith.negf %65 : vector<2x32xf32>
    %67 = math.exp %66 : vector<2x32xf32>
    %cst_34 = arith.constant 1.000000e+00 : f32
    %68 = vector.broadcast %cst_34 : f32 to vector<2x32xf32>
    %69 = arith.addf %68, %67 : vector<2x32xf32>
    %70 = arith.divf %68, %69 : vector<2x32xf32>
    %71 = arith.mulf %62, %16 : vector<2x32xf32>
    %72 = arith.mulf %56, %64 : vector<2x32xf32>
    %73 = arith.addf %71, %72 : vector<2x32xf32>
    %74 = math.tanh %73 : vector<2x32xf32>
    %75 = arith.mulf %70, %74 : vector<2x32xf32>
    %76 = arith.index_cast %c0_i32 : i32 to index
    %c0_35 = arith.constant 0 : index
    %c0_36 = arith.constant 0 : index
    %77 = vector.load %arg12[%76, %c0_35, %c0_36] : memref<8x2x4xf32, #tpu.memory_space<vmem>>, vector<1x2x4xf32>
    %78 = vector.shape_cast %77 : vector<1x2x4xf32> to vector<2x4xf32>
    %79 = vector.shape_cast %45 : vector<2x4xf32> to vector<1x2x4xf32>
    tpu.vector_store %arg12[%76, %c0_35, %c0_36], %79 {strides = array<i32>} : memref<8x2x4xf32, #tpu.memory_space<vmem>>, vector<1x2x4xf32>,
    %80 = arith.index_cast %c0_i32 : i32 to index
    %c0_37 = arith.constant 0 : index
    %c0_38 = arith.constant 0 : index
    %81 = vector.load %arg13[%80, %c0_37, %c0_38] : memref<8x2x32xf32, #tpu.memory_space<vmem>>, vector<1x2x32xf32>
    %82 = vector.shape_cast %81 : vector<1x2x32xf32> to vector<2x32xf32>
    %83 = vector.shape_cast %75 : vector<2x32xf32> to vector<1x2x32xf32>
    tpu.vector_store %arg13[%80, %c0_37, %c0_38], %83 {strides = array<i32>} : memref<8x2x32xf32, #tpu.memory_space<vmem>>, vector<1x2x32xf32>,
    %c1_i32 = arith.constant 1 : i32
    %cst_39 = arith.constant dense<0.000000e+00> : vector<2x8xf32>
    %84 = tpu.matmul %75, %7, %cst_39 {dimension_numbers = #tpu.dot_dimension_numbers<[1], [0], [0], [1], [0, 0, 1, 1], [], []>} : vector<2x32xf32>, vector<32x8xf32>, vector<2x8xf32> -> vector<2x8xf32>
    %cst_40 = arith.constant dense<0.000000e+00> : vector<2x8xf32>
    %85 = tpu.matmul %73, %8, %cst_40 {dimension_numbers = #tpu.dot_dimension_numbers<[1], [0], [0], [1], [0, 0, 1, 1], [], []>} : vector<2x32xf32>, vector<32x8xf32>, vector<2x8xf32> -> vector<2x8xf32>
    %86 = arith.addf %84, %85 : vector<2x8xf32>
    %87 = vector.broadcast %9 : vector<1x8xf32> to vector<2x8xf32>
    %88 = arith.addf %86, %87 : vector<2x8xf32>
    %89 = vector.shape_cast %88 : vector<2x8xf32> to vector<2x1x8xf32>
    %90 = vector.broadcast %89 : vector<2x1x8xf32> to vector<2x4x8xf32>
    %91 = arith.addf %90, %6 : vector<2x4x8xf32>
    %92 = math.tanh %91 : vector<2x4x8xf32>
    %93 = vector.shape_cast %10 : vector<1x8xf32> to vector<1x1x8xf32>
    %94 = vector.broadcast %93 : vector<1x1x8xf32> to vector<2x4x8xf32>
    %95 = arith.mulf %92, %94 : vector<2x4x8xf32>
    %cst_41 = arith.constant dense<0.000000e+00> : vector<2x4xf32>
    %96 = vector.multi_reduction <add>, %95, %cst_41 [2] : vector<2x4x8xf32> to vector<2x4xf32>
    %97 = vector.broadcast %11 : vector<1x1xf32> to vector<2x4xf32>
    %98 = arith.addf %96, %97 : vector<2x4xf32>
    %cst_42 = arith.constant dense<0xFF800000> : vector<2xf32>
    %99 = vector.multi_reduction <maximumf>, %98, %cst_42 [1] : vector<2x4xf32> to vector<2xf32>
    %100 = vector.shape_cast %99 : vector<2xf32> to vector<2x1xf32>
    %101 = vector.broadcast %100 : vector<2x1xf32> to vector<2x4xf32>
    %102 = arith.subf %98, %101 : vector<2x4xf32>
    %103 = math.exp %102 : vector<2x4xf32>
    %cst_43 = arith.constant dense<0.000000e+00> : vector<2xf32>
    %104 = vector.multi_reduction <add>, %103, %cst_43 [1] : vector<2x4xf32> to vector<2xf32>
    %105 = vector.shape_cast %104 : vector<2xf32> to vector<2x1xf32>
    %106 = tpu.reciprocal %105 {approx = true} : vector<2x1xf32> -> vector<2x1xf32>
    %107 = vector.broadcast %106 : vector<2x1xf32> to vector<2x4xf32>
    %108 = arith.mulf %103, %107 : vector<2x4xf32>
    %109 = arith.index_cast %c1_i32 : i32 to index
    %c0_44 = arith.constant 0 : index
    %c0_45 = arith.constant 0 : index
    %110 = vector.load %arg1[%109, %c0_44, %c0_45] : memref<8x2x4xf32, #tpu.memory_space<vmem>>, vector<1x2x4xf32>
    %111 = vector.shape_cast %110 : vector<1x2x4xf32> to vector<2x4xf32>
    %112 = arith.mulf %108, %111 : vector<2x4xf32>
    %cst_46 = arith.constant dense<0.000000e+00> : vector<2x128xf32>
    %113 = tpu.matmul %112, %12, %cst_46 {dimension_numbers = #tpu.dot_dimension_numbers<[1], [0], [0], [1], [0, 0, 1, 1], [], []>} : vector<2x4xf32>, vector<4x128xf32>, vector<2x128xf32> -> vector<2x128xf32>
    %cst_47 = arith.constant dense<0.000000e+00> : vector<2x128xf32>
    %114 = tpu.matmul %75, %13, %cst_47 {dimension_numbers = #tpu.dot_dimension_numbers<[1], [0], [0], [1], [0, 0, 1, 1], [], []>} : vector<2x32xf32>, vector<32x128xf32>, vector<2x128xf32> -> vector<2x128xf32>
    %115 = arith.addf %113, %114 : vector<2x128xf32>
    %116 = vector.broadcast %14 : vector<1x128xf32> to vector<2x128xf32>
    %117 = arith.addf %115, %116 : vector<2x128xf32>
    %118 = vector.extract_strided_slice %117 {offsets = [0, 0], sizes = [2, 32], strides = [1, 1]} : vector<2x128xf32> to vector<2x32xf32>
    %119 = arith.negf %118 : vector<2x32xf32>
    %120 = math.exp %119 : vector<2x32xf32>
    %cst_48 = arith.constant 1.000000e+00 : f32
    %121 = vector.broadcast %cst_48 : f32 to vector<2x32xf32>
    %122 = arith.addf %121, %120 : vector<2x32xf32>
    %123 = arith.divf %121, %122 : vector<2x32xf32>
    %124 = vector.extract_strided_slice %117 {offsets = [0, 32], sizes = [2, 32], strides = [1, 1]} : vector<2x128xf32> to vector<2x32xf32>
    %125 = arith.negf %124 : vector<2x32xf32>
    %126 = math.exp %125 : vector<2x32xf32>
    %cst_49 = arith.constant 1.000000e+00 : f32
    %127 = vector.broadcast %cst_49 : f32 to vector<2x32xf32>
    %128 = arith.addf %127, %126 : vector<2x32xf32>
    %129 = arith.divf %127, %128 : vector<2x32xf32>
    %130 = vector.extract_strided_slice %117 {offsets = [0, 64], sizes = [2, 32], strides = [1, 1]} : vector<2x128xf32> to vector<2x32xf32>
    %131 = math.tanh %130 : vector<2x32xf32>
    %132 = vector.extract_strided_slice %117 {offsets = [0, 96], sizes = [2, 32], strides = [1, 1]} : vector<2x128xf32> to vector<2x32xf32>
    %133 = arith.negf %132 : vector<2x32xf32>
    %134 = math.exp %133 : vector<2x32xf32>
    %cst_50 = arith.constant 1.000000e+00 : f32
    %135 = vector.broadcast %cst_50 : f32 to vector<2x32xf32>
    %136 = arith.addf %135, %134 : vector<2x32xf32>
    %137 = arith.divf %135, %136 : vector<2x32xf32>
    %138 = arith.mulf %129, %73 : vector<2x32xf32>
    %139 = arith.mulf %123, %131 : vector<2x32xf32>
    %140 = arith.addf %138, %139 : vector<2x32xf32>
    %141 = math.tanh %140 : vector<2x32xf32>
    %142 = arith.mulf %137, %141 : vector<2x32xf32>
    %143 = arith.index_cast %c1_i32 : i32 to index
    %c0_51 = arith.constant 0 : index
    %c0_52 = arith.constant 0 : index
    %144 = vector.load %arg12[%143, %c0_51, %c0_52] : memref<8x2x4xf32, #tpu.memory_space<vmem>>, vector<1x2x4xf32>
    %145 = vector.shape_cast %144 : vector<1x2x4xf32> to vector<2x4xf32>
    %146 = vector.shape_cast %112 : vector<2x4xf32> to vector<1x2x4xf32>
    tpu.vector_store %arg12[%143, %c0_51, %c0_52], %146 {strides = array<i32>} : memref<8x2x4xf32, #tpu.memory_space<vmem>>, vector<1x2x4xf32>,
    %147 = arith.index_cast %c1_i32 : i32 to index
    %c0_53 = arith.constant 0 : index
    %c0_54 = arith.constant 0 : index
    %148 = vector.load %arg13[%147, %c0_53, %c0_54] : memref<8x2x32xf32, #tpu.memory_space<vmem>>, vector<1x2x32xf32>
    %149 = vector.shape_cast %148 : vector<1x2x32xf32> to vector<2x32xf32>
    %150 = vector.shape_cast %142 : vector<2x32xf32> to vector<1x2x32xf32>
    tpu.vector_store %arg13[%147, %c0_53, %c0_54], %150 {strides = array<i32>} : memref<8x2x32xf32, #tpu.memory_space<vmem>>, vector<1x2x32xf32>,
    %c2_i32 = arith.constant 2 : i32
    %cst_55 = arith.constant dense<0.000000e+00> : vector<2x8xf32>
    %151 = tpu.matmul %142, %7, %cst_55 {dimension_numbers = #tpu.dot_dimension_numbers<[1], [0], [0], [1], [0, 0, 1, 1], [], []>} : vector<2x32xf32>, vector<32x8xf32>, vector<2x8xf32> -> vector<2x8xf32>
    %cst_56 = arith.constant dense<0.000000e+00> : vector<2x8xf32>
    %152 = tpu.matmul %140, %8, %cst_56 {dimension_numbers = #tpu.dot_dimension_numbers<[1], [0], [0], [1], [0, 0, 1, 1], [], []>} : vector<2x32xf32>, vector<32x8xf32>, vector<2x8xf32> -> vector<2x8xf32>
    %153 = arith.addf %151, %152 : vector<2x8xf32>
    %154 = vector.broadcast %9 : vector<1x8xf32> to vector<2x8xf32>
    %155 = arith.addf %153, %154 : vector<2x8xf32>
    %156 = vector.shape_cast %155 : vector<2x8xf32> to vector<2x1x8xf32>
    %157 = vector.broadcast %156 : vector<2x1x8xf32> to vector<2x4x8xf32>
    %158 = arith.addf %157, %6 : vector<2x4x8xf32>
    %159 = math.tanh %158 : vector<2x4x8xf32>
    %160 = vector.shape_cast %10 : vector<1x8xf32> to vector<1x1x8xf32>
    %161 = vector.broadcast %160 : vector<1x1x8xf32> to vector<2x4x8xf32>
    %162 = arith.mulf %159, %161 : vector<2x4x8xf32>
    %cst_57 = arith.constant dense<0.000000e+00> : vector<2x4xf32>
    %163 = vector.multi_reduction <add>, %162, %cst_57 [2] : vector<2x4x8xf32> to vector<2x4xf32>
    %164 = vector.broadcast %11 : vector<1x1xf32> to vector<2x4xf32>
    %165 = arith.addf %163, %164 : vector<2x4xf32>
    %cst_58 = arith.constant dense<0xFF800000> : vector<2xf32>
    %166 = vector.multi_reduction <maximumf>, %165, %cst_58 [1] : vector<2x4xf32> to vector<2xf32>
    %167 = vector.shape_cast %166 : vector<2xf32> to vector<2x1xf32>
    %168 = vector.broadcast %167 : vector<2x1xf32> to vector<2x4xf32>
    %169 = arith.subf %165, %168 : vector<2x4xf32>
    %170 = math.exp %169 : vector<2x4xf32>
    %cst_59 = arith.constant dense<0.000000e+00> : vector<2xf32>
    %171 = vector.multi_reduction <add>, %170, %cst_59 [1] : vector<2x4xf32> to vector<2xf32>
    %172 = vector.shape_cast %171 : vector<2xf32> to vector<2x1xf32>
    %173 = tpu.reciprocal %172 {approx = true} : vector<2x1xf32> -> vector<2x1xf32>
    %174 = vector.broadcast %173 : vector<2x1xf32> to vector<2x4xf32>
    %175 = arith.mulf %170, %174 : vector<2x4xf32>
    %176 = arith.index_cast %c2_i32 : i32 to index
    %c0_60 = arith.constant 0 : index
    %c0_61 = arith.constant 0 : index
    %177 = vector.load %arg1[%176, %c0_60, %c0_61] : memref<8x2x4xf32, #tpu.memory_space<vmem>>, vector<1x2x4xf32>
    %178 = vector.shape_cast %177 : vector<1x2x4xf32> to vector<2x4xf32>
    %179 = arith.mulf %175, %178 : vector<2x4xf32>
    %cst_62 = arith.constant dense<0.000000e+00> : vector<2x128xf32>
    %180 = tpu.matmul %179, %12, %cst_62 {dimension_numbers = #tpu.dot_dimension_numbers<[1], [0], [0], [1], [0, 0, 1, 1], [], []>} : vector<2x4xf32>, vector<4x128xf32>, vector<2x128xf32> -> vector<2x128xf32>
    %cst_63 = arith.constant dense<0.000000e+00> : vector<2x128xf32>
    %181 = tpu.matmul %142, %13, %cst_63 {dimension_numbers = #tpu.dot_dimension_numbers<[1], [0], [0], [1], [0, 0, 1, 1], [], []>} : vector<2x32xf32>, vector<32x128xf32>, vector<2x128xf32> -> vector<2x128xf32>
    %182 = arith.addf %180, %181 : vector<2x128xf32>
    %183 = vector.broadcast %14 : vector<1x128xf32> to vector<2x128xf32>
    %184 = arith.addf %182, %183 : vector<2x128xf32>
    %185 = vector.extract_strided_slice %184 {offsets = [0, 0], sizes = [2, 32], strides = [1, 1]} : vector<2x128xf32> to vector<2x32xf32>
    %186 = arith.negf %185 : vector<2x32xf32>
    %187 = math.exp %186 : vector<2x32xf32>
    %cst_64 = arith.constant 1.000000e+00 : f32
    %188 = vector.broadcast %cst_64 : f32 to vector<2x32xf32>
    %189 = arith.addf %188, %187 : vector<2x32xf32>
    %190 = arith.divf %188, %189 : vector<2x32xf32>
    %191 = vector.extract_strided_slice %184 {offsets = [0, 32], sizes = [2, 32], strides = [1, 1]} : vector<2x128xf32> to vector<2x32xf32>
    %192 = arith.negf %191 : vector<2x32xf32>
    %193 = math.exp %192 : vector<2x32xf32>
    %cst_65 = arith.constant 1.000000e+00 : f32
    %194 = vector.broadcast %cst_65 : f32 to vector<2x32xf32>
    %195 = arith.addf %194, %193 : vector<2x32xf32>
    %196 = arith.divf %194, %195 : vector<2x32xf32>
    %197 = vector.extract_strided_slice %184 {offsets = [0, 64], sizes = [2, 32], strides = [1, 1]} : vector<2x128xf32> to vector<2x32xf32>
    %198 = math.tanh %197 : vector<2x32xf32>
    %199 = vector.extract_strided_slice %184 {offsets = [0, 96], sizes = [2, 32], strides = [1, 1]} : vector<2x128xf32> to vector<2x32xf32>
    %200 = arith.negf %199 : vector<2x32xf32>
    %201 = math.exp %200 : vector<2x32xf32>
    %cst_66 = arith.constant 1.000000e+00 : f32
    %202 = vector.broadcast %cst_66 : f32 to vector<2x32xf32>
    %203 = arith.addf %202, %201 : vector<2x32xf32>
    %204 = arith.divf %202, %203 : vector<2x32xf32>
    %205 = arith.mulf %196, %140 : vector<2x32xf32>
    %206 = arith.mulf %190, %198 : vector<2x32xf32>
    %207 = arith.addf %205, %206 : vector<2x32xf32>
    %208 = math.tanh %207 : vector<2x32xf32>
    %209 = arith.mulf %204, %208 : vector<2x32xf32>
    %210 = arith.index_cast %c2_i32 : i32 to index
    %c0_67 = arith.constant 0 : index
    %c0_68 = arith.constant 0 : index
    %211 = vector.load %arg12[%210, %c0_67, %c0_68] : memref<8x2x4xf32, #tpu.memory_space<vmem>>, vector<1x2x4xf32>
    %212 = vector.shape_cast %211 : vector<1x2x4xf32> to vector<2x4xf32>
    %213 = vector.shape_cast %179 : vector<2x4xf32> to vector<1x2x4xf32>
    tpu.vector_store %arg12[%210, %c0_67, %c0_68], %213 {strides = array<i32>} : memref<8x2x4xf32, #tpu.memory_space<vmem>>, vector<1x2x4xf32>,
    %214 = arith.index_cast %c2_i32 : i32 to index
    %c0_69 = arith.constant 0 : index
    %c0_70 = arith.constant 0 : index
    %215 = vector.load %arg13[%214, %c0_69, %c0_70] : memref<8x2x32xf32, #tpu.memory_space<vmem>>, vector<1x2x32xf32>
    %216 = vector.shape_cast %215 : vector<1x2x32xf32> to vector<2x32xf32>
    %217 = vector.shape_cast %209 : vector<2x32xf32> to vector<1x2x32xf32>
    tpu.vector_store %arg13[%214, %c0_69, %c0_70], %217 {strides = array<i32>} : memref<8x2x32xf32, #tpu.memory_space<vmem>>, vector<1x2x32xf32>,
    %c3_i32 = arith.constant 3 : i32
    %cst_71 = arith.constant dense<0.000000e+00> : vector<2x8xf32>
    %218 = tpu.matmul %209, %7, %cst_71 {dimension_numbers = #tpu.dot_dimension_numbers<[1], [0], [0], [1], [0, 0, 1, 1], [], []>} : vector<2x32xf32>, vector<32x8xf32>, vector<2x8xf32> -> vector<2x8xf32>
    %cst_72 = arith.constant dense<0.000000e+00> : vector<2x8xf32>
    %219 = tpu.matmul %207, %8, %cst_72 {dimension_numbers = #tpu.dot_dimension_numbers<[1], [0], [0], [1], [0, 0, 1, 1], [], []>} : vector<2x32xf32>, vector<32x8xf32>, vector<2x8xf32> -> vector<2x8xf32>
    %220 = arith.addf %218, %219 : vector<2x8xf32>
    %221 = vector.broadcast %9 : vector<1x8xf32> to vector<2x8xf32>
    %222 = arith.addf %220, %221 : vector<2x8xf32>
    %223 = vector.shape_cast %222 : vector<2x8xf32> to vector<2x1x8xf32>
    %224 = vector.broadcast %223 : vector<2x1x8xf32> to vector<2x4x8xf32>
    %225 = arith.addf %224, %6 : vector<2x4x8xf32>
    %226 = math.tanh %225 : vector<2x4x8xf32>
    %227 = vector.shape_cast %10 : vector<1x8xf32> to vector<1x1x8xf32>
    %228 = vector.broadcast %227 : vector<1x1x8xf32> to vector<2x4x8xf32>
    %229 = arith.mulf %226, %228 : vector<2x4x8xf32>
    %cst_73 = arith.constant dense<0.000000e+00> : vector<2x4xf32>
    %230 = vector.multi_reduction <add>, %229, %cst_73 [2] : vector<2x4x8xf32> to vector<2x4xf32>
    %231 = vector.broadcast %11 : vector<1x1xf32> to vector<2x4xf32>
    %232 = arith.addf %230, %231 : vector<2x4xf32>
    %cst_74 = arith.constant dense<0xFF800000> : vector<2xf32>
    %233 = vector.multi_reduction <maximumf>, %232, %cst_74 [1] : vector<2x4xf32> to vector<2xf32>
    %234 = vector.shape_cast %233 : vector<2xf32> to vector<2x1xf32>
    %235 = vector.broadcast %234 : vector<2x1xf32> to vector<2x4xf32>
    %236 = arith.subf %232, %235 : vector<2x4xf32>
    %237 = math.exp %236 : vector<2x4xf32>
    %cst_75 = arith.constant dense<0.000000e+00> : vector<2xf32>
    %238 = vector.multi_reduction <add>, %237, %cst_75 [1] : vector<2x4xf32> to vector<2xf32>
    %239 = vector.shape_cast %238 : vector<2xf32> to vector<2x1xf32>
    %240 = tpu.reciprocal %239 {approx = true} : vector<2x1xf32> -> vector<2x1xf32>
    %241 = vector.broadcast %240 : vector<2x1xf32> to vector<2x4xf32>
    %242 = arith.mulf %237, %241 : vector<2x4xf32>
    %243 = arith.index_cast %c3_i32 : i32 to index
    %c0_76 = arith.constant 0 : index
    %c0_77 = arith.constant 0 : index
    %244 = vector.load %arg1[%243, %c0_76, %c0_77] : memref<8x2x4xf32, #tpu.memory_space<vmem>>, vector<1x2x4xf32>
    %245 = vector.shape_cast %244 : vector<1x2x4xf32> to vector<2x4xf32>
    %246 = arith.mulf %242, %245 : vector<2x4xf32>
    %cst_78 = arith.constant dense<0.000000e+00> : vector<2x128xf32>
    %247 = tpu.matmul %246, %12, %cst_78 {dimension_numbers = #tpu.dot_dimension_numbers<[1], [0], [0], [1], [0, 0, 1, 1], [], []>} : vector<2x4xf32>, vector<4x128xf32>, vector<2x128xf32> -> vector<2x128xf32>
    %cst_79 = arith.constant dense<0.000000e+00> : vector<2x128xf32>
    %248 = tpu.matmul %209, %13, %cst_79 {dimension_numbers = #tpu.dot_dimension_numbers<[1], [0], [0], [1], [0, 0, 1, 1], [], []>} : vector<2x32xf32>, vector<32x128xf32>, vector<2x128xf32> -> vector<2x128xf32>
    %249 = arith.addf %247, %248 : vector<2x128xf32>
    %250 = vector.broadcast %14 : vector<1x128xf32> to vector<2x128xf32>
    %251 = arith.addf %249, %250 : vector<2x128xf32>
    %252 = vector.extract_strided_slice %251 {offsets = [0, 0], sizes = [2, 32], strides = [1, 1]} : vector<2x128xf32> to vector<2x32xf32>
    %253 = arith.negf %252 : vector<2x32xf32>
    %254 = math.exp %253 : vector<2x32xf32>
    %cst_80 = arith.constant 1.000000e+00 : f32
    %255 = vector.broadcast %cst_80 : f32 to vector<2x32xf32>
    %256 = arith.addf %255, %254 : vector<2x32xf32>
    %257 = arith.divf %255, %256 : vector<2x32xf32>
    %258 = vector.extract_strided_slice %251 {offsets = [0, 32], sizes = [2, 32], strides = [1, 1]} : vector<2x128xf32> to vector<2x32xf32>
    %259 = arith.negf %258 : vector<2x32xf32>
    %260 = math.exp %259 : vector<2x32xf32>
    %cst_81 = arith.constant 1.000000e+00 : f32
    %261 = vector.broadcast %cst_81 : f32 to vector<2x32xf32>
    %262 = arith.addf %261, %260 : vector<2x32xf32>
    %263 = arith.divf %261, %262 : vector<2x32xf32>
    %264 = vector.extract_strided_slice %251 {offsets = [0, 64], sizes = [2, 32], strides = [1, 1]} : vector<2x128xf32> to vector<2x32xf32>
    %265 = math.tanh %264 : vector<2x32xf32>
    %266 = vector.extract_strided_slice %251 {offsets = [0, 96], sizes = [2, 32], strides = [1, 1]} : vector<2x128xf32> to vector<2x32xf32>
    %267 = arith.negf %266 : vector<2x32xf32>
    %268 = math.exp %267 : vector<2x32xf32>
    %cst_82 = arith.constant 1.000000e+00 : f32
    %269 = vector.broadcast %cst_82 : f32 to vector<2x32xf32>
    %270 = arith.addf %269, %268 : vector<2x32xf32>
    %271 = arith.divf %269, %270 : vector<2x32xf32>
    %272 = arith.mulf %263, %207 : vector<2x32xf32>
    %273 = arith.mulf %257, %265 : vector<2x32xf32>
    %274 = arith.addf %272, %273 : vector<2x32xf32>
    %275 = math.tanh %274 : vector<2x32xf32>
    %276 = arith.mulf %271, %275 : vector<2x32xf32>
    %277 = arith.index_cast %c3_i32 : i32 to index
    %c0_83 = arith.constant 0 : index
    %c0_84 = arith.constant 0 : index
    %278 = vector.load %arg12[%277, %c0_83, %c0_84] : memref<8x2x4xf32, #tpu.memory_space<vmem>>, vector<1x2x4xf32>
    %279 = vector.shape_cast %278 : vector<1x2x4xf32> to vector<2x4xf32>
    %280 = vector.shape_cast %246 : vector<2x4xf32> to vector<1x2x4xf32>
    tpu.vector_store %arg12[%277, %c0_83, %c0_84], %280 {strides = array<i32>} : memref<8x2x4xf32, #tpu.memory_space<vmem>>, vector<1x2x4xf32>,
    %281 = arith.index_cast %c3_i32 : i32 to index
    %c0_85 = arith.constant 0 : index
    %c0_86 = arith.constant 0 : index
    %282 = vector.load %arg13[%281, %c0_85, %c0_86] : memref<8x2x32xf32, #tpu.memory_space<vmem>>, vector<1x2x32xf32>
    %283 = vector.shape_cast %282 : vector<1x2x32xf32> to vector<2x32xf32>
    %284 = vector.shape_cast %276 : vector<2x32xf32> to vector<1x2x32xf32>
    tpu.vector_store %arg13[%281, %c0_85, %c0_86], %284 {strides = array<i32>} : memref<8x2x32xf32, #tpu.memory_space<vmem>>, vector<1x2x32xf32>,
    %c4_i32 = arith.constant 4 : i32
    %cst_87 = arith.constant dense<0.000000e+00> : vector<2x8xf32>
    %285 = tpu.matmul %276, %7, %cst_87 {dimension_numbers = #tpu.dot_dimension_numbers<[1], [0], [0], [1], [0, 0, 1, 1], [], []>} : vector<2x32xf32>, vector<32x8xf32>, vector<2x8xf32> -> vector<2x8xf32>
    %cst_88 = arith.constant dense<0.000000e+00> : vector<2x8xf32>
    %286 = tpu.matmul %274, %8, %cst_88 {dimension_numbers = #tpu.dot_dimension_numbers<[1], [0], [0], [1], [0, 0, 1, 1], [], []>} : vector<2x32xf32>, vector<32x8xf32>, vector<2x8xf32> -> vector<2x8xf32>
    %287 = arith.addf %285, %286 : vector<2x8xf32>
    %288 = vector.broadcast %9 : vector<1x8xf32> to vector<2x8xf32>
    %289 = arith.addf %287, %288 : vector<2x8xf32>
    %290 = vector.shape_cast %289 : vector<2x8xf32> to vector<2x1x8xf32>
    %291 = vector.broadcast %290 : vector<2x1x8xf32> to vector<2x4x8xf32>
    %292 = arith.addf %291, %6 : vector<2x4x8xf32>
    %293 = math.tanh %292 : vector<2x4x8xf32>
    %294 = vector.shape_cast %10 : vector<1x8xf32> to vector<1x1x8xf32>
    %295 = vector.broadcast %294 : vector<1x1x8xf32> to vector<2x4x8xf32>
    %296 = arith.mulf %293, %295 : vector<2x4x8xf32>
    %cst_89 = arith.constant dense<0.000000e+00> : vector<2x4xf32>
    %297 = vector.multi_reduction <add>, %296, %cst_89 [2] : vector<2x4x8xf32> to vector<2x4xf32>
    %298 = vector.broadcast %11 : vector<1x1xf32> to vector<2x4xf32>
    %299 = arith.addf %297, %298 : vector<2x4xf32>
    %cst_90 = arith.constant dense<0xFF800000> : vector<2xf32>
    %300 = vector.multi_reduction <maximumf>, %299, %cst_90 [1] : vector<2x4xf32> to vector<2xf32>
    %301 = vector.shape_cast %300 : vector<2xf32> to vector<2x1xf32>
    %302 = vector.broadcast %301 : vector<2x1xf32> to vector<2x4xf32>
    %303 = arith.subf %299, %302 : vector<2x4xf32>
    %304 = math.exp %303 : vector<2x4xf32>
    %cst_91 = arith.constant dense<0.000000e+00> : vector<2xf32>
    %305 = vector.multi_reduction <add>, %304, %cst_91 [1] : vector<2x4xf32> to vector<2xf32>
    %306 = vector.shape_cast %305 : vector<2xf32> to vector<2x1xf32>
    %307 = tpu.reciprocal %306 {approx = true} : vector<2x1xf32> -> vector<2x1xf32>
    %308 = vector.broadcast %307 : vector<2x1xf32> to vector<2x4xf32>
    %309 = arith.mulf %304, %308 : vector<2x4xf32>
    %310 = arith.index_cast %c4_i32 : i32 to index
    %c0_92 = arith.constant 0 : index
    %c0_93 = arith.constant 0 : index
    %311 = vector.load %arg1[%310, %c0_92, %c0_93] : memref<8x2x4xf32, #tpu.memory_space<vmem>>, vector<1x2x4xf32>
    %312 = vector.shape_cast %311 : vector<1x2x4xf32> to vector<2x4xf32>
    %313 = arith.mulf %309, %312 : vector<2x4xf32>
    %cst_94 = arith.constant dense<0.000000e+00> : vector<2x128xf32>
    %314 = tpu.matmul %313, %12, %cst_94 {dimension_numbers = #tpu.dot_dimension_numbers<[1], [0], [0], [1], [0, 0, 1, 1], [], []>} : vector<2x4xf32>, vector<4x128xf32>, vector<2x128xf32> -> vector<2x128xf32>
    %cst_95 = arith.constant dense<0.000000e+00> : vector<2x128xf32>
    %315 = tpu.matmul %276, %13, %cst_95 {dimension_numbers = #tpu.dot_dimension_numbers<[1], [0], [0], [1], [0, 0, 1, 1], [], []>} : vector<2x32xf32>, vector<32x128xf32>, vector<2x128xf32> -> vector<2x128xf32>
    %316 = arith.addf %314, %315 : vector<2x128xf32>
    %317 = vector.broadcast %14 : vector<1x128xf32> to vector<2x128xf32>
    %318 = arith.addf %316, %317 : vector<2x128xf32>
    %319 = vector.extract_strided_slice %318 {offsets = [0, 0], sizes = [2, 32], strides = [1, 1]} : vector<2x128xf32> to vector<2x32xf32>
    %320 = arith.negf %319 : vector<2x32xf32>
    %321 = math.exp %320 : vector<2x32xf32>
    %cst_96 = arith.constant 1.000000e+00 : f32
    %322 = vector.broadcast %cst_96 : f32 to vector<2x32xf32>
    %323 = arith.addf %322, %321 : vector<2x32xf32>
    %324 = arith.divf %322, %323 : vector<2x32xf32>
    %325 = vector.extract_strided_slice %318 {offsets = [0, 32], sizes = [2, 32], strides = [1, 1]} : vector<2x128xf32> to vector<2x32xf32>
    %326 = arith.negf %325 : vector<2x32xf32>
    %327 = math.exp %326 : vector<2x32xf32>
    %cst_97 = arith.constant 1.000000e+00 : f32
    %328 = vector.broadcast %cst_97 : f32 to vector<2x32xf32>
    %329 = arith.addf %328, %327 : vector<2x32xf32>
    %330 = arith.divf %328, %329 : vector<2x32xf32>
    %331 = vector.extract_strided_slice %318 {offsets = [0, 64], sizes = [2, 32], strides = [1, 1]} : vector<2x128xf32> to vector<2x32xf32>
    %332 = math.tanh %331 : vector<2x32xf32>
    %333 = vector.extract_strided_slice %318 {offsets = [0, 96], sizes = [2, 32], strides = [1, 1]} : vector<2x128xf32> to vector<2x32xf32>
    %334 = arith.negf %333 : vector<2x32xf32>
    %335 = math.exp %334 : vector<2x32xf32>
    %cst_98 = arith.constant 1.000000e+00 : f32
    %336 = vector.broadcast %cst_98 : f32 to vector<2x32xf32>
    %337 = arith.addf %336, %335 : vector<2x32xf32>
    %338 = arith.divf %336, %337 : vector<2x32xf32>
    %339 = arith.mulf %330, %274 : vector<2x32xf32>
    %340 = arith.mulf %324, %332 : vector<2x32xf32>
    %341 = arith.addf %339, %340 : vector<2x32xf32>
    %342 = math.tanh %341 : vector<2x32xf32>
    %343 = arith.mulf %338, %342 : vector<2x32xf32>
    %344 = arith.index_cast %c4_i32 : i32 to index
    %c0_99 = arith.constant 0 : index
    %c0_100 = arith.constant 0 : index
    %345 = vector.load %arg12[%344, %c0_99, %c0_100] : memref<8x2x4xf32, #tpu.memory_space<vmem>>, vector<1x2x4xf32>
    %346 = vector.shape_cast %345 : vector<1x2x4xf32> to vector<2x4xf32>
    %347 = vector.shape_cast %313 : vector<2x4xf32> to vector<1x2x4xf32>
    tpu.vector_store %arg12[%344, %c0_99, %c0_100], %347 {strides = array<i32>} : memref<8x2x4xf32, #tpu.memory_space<vmem>>, vector<1x2x4xf32>,
    %348 = arith.index_cast %c4_i32 : i32 to index
    %c0_101 = arith.constant 0 : index
    %c0_102 = arith.constant 0 : index
    %349 = vector.load %arg13[%348, %c0_101, %c0_102] : memref<8x2x32xf32, #tpu.memory_space<vmem>>, vector<1x2x32xf32>
    %350 = vector.shape_cast %349 : vector<1x2x32xf32> to vector<2x32xf32>
    %351 = vector.shape_cast %343 : vector<2x32xf32> to vector<1x2x32xf32>
    tpu.vector_store %arg13[%348, %c0_101, %c0_102], %351 {strides = array<i32>} : memref<8x2x32xf32, #tpu.memory_space<vmem>>, vector<1x2x32xf32>,
    %c5_i32 = arith.constant 5 : i32
    %cst_103 = arith.constant dense<0.000000e+00> : vector<2x8xf32>
    %352 = tpu.matmul %343, %7, %cst_103 {dimension_numbers = #tpu.dot_dimension_numbers<[1], [0], [0], [1], [0, 0, 1, 1], [], []>} : vector<2x32xf32>, vector<32x8xf32>, vector<2x8xf32> -> vector<2x8xf32>
    %cst_104 = arith.constant dense<0.000000e+00> : vector<2x8xf32>
    %353 = tpu.matmul %341, %8, %cst_104 {dimension_numbers = #tpu.dot_dimension_numbers<[1], [0], [0], [1], [0, 0, 1, 1], [], []>} : vector<2x32xf32>, vector<32x8xf32>, vector<2x8xf32> -> vector<2x8xf32>
    %354 = arith.addf %352, %353 : vector<2x8xf32>
    %355 = vector.broadcast %9 : vector<1x8xf32> to vector<2x8xf32>
    %356 = arith.addf %354, %355 : vector<2x8xf32>
    %357 = vector.shape_cast %356 : vector<2x8xf32> to vector<2x1x8xf32>
    %358 = vector.broadcast %357 : vector<2x1x8xf32> to vector<2x4x8xf32>
    %359 = arith.addf %358, %6 : vector<2x4x8xf32>
    %360 = math.tanh %359 : vector<2x4x8xf32>
    %361 = vector.shape_cast %10 : vector<1x8xf32> to vector<1x1x8xf32>
    %362 = vector.broadcast %361 : vector<1x1x8xf32> to vector<2x4x8xf32>
    %363 = arith.mulf %360, %362 : vector<2x4x8xf32>
    %cst_105 = arith.constant dense<0.000000e+00> : vector<2x4xf32>
    %364 = vector.multi_reduction <add>, %363, %cst_105 [2] : vector<2x4x8xf32> to vector<2x4xf32>
    %365 = vector.broadcast %11 : vector<1x1xf32> to vector<2x4xf32>
    %366 = arith.addf %364, %365 : vector<2x4xf32>
    %cst_106 = arith.constant dense<0xFF800000> : vector<2xf32>
    %367 = vector.multi_reduction <maximumf>, %366, %cst_106 [1] : vector<2x4xf32> to vector<2xf32>
    %368 = vector.shape_cast %367 : vector<2xf32> to vector<2x1xf32>
    %369 = vector.broadcast %368 : vector<2x1xf32> to vector<2x4xf32>
    %370 = arith.subf %366, %369 : vector<2x4xf32>
    %371 = math.exp %370 : vector<2x4xf32>
    %cst_107 = arith.constant dense<0.000000e+00> : vector<2xf32>
    %372 = vector.multi_reduction <add>, %371, %cst_107 [1] : vector<2x4xf32> to vector<2xf32>
    %373 = vector.shape_cast %372 : vector<2xf32> to vector<2x1xf32>
    %374 = tpu.reciprocal %373 {approx = true} : vector<2x1xf32> -> vector<2x1xf32>
    %375 = vector.broadcast %374 : vector<2x1xf32> to vector<2x4xf32>
    %376 = arith.mulf %371, %375 : vector<2x4xf32>
    %377 = arith.index_cast %c5_i32 : i32 to index
    %c0_108 = arith.constant 0 : index
    %c0_109 = arith.constant 0 : index
    %378 = vector.load %arg1[%377, %c0_108, %c0_109] : memref<8x2x4xf32, #tpu.memory_space<vmem>>, vector<1x2x4xf32>
    %379 = vector.shape_cast %378 : vector<1x2x4xf32> to vector<2x4xf32>
    %380 = arith.mulf %376, %379 : vector<2x4xf32>
    %cst_110 = arith.constant dense<0.000000e+00> : vector<2x128xf32>
    %381 = tpu.matmul %380, %12, %cst_110 {dimension_numbers = #tpu.dot_dimension_numbers<[1], [0], [0], [1], [0, 0, 1, 1], [], []>} : vector<2x4xf32>, vector<4x128xf32>, vector<2x128xf32> -> vector<2x128xf32>
    %cst_111 = arith.constant dense<0.000000e+00> : vector<2x128xf32>
    %382 = tpu.matmul %343, %13, %cst_111 {dimension_numbers = #tpu.dot_dimension_numbers<[1], [0], [0], [1], [0, 0, 1, 1], [], []>} : vector<2x32xf32>, vector<32x128xf32>, vector<2x128xf32> -> vector<2x128xf32>
    %383 = arith.addf %381, %382 : vector<2x128xf32>
    %384 = vector.broadcast %14 : vector<1x128xf32> to vector<2x128xf32>
    %385 = arith.addf %383, %384 : vector<2x128xf32>
    %386 = vector.extract_strided_slice %385 {offsets = [0, 0], sizes = [2, 32], strides = [1, 1]} : vector<2x128xf32> to vector<2x32xf32>
    %387 = arith.negf %386 : vector<2x32xf32>
    %388 = math.exp %387 : vector<2x32xf32>
    %cst_112 = arith.constant 1.000000e+00 : f32
    %389 = vector.broadcast %cst_112 : f32 to vector<2x32xf32>
    %390 = arith.addf %389, %388 : vector<2x32xf32>
    %391 = arith.divf %389, %390 : vector<2x32xf32>
    %392 = vector.extract_strided_slice %385 {offsets = [0, 32], sizes = [2, 32], strides = [1, 1]} : vector<2x128xf32> to vector<2x32xf32>
    %393 = arith.negf %392 : vector<2x32xf32>
    %394 = math.exp %393 : vector<2x32xf32>
    %cst_113 = arith.constant 1.000000e+00 : f32
    %395 = vector.broadcast %cst_113 : f32 to vector<2x32xf32>
    %396 = arith.addf %395, %394 : vector<2x32xf32>
    %397 = arith.divf %395, %396 : vector<2x32xf32>
    %398 = vector.extract_strided_slice %385 {offsets = [0, 64], sizes = [2, 32], strides = [1, 1]} : vector<2x128xf32> to vector<2x32xf32>
    %399 = math.tanh %398 : vector<2x32xf32>
    %400 = vector.extract_strided_slice %385 {offsets = [0, 96], sizes = [2, 32], strides = [1, 1]} : vector<2x128xf32> to vector<2x32xf32>
    %401 = arith.negf %400 : vector<2x32xf32>
    %402 = math.exp %401 : vector<2x32xf32>
    %cst_114 = arith.constant 1.000000e+00 : f32
    %403 = vector.broadcast %cst_114 : f32 to vector<2x32xf32>
    %404 = arith.addf %403, %402 : vector<2x32xf32>
    %405 = arith.divf %403, %404 : vector<2x32xf32>
    %406 = arith.mulf %397, %341 : vector<2x32xf32>
    %407 = arith.mulf %391, %399 : vector<2x32xf32>
    %408 = arith.addf %406, %407 : vector<2x32xf32>
    %409 = math.tanh %408 : vector<2x32xf32>
    %410 = arith.mulf %405, %409 : vector<2x32xf32>
    %411 = arith.index_cast %c5_i32 : i32 to index
    %c0_115 = arith.constant 0 : index
    %c0_116 = arith.constant 0 : index
    %412 = vector.load %arg12[%411, %c0_115, %c0_116] : memref<8x2x4xf32, #tpu.memory_space<vmem>>, vector<1x2x4xf32>
    %413 = vector.shape_cast %412 : vector<1x2x4xf32> to vector<2x4xf32>
    %414 = vector.shape_cast %380 : vector<2x4xf32> to vector<1x2x4xf32>
    tpu.vector_store %arg12[%411, %c0_115, %c0_116], %414 {strides = array<i32>} : memref<8x2x4xf32, #tpu.memory_space<vmem>>, vector<1x2x4xf32>,
    %415 = arith.index_cast %c5_i32 : i32 to index
    %c0_117 = arith.constant 0 : index
    %c0_118 = arith.constant 0 : index
    %416 = vector.load %arg13[%415, %c0_117, %c0_118] : memref<8x2x32xf32, #tpu.memory_space<vmem>>, vector<1x2x32xf32>
    %417 = vector.shape_cast %416 : vector<1x2x32xf32> to vector<2x32xf32>
    %418 = vector.shape_cast %410 : vector<2x32xf32> to vector<1x2x32xf32>
    tpu.vector_store %arg13[%415, %c0_117, %c0_118], %418 {strides = array<i32>} : memref<8x2x32xf32, #tpu.memory_space<vmem>>, vector<1x2x32xf32>,
    %c6_i32 = arith.constant 6 : i32
    %cst_119 = arith.constant dense<0.000000e+00> : vector<2x8xf32>
    %419 = tpu.matmul %410, %7, %cst_119 {dimension_numbers = #tpu.dot_dimension_numbers<[1], [0], [0], [1], [0, 0, 1, 1], [], []>} : vector<2x32xf32>, vector<32x8xf32>, vector<2x8xf32> -> vector<2x8xf32>
    %cst_120 = arith.constant dense<0.000000e+00> : vector<2x8xf32>
    %420 = tpu.matmul %408, %8, %cst_120 {dimension_numbers = #tpu.dot_dimension_numbers<[1], [0], [0], [1], [0, 0, 1, 1], [], []>} : vector<2x32xf32>, vector<32x8xf32>, vector<2x8xf32> -> vector<2x8xf32>
    %421 = arith.addf %419, %420 : vector<2x8xf32>
    %422 = vector.broadcast %9 : vector<1x8xf32> to vector<2x8xf32>
    %423 = arith.addf %421, %422 : vector<2x8xf32>
    %424 = vector.shape_cast %423 : vector<2x8xf32> to vector<2x1x8xf32>
    %425 = vector.broadcast %424 : vector<2x1x8xf32> to vector<2x4x8xf32>
    %426 = arith.addf %425, %6 : vector<2x4x8xf32>
    %427 = math.tanh %426 : vector<2x4x8xf32>
    %428 = vector.shape_cast %10 : vector<1x8xf32> to vector<1x1x8xf32>
    %429 = vector.broadcast %428 : vector<1x1x8xf32> to vector<2x4x8xf32>
    %430 = arith.mulf %427, %429 : vector<2x4x8xf32>
    %cst_121 = arith.constant dense<0.000000e+00> : vector<2x4xf32>
    %431 = vector.multi_reduction <add>, %430, %cst_121 [2] : vector<2x4x8xf32> to vector<2x4xf32>
    %432 = vector.broadcast %11 : vector<1x1xf32> to vector<2x4xf32>
    %433 = arith.addf %431, %432 : vector<2x4xf32>
    %cst_122 = arith.constant dense<0xFF800000> : vector<2xf32>
    %434 = vector.multi_reduction <maximumf>, %433, %cst_122 [1] : vector<2x4xf32> to vector<2xf32>
    %435 = vector.shape_cast %434 : vector<2xf32> to vector<2x1xf32>
    %436 = vector.broadcast %435 : vector<2x1xf32> to vector<2x4xf32>
    %437 = arith.subf %433, %436 : vector<2x4xf32>
    %438 = math.exp %437 : vector<2x4xf32>
    %cst_123 = arith.constant dense<0.000000e+00> : vector<2xf32>
    %439 = vector.multi_reduction <add>, %438, %cst_123 [1] : vector<2x4xf32> to vector<2xf32>
    %440 = vector.shape_cast %439 : vector<2xf32> to vector<2x1xf32>
    %441 = tpu.reciprocal %440 {approx = true} : vector<2x1xf32> -> vector<2x1xf32>
    %442 = vector.broadcast %441 : vector<2x1xf32> to vector<2x4xf32>
    %443 = arith.mulf %438, %442 : vector<2x4xf32>
    %444 = arith.index_cast %c6_i32 : i32 to index
    %c0_124 = arith.constant 0 : index
    %c0_125 = arith.constant 0 : index
    %445 = vector.load %arg1[%444, %c0_124, %c0_125] : memref<8x2x4xf32, #tpu.memory_space<vmem>>, vector<1x2x4xf32>
    %446 = vector.shape_cast %445 : vector<1x2x4xf32> to vector<2x4xf32>
    %447 = arith.mulf %443, %446 : vector<2x4xf32>
    %cst_126 = arith.constant dense<0.000000e+00> : vector<2x128xf32>
    %448 = tpu.matmul %447, %12, %cst_126 {dimension_numbers = #tpu.dot_dimension_numbers<[1], [0], [0], [1], [0, 0, 1, 1], [], []>} : vector<2x4xf32>, vector<4x128xf32>, vector<2x128xf32> -> vector<2x128xf32>
    %cst_127 = arith.constant dense<0.000000e+00> : vector<2x128xf32>
    %449 = tpu.matmul %410, %13, %cst_127 {dimension_numbers = #tpu.dot_dimension_numbers<[1], [0], [0], [1], [0, 0, 1, 1], [], []>} : vector<2x32xf32>, vector<32x128xf32>, vector<2x128xf32> -> vector<2x128xf32>
    %450 = arith.addf %448, %449 : vector<2x128xf32>
    %451 = vector.broadcast %14 : vector<1x128xf32> to vector<2x128xf32>
    %452 = arith.addf %450, %451 : vector<2x128xf32>
    %453 = vector.extract_strided_slice %452 {offsets = [0, 0], sizes = [2, 32], strides = [1, 1]} : vector<2x128xf32> to vector<2x32xf32>
    %454 = arith.negf %453 : vector<2x32xf32>
    %455 = math.exp %454 : vector<2x32xf32>
    %cst_128 = arith.constant 1.000000e+00 : f32
    %456 = vector.broadcast %cst_128 : f32 to vector<2x32xf32>
    %457 = arith.addf %456, %455 : vector<2x32xf32>
    %458 = arith.divf %456, %457 : vector<2x32xf32>
    %459 = vector.extract_strided_slice %452 {offsets = [0, 32], sizes = [2, 32], strides = [1, 1]} : vector<2x128xf32> to vector<2x32xf32>
    %460 = arith.negf %459 : vector<2x32xf32>
    %461 = math.exp %460 : vector<2x32xf32>
    %cst_129 = arith.constant 1.000000e+00 : f32
    %462 = vector.broadcast %cst_129 : f32 to vector<2x32xf32>
    %463 = arith.addf %462, %461 : vector<2x32xf32>
    %464 = arith.divf %462, %463 : vector<2x32xf32>
    %465 = vector.extract_strided_slice %452 {offsets = [0, 64], sizes = [2, 32], strides = [1, 1]} : vector<2x128xf32> to vector<2x32xf32>
    %466 = math.tanh %465 : vector<2x32xf32>
    %467 = vector.extract_strided_slice %452 {offsets = [0, 96], sizes = [2, 32], strides = [1, 1]} : vector<2x128xf32> to vector<2x32xf32>
    %468 = arith.negf %467 : vector<2x32xf32>
    %469 = math.exp %468 : vector<2x32xf32>
    %cst_130 = arith.constant 1.000000e+00 : f32
    %470 = vector.broadcast %cst_130 : f32 to vector<2x32xf32>
    %471 = arith.addf %470, %469 : vector<2x32xf32>
    %472 = arith.divf %470, %471 : vector<2x32xf32>
    %473 = arith.mulf %464, %408 : vector<2x32xf32>
    %474 = arith.mulf %458, %466 : vector<2x32xf32>
    %475 = arith.addf %473, %474 : vector<2x32xf32>
    %476 = math.tanh %475 : vector<2x32xf32>
    %477 = arith.mulf %472, %476 : vector<2x32xf32>
    %478 = arith.index_cast %c6_i32 : i32 to index
    %c0_131 = arith.constant 0 : index
    %c0_132 = arith.constant 0 : index
    %479 = vector.load %arg12[%478, %c0_131, %c0_132] : memref<8x2x4xf32, #tpu.memory_space<vmem>>, vector<1x2x4xf32>
    %480 = vector.shape_cast %479 : vector<1x2x4xf32> to vector<2x4xf32>
    %481 = vector.shape_cast %447 : vector<2x4xf32> to vector<1x2x4xf32>
    tpu.vector_store %arg12[%478, %c0_131, %c0_132], %481 {strides = array<i32>} : memref<8x2x4xf32, #tpu.memory_space<vmem>>, vector<1x2x4xf32>,
    %482 = arith.index_cast %c6_i32 : i32 to index
    %c0_133 = arith.constant 0 : index
    %c0_134 = arith.constant 0 : index
    %483 = vector.load %arg13[%482, %c0_133, %c0_134] : memref<8x2x32xf32, #tpu.memory_space<vmem>>, vector<1x2x32xf32>
    %484 = vector.shape_cast %483 : vector<1x2x32xf32> to vector<2x32xf32>
    %485 = vector.shape_cast %477 : vector<2x32xf32> to vector<1x2x32xf32>
    tpu.vector_store %arg13[%482, %c0_133, %c0_134], %485 {strides = array<i32>} : memref<8x2x32xf32, #tpu.memory_space<vmem>>, vector<1x2x32xf32>,
    %c7_i32 = arith.constant 7 : i32
    %cst_135 = arith.constant dense<0.000000e+00> : vector<2x8xf32>
    %486 = tpu.matmul %477, %7, %cst_135 {dimension_numbers = #tpu.dot_dimension_numbers<[1], [0], [0], [1], [0, 0, 1, 1], [], []>} : vector<2x32xf32>, vector<32x8xf32>, vector<2x8xf32> -> vector<2x8xf32>
    %cst_136 = arith.constant dense<0.000000e+00> : vector<2x8xf32>
    %487 = tpu.matmul %475, %8, %cst_136 {dimension_numbers = #tpu.dot_dimension_numbers<[1], [0], [0], [1], [0, 0, 1, 1], [], []>} : vector<2x32xf32>, vector<32x8xf32>, vector<2x8xf32> -> vector<2x8xf32>
    %488 = arith.addf %486, %487 : vector<2x8xf32>
    %489 = vector.broadcast %9 : vector<1x8xf32> to vector<2x8xf32>
    %490 = arith.addf %488, %489 : vector<2x8xf32>
    %491 = vector.shape_cast %490 : vector<2x8xf32> to vector<2x1x8xf32>
    %492 = vector.broadcast %491 : vector<2x1x8xf32> to vector<2x4x8xf32>
    %493 = arith.addf %492, %6 : vector<2x4x8xf32>
    %494 = math.tanh %493 : vector<2x4x8xf32>
    %495 = vector.shape_cast %10 : vector<1x8xf32> to vector<1x1x8xf32>
    %496 = vector.broadcast %495 : vector<1x1x8xf32> to vector<2x4x8xf32>
    %497 = arith.mulf %494, %496 : vector<2x4x8xf32>
    %cst_137 = arith.constant dense<0.000000e+00> : vector<2x4xf32>
    %498 = vector.multi_reduction <add>, %497, %cst_137 [2] : vector<2x4x8xf32> to vector<2x4xf32>
    %499 = vector.broadcast %11 : vector<1x1xf32> to vector<2x4xf32>
    %500 = arith.addf %498, %499 : vector<2x4xf32>
    %cst_138 = arith.constant dense<0xFF800000> : vector<2xf32>
    %501 = vector.multi_reduction <maximumf>, %500, %cst_138 [1] : vector<2x4xf32> to vector<2xf32>
    %502 = vector.shape_cast %501 : vector<2xf32> to vector<2x1xf32>
    %503 = vector.broadcast %502 : vector<2x1xf32> to vector<2x4xf32>
    %504 = arith.subf %500, %503 : vector<2x4xf32>
    %505 = math.exp %504 : vector<2x4xf32>
    %cst_139 = arith.constant dense<0.000000e+00> : vector<2xf32>
    %506 = vector.multi_reduction <add>, %505, %cst_139 [1] : vector<2x4xf32> to vector<2xf32>
    %507 = vector.shape_cast %506 : vector<2xf32> to vector<2x1xf32>
    %508 = tpu.reciprocal %507 {approx = true} : vector<2x1xf32> -> vector<2x1xf32>
    %509 = vector.broadcast %508 : vector<2x1xf32> to vector<2x4xf32>
    %510 = arith.mulf %505, %509 : vector<2x4xf32>
    %511 = arith.index_cast %c7_i32 : i32 to index
    %c0_140 = arith.constant 0 : index
    %c0_141 = arith.constant 0 : index
    %512 = vector.load %arg1[%511, %c0_140, %c0_141] : memref<8x2x4xf32, #tpu.memory_space<vmem>>, vector<1x2x4xf32>
    %513 = vector.shape_cast %512 : vector<1x2x4xf32> to vector<2x4xf32>
    %514 = arith.mulf %510, %513 : vector<2x4xf32>
    %cst_142 = arith.constant dense<0.000000e+00> : vector<2x128xf32>
    %515 = tpu.matmul %514, %12, %cst_142 {dimension_numbers = #tpu.dot_dimension_numbers<[1], [0], [0], [1], [0, 0, 1, 1], [], []>} : vector<2x4xf32>, vector<4x128xf32>, vector<2x128xf32> -> vector<2x128xf32>
    %cst_143 = arith.constant dense<0.000000e+00> : vector<2x128xf32>
    %516 = tpu.matmul %477, %13, %cst_143 {dimension_numbers = #tpu.dot_dimension_numbers<[1], [0], [0], [1], [0, 0, 1, 1], [], []>} : vector<2x32xf32>, vector<32x128xf32>, vector<2x128xf32> -> vector<2x128xf32>
    %517 = arith.addf %515, %516 : vector<2x128xf32>
    %518 = vector.broadcast %14 : vector<1x128xf32> to vector<2x128xf32>
    %519 = arith.addf %517, %518 : vector<2x128xf32>
    %520 = vector.extract_strided_slice %519 {offsets = [0, 0], sizes = [2, 32], strides = [1, 1]} : vector<2x128xf32> to vector<2x32xf32>
    %521 = arith.negf %520 : vector<2x32xf32>
    %522 = math.exp %521 : vector<2x32xf32>
    %cst_144 = arith.constant 1.000000e+00 : f32
    %523 = vector.broadcast %cst_144 : f32 to vector<2x32xf32>
    %524 = arith.addf %523, %522 : vector<2x32xf32>
    %525 = arith.divf %523, %524 : vector<2x32xf32>
    %526 = vector.extract_strided_slice %519 {offsets = [0, 32], sizes = [2, 32], strides = [1, 1]} : vector<2x128xf32> to vector<2x32xf32>
    %527 = arith.negf %526 : vector<2x32xf32>
    %528 = math.exp %527 : vector<2x32xf32>
    %cst_145 = arith.constant 1.000000e+00 : f32
    %529 = vector.broadcast %cst_145 : f32 to vector<2x32xf32>
    %530 = arith.addf %529, %528 : vector<2x32xf32>
    %531 = arith.divf %529, %530 : vector<2x32xf32>
    %532 = vector.extract_strided_slice %519 {offsets = [0, 64], sizes = [2, 32], strides = [1, 1]} : vector<2x128xf32> to vector<2x32xf32>
    %533 = math.tanh %532 : vector<2x32xf32>
    %534 = vector.extract_strided_slice %519 {offsets = [0, 96], sizes = [2, 32], strides = [1, 1]} : vector<2x128xf32> to vector<2x32xf32>
    %535 = arith.negf %534 : vector<2x32xf32>
    %536 = math.exp %535 : vector<2x32xf32>
    %cst_146 = arith.constant 1.000000e+00 : f32
    %537 = vector.broadcast %cst_146 : f32 to vector<2x32xf32>
    %538 = arith.addf %537, %536 : vector<2x32xf32>
    %539 = arith.divf %537, %538 : vector<2x32xf32>
    %540 = arith.mulf %531, %475 : vector<2x32xf32>
    %541 = arith.mulf %525, %533 : vector<2x32xf32>
    %542 = arith.addf %540, %541 : vector<2x32xf32>
    %543 = math.tanh %542 : vector<2x32xf32>
    %544 = arith.mulf %539, %543 : vector<2x32xf32>
    %545 = arith.index_cast %c7_i32 : i32 to index
    %c0_147 = arith.constant 0 : index
    %c0_148 = arith.constant 0 : index
    %546 = vector.load %arg12[%545, %c0_147, %c0_148] : memref<8x2x4xf32, #tpu.memory_space<vmem>>, vector<1x2x4xf32>
    %547 = vector.shape_cast %546 : vector<1x2x4xf32> to vector<2x4xf32>
    %548 = vector.shape_cast %514 : vector<2x4xf32> to vector<1x2x4xf32>
    tpu.vector_store %arg12[%545, %c0_147, %c0_148], %548 {strides = array<i32>} : memref<8x2x4xf32, #tpu.memory_space<vmem>>, vector<1x2x4xf32>,
    %549 = arith.index_cast %c7_i32 : i32 to index
    %c0_149 = arith.constant 0 : index
    %c0_150 = arith.constant 0 : index
    %550 = vector.load %arg13[%549, %c0_149, %c0_150] : memref<8x2x32xf32, #tpu.memory_space<vmem>>, vector<1x2x32xf32>
    %551 = vector.shape_cast %550 : vector<1x2x32xf32> to vector<2x32xf32>
    %552 = vector.shape_cast %544 : vector<2x32xf32> to vector<1x2x32xf32>
    tpu.vector_store %arg13[%549, %c0_149, %c0_150], %552 {strides = array<i32>} : memref<8x2x32xf32, #tpu.memory_space<vmem>>, vector<1x2x32xf32>,
    %c8_i32 = arith.constant 8 : i32
    return
  }
}

</mosaic_0001>

<llo_original>
// kernel: encoder_forward.1
$region0: #{encoder_forward.1}
  #allocation0 [shape = 'u32[]', space=smem, size = 0x4, offset = 0x4, fixed_abs, tag = 'smem constant byte address 0x4 - core index']
  #allocation1 [shape = 'u32[144,128]{1,0:T(1,128)}', space=vmem, size = 0x12000, scoped, tag = 'internal scratch']
  #allocation2 [shape = 'f32[1,1]{1,0:T(1,128)S(1)}', space=vmem, size = 0x200, scoped, tag = 'scoped memory for encoder_forward.1']
  %s0 = inlined_call_operand.vmem [shape: f32[8,8], index: 0, kind: input, shape index: {}]
  %s1 = inlined_call_operand.vmem [shape: f32[8,2,4], index: 1, kind: input, shape index: {}]
  %s2 = inlined_call_operand.vmem [shape: f32[32,8], index: 2, kind: input, shape index: {}]
  %s3 = inlined_call_operand.vmem [shape: f32[32,8], index: 3, kind: input, shape index: {}]
  %s4 = inlined_call_operand.vmem [shape: f32[1,8], index: 4, kind: input, shape index: {}]
  %s5 = inlined_call_operand.vmem [shape: f32[8,8], index: 5, kind: input, shape index: {}]
  %s6 = inlined_call_operand.vmem [shape: f32[1,8], index: 6, kind: input, shape index: {}]
  %s7 = inlined_call_operand.vmem [shape: f32[1,8], index: 7, kind: input, shape index: {}]
  %s8 = inlined_call_operand.<no memory space> [shape: f32[1,1], index: 8, kind: input, shape index: {}]
  %s9 = inlined_call_operand.vmem [shape: f32[4,128], index: 9, kind: input, shape index: {}]
  %s10 = inlined_call_operand.vmem [shape: f32[32,128], index: 10, kind: input, shape index: {}]
  %s11 = inlined_call_operand.vmem [shape: f32[1,128], index: 11, kind: input, shape index: {}]
  %s12 = inlined_call_operand.vmem [shape: f32[8,2,4], index: 12, kind: output, shape index: {0}]
  %s13 = inlined_call_operand.vmem [shape: f32[8,2,32], index: 13, kind: output, shape index: {1}]
  %14 = xla_tuple %s12, %s13
  %s15 = sld [smem:[#allocation0]]
  $region66: #{encoder_forward.1} parent=0
    _
  %s17 = ssub.s32 1, %s15
  %s18 = scalar_select 0, %s17, %s15
  %v19 = vstv %s8
  %20 = vst [vmem:[#allocation2] sm:$0x1] %v19
  // Predicated region
  $region2: #{encoder_forward.1} parent=0 // pred_check
    _
  $region3: #{encoder_forward.1} parent=0 // pred_check_branch
    %22 = sbr.rel (0) target = $region5
  $region4: #{encoder_forward.1} parent=0 // pred_region
    _
  $region5: #{encoder_forward.1} parent=0 // pred_fallthru
    _
  // Predicated region
  $region6: #{encoder_forward.1} parent=0 // pred_check
    _
  $region7: #{encoder_forward.1} parent=0 // pred_check_branch
    %24 = sbr.rel (0) target = $region9
  $region8: #{encoder_forward.1} parent=0 // pred_region
    _
  $region9: #{encoder_forward.1} parent=0 // pred_fallthru
    _
  // Predicated region
  $region10: #{encoder_forward.1} parent=0 // pred_check
    _
  $region11: #{encoder_forward.1} parent=0 // pred_check_branch
    %26 = sbr.rel (0) target = $region13
  $region12: #{encoder_forward.1} parent=0 // pred_region
    _
  $region13: #{encoder_forward.1} parent=0 // pred_fallthru
    _
  // Predicated region
  $region14: #{encoder_forward.1} parent=0 // pred_check
    _
  $region15: #{encoder_forward.1} parent=0 // pred_check_branch
    %28 = sbr.rel (0) target = $region17
  $region16: #{encoder_forward.1} parent=0 // pred_region
    _
  $region17: #{encoder_forward.1} parent=0 // pred_fallthru
    _
  // Predicated region
  $region18: #{encoder_forward.1} parent=0 // pred_check
    _
  $region19: #{encoder_forward.1} parent=0 // pred_check_branch
    %30 = sbr.rel (0) target = $region21
  $region20: #{encoder_forward.1} parent=0 // pred_region
    _
  $region21: #{encoder_forward.1} parent=0 // pred_fallthru
    _
  // Predicated region
  $region22: #{encoder_forward.1} parent=0 // pred_check
    _
  $region23: #{encoder_forward.1} parent=0 // pred_check_branch
    %32 = sbr.rel (0) target = $region25
  $region24: #{encoder_forward.1} parent=0 // pred_region
    _
  $region25: #{encoder_forward.1} parent=0 // pred_fallthru
    _
  // Predicated region
  $region26: #{encoder_forward.1} parent=0 // pred_check
    _
  $region27: #{encoder_forward.1} parent=0 // pred_check_branch
    %34 = sbr.rel (0) target = $region29
  $region28: #{encoder_forward.1} parent=0 // pred_region
    _
  $region29: #{encoder_forward.1} parent=0 // pred_fallthru
    _
  // Predicated region
  $region30: #{encoder_forward.1} parent=0 // pred_check
    _
  $region31: #{encoder_forward.1} parent=0 // pred_check_branch
    %36 = sbr.rel (0) target = $region33
  $region32: #{encoder_forward.1} parent=0 // pred_region
    _
  $region33: #{encoder_forward.1} parent=0 // pred_fallthru
    _
  // Predicated region
  $region34: #{encoder_forward.1} parent=0 // pred_check
    _
  $region35: #{encoder_forward.1} parent=0 // pred_check_branch
    %38 = sbr.rel (0) target = $region37
  $region36: #{encoder_forward.1} parent=0 // pred_region
    _
  $region37: #{encoder_forward.1} parent=0 // pred_fallthru
    _
  // Predicated region
  $region38: #{encoder_forward.1} parent=0 // pred_check
    _
  $region39: #{encoder_forward.1} parent=0 // pred_check_branch
    %40 = sbr.rel (0) target = $region41
  $region40: #{encoder_forward.1} parent=0 // pred_region
    _
  $region41: #{encoder_forward.1} parent=0 // pred_fallthru
    _
  // Predicated region
  $region42: #{encoder_forward.1} parent=0 // pred_check
    _
  $region43: #{encoder_forward.1} parent=0 // pred_check_branch
    %42 = sbr.rel (0) target = $region45
  $region44: #{encoder_forward.1} parent=0 // pred_region
    _
  $region45: #{encoder_forward.1} parent=0 // pred_fallthru
    _
  // Predicated region
  $region46: #{encoder_forward.1} parent=0 // pred_check
    _
  $region47: #{encoder_forward.1} parent=0 // pred_check_branch
    %44 = sbr.rel (0) target = $region49
  $region48: #{encoder_forward.1} parent=0 // pred_region
    _
  $region49: #{encoder_forward.1} parent=0 // pred_fallthru
    _
  %v45 = vld [vmem:[%s0] sm:$0xff]
  %v46 = vld [vmem:[%s5] sm:$0xff]
  %v47 = vld [vmem:[%s6] sm:$0x1]
  %v49 = vlaneseq
  %v50 = vshrl.u32 %v49, 7
  %v51 = vsub.s32 0, %v50
  %v52 = vrot.slane %v47, %v51
  %vm54 = vcmask 64512
  %v56 = vsel %vm54, %v45, 0
  %58 = vmatprep.subr.mxu0 0.0
  %59 = vmatpush1.msra.mxu0 %v46
  %60 = vmatprep.subr.mxu0 0.0
  %61 = vmatpush1.msra.mxu0 0.0
  %62 = vmatprep.subr.mxu0 0.0
  %63 = vmatpush1.msra.mxu0 0.0
  %64 = vmatprep.subr.mxu0 0.0
  %65 = vmatpush1.msra.mxu0 0.0
  %66 = vmatprep.subr.mxu0 0.0
  %67 = vmatpush1.msra.mxu0 0.0
  %68 = vmatprep.subr.mxu0 0.0
  %69 = vmatpush1.msra.mxu0 0.0
  %70 = vmatprep.subr.mxu0 0.0
  %71 = vmatpush1.msra.mxu0 0.0
  %72 = vmatprep.subr.mxu0 0.0
  %73 = vmatpush1.msra.mxu0 0.0
  %74 = vmatprep.subr.mxu0 0.0
  %75 = vmatpush1.msra.mxu0 0.0
  %76 = vmatprep.subr.mxu0 0.0
  %77 = vmatpush1.msra.mxu0 0.0
  %78 = vmatprep.subr.mxu0 0.0
  %79 = vmatpush1.msra.mxu0 0.0
  %80 = vmatprep.subr.mxu0 0.0
  %81 = vmatpush1.msra.mxu0 0.0
  %82 = vmatprep.subr.mxu0 0.0
  %83 = vmatpush1.msra.mxu0 0.0
  %84 = vmatprep.subr.mxu0 0.0
  %85 = vmatpush1.msra.mxu0 0.0
  %86 = vmatprep.subr.mxu0 0.0
  %87 = vmatpush1.msra.mxu0 0.0
  %88 = vmatprep.subr.mxu0 0.0
  %89 = vmatpush1.msra.mxu0 0.0
  %90 = vmatprep.subr.mxu0 0.0
  %91 = vmatpush1.msra.mxu0 0.0
  %92 = vmatprep.subr.mxu0 0.0
  %93 = vmatpush1.msra.mxu0 0.0
  %94 = vmatprep.subr.mxu0 0.0
  %95 = vmatpush1.msra.mxu0 0.0
  %96 = vmatprep.subr.mxu0 0.0
  %97 = vmatpush1.msra.mxu0 0.0
  %98 = vmatprep.subr.mxu0 0.0
  %99 = vmatpush1.msra.mxu0 0.0
  %100 = vmatprep.subr.mxu0 0.0
  %101 = vmatpush1.msra.mxu0 0.0
  %102 = vmatprep.subr.mxu0 0.0
  %103 = vmatpush1.msra.mxu0 0.0
  %104 = vmatprep.subr.mxu0 0.0
  %105 = vmatpush1.msra.mxu0 0.0
  %106 = vmatprep.subr.mxu0 0.0
  %107 = vmatpush1.msra.mxu0 0.0
  %108 = vmatprep.subr.mxu0 0.0
  %109 = vmatpush1.msra.mxu0 0.0
  %110 = vmatprep.subr.mxu0 0.0
  %111 = vmatpush1.msra.mxu0 0.0
  %112 = vmatprep.subr.mxu0 0.0
  %113 = vmatpush1.msra.mxu0 0.0
  %114 = vmatprep.subr.mxu0 0.0
  %115 = vmatpush1.msra.mxu0 0.0
  %116 = vmatprep.subr.mxu0 0.0
  %117 = vmatpush1.msra.mxu0 0.0
  %118 = vmatprep.subr.mxu0 0.0
  %119 = vmatpush1.msra.mxu0 0.0
  %120 = vmatprep.subr.mxu0 0.0
  %121 = vmatpush1.msra.mxu0 0.0
  %122 = vmatprep.mubr.f32.mxu0 0.0
  %123 = vmatmul.mubr.f32.gmra.mrb[0].mxu0 %v56
  %v124 = vpop.f32.mrb[0].mxu0
  %v125 = vadd.f32 %v52, %v124
  %v126 = vpop.f32.mrb[0].mxu0
  %127 = vdwg.mxu0
  %v129 = vcombine.high %v125, %v125
  %v131 = vld [vmem:[%s2] sm:$0xff]
  %v132 = vld [vmem:[%s2 + $0x8] sm:$0xff]
  %v133 = vld [vmem:[%s2 + $0x10] sm:$0xff]
  %v134 = vld [vmem:[%s2 + $0x18] sm:$0xff]
  %v135 = vld [vmem:[%s3] sm:$0xff]
  %v136 = vld [vmem:[%s3 + $0x8] sm:$0xff]
  %v137 = vld [vmem:[%s3 + $0x10] sm:$0xff]
  %v138 = vld [vmem:[%s3 + $0x18] sm:$0xff]
  %v139 = vld [vmem:[%s4] sm:$0x1]
  %v140 = vld [vmem:[%s7] sm:$0x1]
  %v141 = vld [vmem:[#allocation2] sm:$0x1]
  %v142 = vld [vmem:[%s9] sm:$0xf]
  %v143 = vld [vmem:[%s10] sm:$0xff]
  %v144 = vld [vmem:[%s10 + $0x8] sm:$0xff]
  %v145 = vld [vmem:[%s10 + $0x10] sm:$0xff]
  %v146 = vld [vmem:[%s10 + $0x18] sm:$0xff]
  %v147 = vld [vmem:[%s11] sm:$0x1]
  %vm148 = vcmask 261120
  %v150 = vsel %vm148, 0.0, 0
  %152 = vmatprep.subr.mxu0 0.0
  %153 = vmatpush1.msra.mxu0 %v135
  %154 = vmatprep.subr.mxu0 0.0
  %155 = vmatpush1.msra.mxu0 %v136
  %156 = vmatprep.subr.mxu0 0.0
  %157 = vmatpush1.msra.mxu0 %v137
  %158 = vmatprep.subr.mxu0 0.0
  %159 = vmatpush1.msra.mxu0 %v138
  %160 = vmatprep.subr.mxu0 0.0
  %161 = vmatpush1.msra.mxu0 0.0
  %162 = vmatprep.subr.mxu0 0.0
  %163 = vmatpush1.msra.mxu0 0.0
  %164 = vmatprep.subr.mxu0 0.0
  %165 = vmatpush1.msra.mxu0 0.0
  %166 = vmatprep.subr.mxu0 0.0
  %167 = vmatpush1.msra.mxu0 0.0
  %168 = vmatprep.subr.mxu0 0.0
  %169 = vmatpush1.msra.mxu0 0.0
  %170 = vmatprep.subr.mxu0 0.0
  %171 = vmatpush1.msra.mxu0 0.0
  %172 = vmatprep.subr.mxu0 0.0
  %173 = vmatpush1.msra.mxu0 0.0
  %174 = vmatprep.subr.mxu0 0.0
  %175 = vmatpush1.msra.mxu0 0.0
  %176 = vmatprep.subr.mxu0 0.0
  %177 = vmatpush1.msra.mxu0 0.0
  %178 = vmatprep.subr.mxu0 0.0
  %179 = vmatpush1.msra.mxu0 0.0
  %180 = vmatprep.subr.mxu0 0.0
  %181 = vmatpush1.msra.mxu0 0.0
  %182 = vmatprep.subr.mxu0 0.0
  %183 = vmatpush1.msra.mxu0 0.0
  %184 = vmatprep.subr.mxu0 0.0
  %185 = vmatpush1.msra.mxu0 0.0
  %186 = vmatprep.subr.mxu0 0.0
  %187 = vmatpush1.msra.mxu0 0.0
  %188 = vmatprep.subr.mxu0 0.0
  %189 = vmatpush1.msra.mxu0 0.0
  %190 = vmatprep.subr.mxu0 0.0
  %191 = vmatpush1.msra.mxu0 0.0
  %192 = vmatprep.subr.mxu0 0.0
  %193 = vmatpush1.msra.mxu0 0.0
  %194 = vmatprep.subr.mxu0 0.0
  %195 = vmatpush1.msra.mxu0 0.0
  %196 = vmatprep.subr.mxu0 0.0
  %197 = vmatpush1.msra.mxu0 0.0
  %198 = vmatprep.subr.mxu0 0.0
  %199 = vmatpush1.msra.mxu0 0.0
  %200 = vmatprep.subr.mxu0 0.0
  %201 = vmatpush1.msra.mxu0 0.0
  %202 = vmatprep.subr.mxu0 0.0
  %203 = vmatpush1.msra.mxu0 0.0
  %204 = vmatprep.subr.mxu0 0.0
  %205 = vmatpush1.msra.mxu0 0.0
  %206 = vmatprep.subr.mxu0 0.0
  %207 = vmatpush1.msra.mxu0 0.0
  %208 = vmatprep.subr.mxu0 0.0
  %209 = vmatpush1.msra.mxu0 0.0
  %210 = vmatprep.subr.mxu0 0.0
  %211 = vmatpush1.msra.mxu0 0.0
  %212 = vmatprep.subr.mxu0 0.0
  %213 = vmatpush1.msra.mxu0 0.0
  %214 = vmatprep.subr.mxu0 0.0
  %215 = vmatpush1.msra.mxu0 0.0
  %216 = vmatprep.mubr.f32.mxu0 0.0
  %217 = vmatmul.mubr.f32.gmra.mrb[0].mxu0 %v150
  %v218 = vpop.f32.mrb[0].mxu0
  %v219 = vadd.f32 0.0, %v218
  %v220 = vpop.f32.mrb[0].mxu0
  %221 = vdwg.mxu0
  %222 = vmatprep.subr.mxu0 0.0
  %223 = vmatpush1.msra.mxu0 %v131
  %224 = vmatprep.subr.mxu0 0.0
  %225 = vmatpush1.msra.mxu0 %v132
  %226 = vmatprep.subr.mxu0 0.0
  %227 = vmatpush1.msra.mxu0 %v133
  %228 = vmatprep.subr.mxu0 0.0
  %229 = vmatpush1.msra.mxu0 %v134
  %230 = vmatprep.subr.mxu0 0.0
  %231 = vmatpush1.msra.mxu0 0.0
  %232 = vmatprep.subr.mxu0 0.0
  %233 = vmatpush1.msra.mxu0 0.0
  %234 = vmatprep.subr.mxu0 0.0
  %235 = vmatpush1.msra.mxu0 0.0
  %236 = vmatprep.subr.mxu0 0.0
  %237 = vmatpush1.msra.mxu0 0.0
  %238 = vmatprep.subr.mxu0 0.0
  %239 = vmatpush1.msra.mxu0 0.0
  %240 = vmatprep.subr.mxu0 0.0
  %241 = vmatpush1.msra.mxu0 0.0
  %242 = vmatprep.subr.mxu0 0.0
  %243 = vmatpush1.msra.mxu0 0.0
  %244 = vmatprep.subr.mxu0 0.0
  %245 = vmatpush1.msra.mxu0 0.0
  %246 = vmatprep.subr.mxu0 0.0
  %247 = vmatpush1.msra.mxu0 0.0
  %248 = vmatprep.subr.mxu0 0.0
  %249 = vmatpush1.msra.mxu0 0.0
  %250 = vmatprep.subr.mxu0 0.0
  %251 = vmatpush1.msra.mxu0 0.0
  %252 = vmatprep.subr.mxu0 0.0
  %253 = vmatpush1.msra.mxu0 0.0
  %254 = vmatprep.subr.mxu0 0.0
  %255 = vmatpush1.msra.mxu0 0.0
  %256 = vmatprep.subr.mxu0 0.0
  %257 = vmatpush1.msra.mxu0 0.0
  %258 = vmatprep.subr.mxu0 0.0
  %259 = vmatpush1.msra.mxu0 0.0
  %260 = vmatprep.subr.mxu0 0.0
  %261 = vmatpush1.msra.mxu0 0.0
  %262 = vmatprep.subr.mxu0 0.0
  %263 = vmatpush1.msra.mxu0 0.0
  %264 = vmatprep.subr.mxu0 0.0
  %265 = vmatpush1.msra.mxu0 0.0
  %266 = vmatprep.subr.mxu0 0.0
  %267 = vmatpush1.msra.mxu0 0.0
  %268 = vmatprep.subr.mxu0 0.0
  %269 = vmatpush1.msra.mxu0 0.0
  %270 = vmatprep.subr.mxu0 0.0
  %271 = vmatpush1.msra.mxu0 0.0
  %272 = vmatprep.subr.mxu0 0.0
  %273 = vmatpush1.msra.mxu0 0.0
  %274 = vmatprep.subr.mxu0 0.0
  %275 = vmatpush1.msra.mxu0 0.0
  %276 = vmatprep.subr.mxu0 0.0
  %277 = vmatpush1.msra.mxu0 0.0
  %278 = vmatprep.subr.mxu0 0.0
  %279 = vmatpush1.msra.mxu0 0.0
  %280 = vmatprep.subr.mxu0 0.0
  %281 = vmatpush1.msra.mxu0 0.0
  %282 = vmatprep.subr.mxu0 0.0
  %283 = vmatpush1.msra.mxu0 0.0
  %284 = vmatprep.subr.mxu0 0.0
  %285 = vmatpush1.msra.mxu0 0.0
  %286 = vmatprep.mubr.f32.mxu0 0.0
  %287 = vmatmul.mubr.f32.gmra.mrb[0].mxu0 %v150
  %v288 = vpop.f32.mrb[0].mxu0
  %v289 = vadd.f32 %v219, %v288
  %v290 = vpop.f32.mrb[0].mxu0
  %291 = vdwg.mxu0
  %v293 = vlaneseq
  %v294 = vshrl.u32 %v293, 7
  %v295 = vsub.s32 0, %v294
  %v296 = vrot.slane %v139, %v295
  %v298 = vadd.f32 %v289, %v296
  %v301 = vunpack.c.l.s4 1966171168
  %v302 = vunpack.c.0.s8 %v301
  %v303 = vlaneseq
  %v304 = vshrl.u32 %v303, 7
  %v305 = vsub.s32 %v302, %v304
  %v306 = vrot.slane %v298, %v305
  %v307 = vcombine.high %v306, %v306
  %v309 = vunpack.c.l.s4 1966171168
  %v310 = vunpack.c.0.s8 %v309
  %v311 = vlaneseq
  %v312 = vshrl.u32 %v311, 7
  %v313 = vsub.s32 %v310, %v312
  %v314 = vrot.slane %v306, %v313
  %v316 = vunpack.c.l.s4 1966171168
  %v317 = vunpack.c.0.s8 %v316
  %v318 = vlaneseq
  %v319 = vshrl.u32 %v318, 7
  %v320 = vsub.s32 %v317, %v319
  %v321 = vrot.slane %v307, %v320
  %v322 = vlaneseq
  %v323 = vshrl.u32 %v322, 7
  %v324 = vsub.s32 0, %v323
  %v325 = vrot.slane %v314, %v324
  %v326 = vlaneseq
  %v327 = vshrl.u32 %v326, 7
  %v328 = vsub.s32 0, %v327
  %v329 = vrot.slane %v321, %v328
  %v332 = vadd.f32 %v325, %v125
  %v333 = vadd.f32 %v329, %v129
  %v334 = vtanh.pop %v332
  %v335 = vtanh.pop %v333
  %v337 = vlaneseq
  %v338 = vshrl.u32 %v337, 7
  %v339 = vsub.s32 0, %v338
  %v340 = vrot.slane %v140, %v339
  %v342 = vmul.f32 %v334, %v340
  %v343 = vmul.f32 %v335, %v340
  %vm344 = vcmask 60416
  %v345 = vsel %vm344, %v342, 0.0
  %346 = vadd.xlane.f32.xlu0 %v345
  %v347 = vpop.xlane.xlu0 %346
  %v348 = vsel %vm344, %v343, 0.0
  %349 = vadd.xlane.f32.xlu0 %v348
  %v350 = vpop.xlane.xlu0 %349
  %v352 = vlaneseq
  %v353 = vshrl.u32 %v352, 7
  %v354 = vsub.s32 0, %v353
  %v355 = vrot.slane %v141, %v354
  %356 = vset.pattern.permute.xlu0 0
  %357 = vperm.xlu0 %356, %v355
  %v358 = vpop.permute.xlu0 %357
  %v360 = vadd.f32 %v347, %v358
  %v361 = vadd.f32 %v350, %v358
  %v364 = vlaneseq
  %v365 = vand.u32 %v364, 127
  %v366 = vlaneseq
  %v367 = vshrl.u32 %v366, 7
  %v368 = vsub.s32 %v365, %v367
  %v369 = vrot.slane %v360, %v368
  %v370 = vlaneseq
  %v371 = vshrl.u32 %v370, 7
  %v372 = vsub.s32 %v365, %v371
  %v373 = vrot.slane %v361, %v372
  %vm374 = vcmask 1041409
  %v375 = vsel %vm374, %v373, %v369
  %vm377 = vcmask 25600
  %v378 = vsel %vm377, %v375, -inf
  %379 = vmax.xlane.f32.xlu0 %v378
  %v380 = vpop.xlane.xlu0 %379
  %v382 = vlaneseq
  %v383 = vshrl.u32 %v382, 7
  %v384 = vsub.s32 0, %v383
  %v385 = vrot.slane %v380, %v384
  %v386 = vlaneseq
  %v387 = vshrl.u32 %v386, 7
  %v388 = vsub.s32 1, %v387
  %v389 = vrot.slane %v380, %v388
  %v392 = vsub.f32 %v360, %v385
  %v393 = vsub.f32 %v361, %v389
  %v394 = vmul.f32 %v392, 1.442695
  %v395 = vpow.pop %v394
  %v396 = vmul.f32 %v393, 1.442695
  %v397 = vpow.pop %v396
  %400 = vset.pattern.permute.xlu0 0
  %401 = vperm.xlu0 %400, %v395
  %v402 = vpop.permute.xlu0 %401
  %403 = vset.pattern.permute.xlu0 0
  %404 = vperm.xlu0 %403, %v397
  %v405 = vpop.permute.xlu0 %404
  %v406 = vlaneseq
  %v407 = vshrl.u32 %v406, 7
  %v408 = vsub.s32 %v365, %v407
  %v409 = vrot.slane %v402, %v408
  %v410 = vlaneseq
  %v411 = vshrl.u32 %v410, 7
  %v412 = vsub.s32 %v365, %v411
  %v413 = vrot.slane %v405, %v412
  %v414 = vsel %vm374, %v413, %v409
  %v416 = vsel %vm377, %v414, 0.0
  %417 = vadd.xlane.f32.xlu0 %v416
  %v418 = vpop.xlane.xlu0 %417
  %v419 = vrcp.pop %v418
  %v421 = vlaneseq
  %v422 = vshrl.u32 %v421, 7
  %v423 = vsub.s32 0, %v422
  %v424 = vrot.slane %v419, %v423
  %v425 = vlaneseq
  %v426 = vshrl.u32 %v425, 7
  %v427 = vsub.s32 1, %v426
  %v428 = vrot.slane %v419, %v427
  %v431 = vmul.f32 %v395, %v424
  %v432 = vmul.f32 %v397, %v428
  %v433 = vld [vmem:[%s1] sm:$0x3]
  %v435 = vlaneseq
  %v436 = vshrl.u32 %v435, 7
  %v437 = vsub.s32 0, %v436
  %v438 = vrot.slane %v433, %v437
  %440 = vbcast.lane.b32.xlu0 %v438, 256
  %v441 = vpop.permute.xlu0 %440
  %v442 = vlaneseq
  %v443 = vshrl.u32 %v442, 7
  %v444 = vsub.s32 1, %v443
  %v445 = vrot.slane %v433, %v444
  %447 = vbcast.lane.b32.xlu0 %v445, 256
  %v448 = vpop.permute.xlu0 %447
  %v451 = vmul.f32 %v431, %v441
  %v452 = vmul.f32 %v432, %v448
  %453 = vmatprep.subr.mxu0 0.0
  %454 = vmatpush1.msra.mxu0 %v143
  %455 = vmatprep.subr.mxu0 0.0
  %456 = vmatpush1.msra.mxu0 %v144
  %457 = vmatprep.subr.mxu0 0.0
  %458 = vmatpush1.msra.mxu0 %v145
  %459 = vmatprep.subr.mxu0 0.0
  %460 = vmatpush1.msra.mxu0 %v146
  %461 = vmatprep.subr.mxu0 0.0
  %462 = vmatpush1.msra.mxu0 0.0
  %463 = vmatprep.subr.mxu0 0.0
  %464 = vmatpush1.msra.mxu0 0.0
  %465 = vmatprep.subr.mxu0 0.0
  %466 = vmatpush1.msra.mxu0 0.0
  %467 = vmatprep.subr.mxu0 0.0
  %468 = vmatpush1.msra.mxu0 0.0
  %469 = vmatprep.subr.mxu0 0.0
  %470 = vmatpush1.msra.mxu0 0.0
  %471 = vmatprep.subr.mxu0 0.0
  %472 = vmatpush1.msra.mxu0 0.0
  %473 = vmatprep.subr.mxu0 0.0
  %474 = vmatpush1.msra.mxu0 0.0
  %475 = vmatprep.subr.mxu0 0.0
  %476 = vmatpush1.msra.mxu0 0.0
  %477 = vmatprep.subr.mxu0 0.0
  %478 = vmatpush1.msra.mxu0 0.0
  %479 = vmatprep.subr.mxu0 0.0
  %480 = vmatpush1.msra.mxu0 0.0
  %481 = vmatprep.subr.mxu0 0.0
  %482 = vmatpush1.msra.mxu0 0.0
  %483 = vmatprep.subr.mxu0 0.0
  %484 = vmatpush1.msra.mxu0 0.0
  %485 = vmatprep.subr.mxu0 0.0
  %486 = vmatpush1.msra.mxu0 0.0
  %487 = vmatprep.subr.mxu0 0.0
  %488 = vmatpush1.msra.mxu0 0.0
  %489 = vmatprep.subr.mxu0 0.0
  %490 = vmatpush1.msra.mxu0 0.0
  %491 = vmatprep.subr.mxu0 0.0
  %492 = vmatpush1.msra.mxu0 0.0
  %493 = vmatprep.subr.mxu0 0.0
  %494 = vmatpush1.msra.mxu0 0.0
  %495 = vmatprep.subr.mxu0 0.0
  %496 = vmatpush1.msra.mxu0 0.0
  %497 = vmatprep.subr.mxu0 0.0
  %498 = vmatpush1.msra.mxu0 0.0
  %499 = vmatprep.subr.mxu0 0.0
  %500 = vmatpush1.msra.mxu0 0.0
  %501 = vmatprep.subr.mxu0 0.0
  %502 = vmatpush1.msra.mxu0 0.0
  %503 = vmatprep.subr.mxu0 0.0
  %504 = vmatpush1.msra.mxu0 0.0
  %505 = vmatprep.subr.mxu0 0.0
  %506 = vmatpush1.msra.mxu0 0.0
  %507 = vmatprep.subr.mxu0 0.0
  %508 = vmatpush1.msra.mxu0 0.0
  %509 = vmatprep.subr.mxu0 0.0
  %510 = vmatpush1.msra.mxu0 0.0
  %511 = vmatprep.subr.mxu0 0.0
  %512 = vmatpush1.msra.mxu0 0.0
  %513 = vmatprep.subr.mxu0 0.0
  %514 = vmatpush1.msra.mxu0 0.0
  %515 = vmatprep.subr.mxu0 0.0
  %516 = vmatpush1.msra.mxu0 0.0
  %517 = vmatprep.mubr.f32.mxu0 0.0
  %518 = vmatmul.mubr.f32.gmra.mrb[0].mxu0 %v150
  %v519 = vpop.f32.mrb[0].mxu0
  %v520 = vadd.f32 0.0, %v519
  %v521 = vpop.f32.mrb[0].mxu0
  %522 = vdwg.mxu0
  %525 = vset.pattern.permute.xlu0 0
  %526 = vperm.xlu0 %525, %v451
  %v527 = vpop.permute.xlu0 %526
  %528 = vset.pattern.permute.xlu0 0
  %529 = vperm.xlu0 %528, %v452
  %v530 = vpop.permute.xlu0 %529
  %v531 = vlaneseq
  %v532 = vshrl.u32 %v531, 7
  %v533 = vsub.s32 %v365, %v532
  %v534 = vrot.slane %v527, %v533
  %v535 = vlaneseq
  %v536 = vshrl.u32 %v535, 7
  %v537 = vsub.s32 %v365, %v536
  %v538 = vrot.slane %v530, %v537
  %v539 = vsel %vm374, %v538, %v534
  %vm540 = vcmask 31744
  %v541 = vsel %vm540, %v539, 0
  %vm543 = vcmask 1043456
  %v545 = vsel %vm543, %v142, 0
  %547 = vmatprep.subr.mxu0 0.0
  %548 = vmatpush1.msra.mxu0 %v545
  %549 = vmatprep.subr.mxu0 0.0
  %550 = vmatpush1.msra.mxu0 0.0
  %551 = vmatprep.subr.mxu0 0.0
  %552 = vmatpush1.msra.mxu0 0.0
  %553 = vmatprep.subr.mxu0 0.0
  %554 = vmatpush1.msra.mxu0 0.0
  %555 = vmatprep.subr.mxu0 0.0
  %556 = vmatpush1.msra.mxu0 0.0
  %557 = vmatprep.subr.mxu0 0.0
  %558 = vmatpush1.msra.mxu0 0.0
  %559 = vmatprep.subr.mxu0 0.0
  %560 = vmatpush1.msra.mxu0 0.0
  %561 = vmatprep.subr.mxu0 0.0
  %562 = vmatpush1.msra.mxu0 0.0
  %563 = vmatprep.subr.mxu0 0.0
  %564 = vmatpush1.msra.mxu0 0.0
  %565 = vmatprep.subr.mxu0 0.0
  %566 = vmatpush1.msra.mxu0 0.0
  %567 = vmatprep.subr.mxu0 0.0
  %568 = vmatpush1.msra.mxu0 0.0
  %569 = vmatprep.subr.mxu0 0.0
  %570 = vmatpush1.msra.mxu0 0.0
  %571 = vmatprep.subr.mxu0 0.0
  %572 = vmatpush1.msra.mxu0 0.0
  %573 = vmatprep.subr.mxu0 0.0
  %574 = vmatpush1.msra.mxu0 0.0
  %575 = vmatprep.subr.mxu0 0.0
  %576 = vmatpush1.msra.mxu0 0.0
  %577 = vmatprep.subr.mxu0 0.0
  %578 = vmatpush1.msra.mxu0 0.0
  %579 = vmatprep.subr.mxu0 0.0
  %580 = vmatpush1.msra.mxu0 0.0
  %581 = vmatprep.subr.mxu0 0.0
  %582 = vmatpush1.msra.mxu0 0.0
  %583 = vmatprep.subr.mxu0 0.0
  %584 = vmatpush1.msra.mxu0 0.0
  %585 = vmatprep.subr.mxu0 0.0
  %586 = vmatpush1.msra.mxu0 0.0
  %587 = vmatprep.subr.mxu0 0.0
  %588 = vmatpush1.msra.mxu0 0.0
  %589 = vmatprep.subr.mxu0 0.0
  %590 = vmatpush1.msra.mxu0 0.0
  %591 = vmatprep.subr.mxu0 0.0
  %592 = vmatpush1.msra.mxu0 0.0
  %593 = vmatprep.subr.mxu0 0.0
  %594 = vmatpush1.msra.mxu0 0.0
  %595 = vmatprep.subr.mxu0 0.0
  %596 = vmatpush1.msra.mxu0 0.0
  %597 = vmatprep.subr.mxu0 0.0
  %598 = vmatpush1.msra.mxu0 0.0
  %599 = vmatprep.subr.mxu0 0.0
  %600 = vmatpush1.msra.mxu0 0.0
  %601 = vmatprep.subr.mxu0 0.0
  %602 = vmatpush1.msra.mxu0 0.0
  %603 = vmatprep.subr.mxu0 0.0
  %604 = vmatpush1.msra.mxu0 0.0
  %605 = vmatprep.subr.mxu0 0.0
  %606 = vmatpush1.msra.mxu0 0.0
  %607 = vmatprep.subr.mxu0 0.0
  %608 = vmatpush1.msra.mxu0 0.0
  %609 = vmatprep.subr.mxu0 0.0
  %610 = vmatpush1.msra.mxu0 0.0
  %611 = vmatprep.mubr.f32.mxu0 0.0
  %612 = vmatmul.mubr.f32.gmra.mrb[0].mxu0 %v541
  %v613 = vpop.f32.mrb[0].mxu0
  %v614 = vadd.f32 %v520, %v613
  %v615 = vpop.f32.mrb[0].mxu0
  %616 = vdwg.mxu0
  %v618 = vlaneseq
  %v619 = vshrl.u32 %v618, 7
  %v620 = vsub.s32 0, %v619
  %v621 = vrot.slane %v147, %v620
  %v623 = vadd.f32 %v614, %v621
  %v624 = vxor.u32 %v623, 2147483648
  %v625 = vmul.f32 %v624, 1.442695
  %v626 = vpow.pop %v625
  %v627 = vadd.f32 %v626, 1.0
  %v628 = vrcp.pop %v627
  %v629 = vmul.f32 1.0, %v628
  %v630 = vtanh.pop %v623
  %v631 = vmul.f32 %v629, 0.0
  %633 = vrot.lane.b32.xlu0 %v630, 64
  %v634 = vpop.permute.xlu0 %633
  %v636 = vmul.f32 %v629, %v634
  %638 = vrot.lane.b32.xlu0 %v636, 32
  %v639 = vpop.permute.xlu0 %638
  %v641 = vadd.f32 %v631, %v639
  %v642 = vtanh.pop %v641
  %644 = vrot.lane.b32.xlu0 %v642, 64
  %v645 = vpop.permute.xlu0 %644
  %v647 = vmul.f32 %v629, %v645
  %649 = vst.msk [vmem:[%s12] sm:$0x3] %vm377, %v539
  %651 = vrot.lane.b32.xlu0 %v647, 32
  %v652 = vpop.permute.xlu0 %651
  %vm654 = vcmask 254976
  %655 = vst.msk [vmem:[%s13] sm:$0x3] %vm654, %v652
  %657 = vrot.lane.b32.xlu0 %v641, 96
  %v658 = vpop.permute.xlu0 %657
  %v659 = vsel %vm148, %v658, 0
  %661 = vmatprep.subr.mxu0 0.0
  %662 = vmatpush1.msra.mxu0 %v135
  %663 = vmatprep.subr.mxu0 0.0
  %664 = vmatpush1.msra.mxu0 %v136
  %665 = vmatprep.subr.mxu0 0.0
  %666 = vmatpush1.msra.mxu0 %v137
  %667 = vmatprep.subr.mxu0 0.0
  %668 = vmatpush1.msra.mxu0 %v138
  %669 = vmatprep.subr.mxu0 0.0
  %670 = vmatpush1.msra.mxu0 0.0
  %671 = vmatprep.subr.mxu0 0.0
  %672 = vmatpush1.msra.mxu0 0.0
  %673 = vmatprep.subr.mxu0 0.0
  %674 = vmatpush1.msra.mxu0 0.0
  %675 = vmatprep.subr.mxu0 0.0
  %676 = vmatpush1.msra.mxu0 0.0
  %677 = vmatprep.subr.mxu0 0.0
  %678 = vmatpush1.msra.mxu0 0.0
  %679 = vmatprep.subr.mxu0 0.0
  %680 = vmatpush1.msra.mxu0 0.0
  %681 = vmatprep.subr.mxu0 0.0
  %682 = vmatpush1.msra.mxu0 0.0
  %683 = vmatprep.subr.mxu0 0.0
  %684 = vmatpush1.msra.mxu0 0.0
  %685 = vmatprep.subr.mxu0 0.0
  %686 = vmatpush1.msra.mxu0 0.0
  %687 = vmatprep.subr.mxu0 0.0
  %688 = vmatpush1.msra.mxu0 0.0
  %689 = vmatprep.subr.mxu0 0.0
  %690 = vmatpush1.msra.mxu0 0.0
  %691 = vmatprep.subr.mxu0 0.0
  %692 = vmatpush1.msra.mxu0 0.0
  %693 = vmatprep.subr.mxu0 0.0
  %694 = vmatpush1.msra.mxu0 0.0
  %695 = vmatprep.subr.mxu0 0.0
  %696 = vmatpush1.msra.mxu0 0.0
  %697 = vmatprep.subr.mxu0 0.0
  %698 = vmatpush1.msra.mxu0 0.0
  %699 = vmatprep.subr.mxu0 0.0
  %700 = vmatpush1.msra.mxu0 0.0
  %701 = vmatprep.subr.mxu0 0.0
  %702 = vmatpush1.msra.mxu0 0.0
  %703 = vmatprep.subr.mxu0 0.0
  %704 = vmatpush1.msra.mxu0 0.0
  %705 = vmatprep.subr.mxu0 0.0
  %706 = vmatpush1.msra.mxu0 0.0
  %707 = vmatprep.subr.mxu0 0.0
  %708 = vmatpush1.msra.mxu0 0.0
  %709 = vmatprep.subr.mxu0 0.0
  %710 = vmatpush1.msra.mxu0 0.0
  %711 = vmatprep.subr.mxu0 0.0
  %712 = vmatpush1.msra.mxu0 0.0
  %713 = vmatprep.subr.mxu0 0.0
  %714 = vmatpush1.msra.mxu0 0.0
  %715 = vmatprep.subr.mxu0 0.0
  %716 = vmatpush1.msra.mxu0 0.0
  %717 = vmatprep.subr.mxu0 0.0
  %718 = vmatpush1.msra.mxu0 0.0
  %719 = vmatprep.subr.mxu0 0.0
  %720 = vmatpush1.msra.mxu0 0.0
  %721 = vmatprep.subr.mxu0 0.0
  %722 = vmatpush1.msra.mxu0 0.0
  %723 = vmatprep.subr.mxu0 0.0
  %724 = vmatpush1.msra.mxu0 0.0
  %725 = vmatprep.mubr.f32.mxu0 0.0
  %726 = vmatmul.mubr.f32.gmra.mrb[0].mxu0 %v659
  %v727 = vpop.f32.mrb[0].mxu0
  %v728 = vadd.f32 0.0, %v727
  %v729 = vpop.f32.mrb[0].mxu0
  %730 = vdwg.mxu0
  %v731 = vsel %vm148, %v652, 0
  %733 = vmatprep.subr.mxu0 0.0
  %734 = vmatpush1.msra.mxu0 %v131
  %735 = vmatprep.subr.mxu0 0.0
  %736 = vmatpush1.msra.mxu0 %v132
  %737 = vmatprep.subr.mxu0 0.0
  %738 = vmatpush1.msra.mxu0 %v133
  %739 = vmatprep.subr.mxu0 0.0
  %740 = vmatpush1.msra.mxu0 %v134
  %741 = vmatprep.subr.mxu0 0.0
  %742 = vmatpush1.msra.mxu0 0.0
  %743 = vmatprep.subr.mxu0 0.0
  %744 = vmatpush1.msra.mxu0 0.0
  %745 = vmatprep.subr.mxu0 0.0
  %746 = vmatpush1.msra.mxu0 0.0
  %747 = vmatprep.subr.mxu0 0.0
  %748 = vmatpush1.msra.mxu0 0.0
  %749 = vmatprep.subr.mxu0 0.0
  %750 = vmatpush1.msra.mxu0 0.0
  %751 = vmatprep.subr.mxu0 0.0
  %752 = vmatpush1.msra.mxu0 0.0
  %753 = vmatprep.subr.mxu0 0.0
  %754 = vmatpush1.msra.mxu0 0.0
  %755 = vmatprep.subr.mxu0 0.0
  %756 = vmatpush1.msra.mxu0 0.0
  %757 = vmatprep.subr.mxu0 0.0
  %758 = vmatpush1.msra.mxu0 0.0
  %759 = vmatprep.subr.mxu0 0.0
  %760 = vmatpush1.msra.mxu0 0.0
  %761 = vmatprep.subr.mxu0 0.0
  %762 = vmatpush1.msra.mxu0 0.0
  %763 = vmatprep.subr.mxu0 0.0
  %764 = vmatpush1.msra.mxu0 0.0
  %765 = vmatprep.subr.mxu0 0.0
  %766 = vmatpush1.msra.mxu0 0.0
  %767 = vmatprep.subr.mxu0 0.0
  %768 = vmatpush1.msra.mxu0 0.0
  %769 = vmatprep.subr.mxu0 0.0
  %770 = vmatpush1.msra.mxu0 0.0
  %771 = vmatprep.subr.mxu0 0.0
  %772 = vmatpush1.msra.mxu0 0.0
  %773 = vmatprep.subr.mxu0 0.0
  %774 = vmatpush1.msra.mxu0 0.0
  %775 = vmatprep.subr.mxu0 0.0
  %776 = vmatpush1.msra.mxu0 0.0
  %777 = vmatprep.subr.mxu0 0.0
  %778 = vmatpush1.msra.mxu0 0.0
  %779 = vmatprep.subr.mxu0 0.0
  %780 = vmatpush1.msra.mxu0 0.0
  %781 = vmatprep.subr.mxu0 0.0
  %782 = vmatpush1.msra.mxu0 0.0
  %783 = vmatprep.subr.mxu0 0.0
  %784 = vmatpush1.msra.mxu0 0.0
  %785 = vmatprep.subr.mxu0 0.0
  %786 = vmatpush1.msra.mxu0 0.0
  %787 = vmatprep.subr.mxu0 0.0
  %788 = vmatpush1.msra.mxu0 0.0
  %789 = vmatprep.subr.mxu0 0.0
  %790 = vmatpush1.msra.mxu0 0.0
  %791 = vmatprep.subr.mxu0 0.0
  %792 = vmatpush1.msra.mxu0 0.0
  %793 = vmatprep.subr.mxu0 0.0
  %794 = vmatpush1.msra.mxu0 0.0
  %795 = vmatprep.subr.mxu0 0.0
  %796 = vmatpush1.msra.mxu0 0.0
  %797 = vmatprep.mubr.f32.mxu0 0.0
  %798 = vmatmul.mubr.f32.gmra.mrb[0].mxu0 %v731
  %v799 = vpop.f32.mrb[0].mxu0
  %v800 = vadd.f32 %v728, %v799
  %v801 = vpop.f32.mrb[0].mxu0
  %802 = vdwg.mxu0
  %v803 = vadd.f32 %v800, %v296
  %v806 = vunpack.c.l.s4 1966171168
  %v807 = vunpack.c.0.s8 %v806
  %v808 = vlaneseq
  %v809 = vshrl.u32 %v808, 7
  %v810 = vsub.s32 %v807, %v809
  %v811 = vrot.slane %v803, %v810
  %v812 = vcombine.high %v811, %v811
  %v814 = vunpack.c.l.s4 1966171168
  %v815 = vunpack.c.0.s8 %v814
  %v816 = vlaneseq
  %v817 = vshrl.u32 %v816, 7
  %v818 = vsub.s32 %v815, %v817
  %v819 = vrot.slane %v811, %v818
  %v821 = vunpack.c.l.s4 1966171168
  %v822 = vunpack.c.0.s8 %v821
  %v823 = vlaneseq
  %v824 = vshrl.u32 %v823, 7
  %v825 = vsub.s32 %v822, %v824
  %v826 = vrot.slane %v812, %v825
  %v827 = vlaneseq
  %v828 = vshrl.u32 %v827, 7
  %v829 = vsub.s32 0, %v828
  %v830 = vrot.slane %v819, %v829
  %v831 = vlaneseq
  %v832 = vshrl.u32 %v831, 7
  %v833 = vsub.s32 0, %v832
  %v834 = vrot.slane %v826, %v833
  %v837 = vadd.f32 %v830, %v125
  %v838 = vadd.f32 %v834, %v129
  %v839 = vtanh.pop %v837
  %v840 = vtanh.pop %v838
  %v841 = vmul.f32 %v839, %v340
  %v842 = vmul.f32 %v840, %v340
  %v843 = vsel %vm344, %v841, 0.0
  %844 = vadd.xlane.f32.xlu0 %v843
  %v845 = vpop.xlane.xlu0 %844
  %v846 = vsel %vm344, %v842, 0.0
  %847 = vadd.xlane.f32.xlu0 %v846
  %v848 = vpop.xlane.xlu0 %847
  %v849 = vadd.f32 %v845, %v358
  %v850 = vadd.f32 %v848, %v358
  %v853 = vlaneseq
  %v854 = vshrl.u32 %v853, 7
  %v855 = vsub.s32 %v365, %v854
  %v856 = vrot.slane %v849, %v855
  %v857 = vlaneseq
  %v858 = vshrl.u32 %v857, 7
  %v859 = vsub.s32 %v365, %v858
  %v860 = vrot.slane %v850, %v859
  %v861 = vsel %vm374, %v860, %v856
  %v863 = vsel %vm377, %v861, -inf
  %864 = vmax.xlane.f32.xlu0 %v863
  %v865 = vpop.xlane.xlu0 %864
  %v867 = vlaneseq
  %v868 = vshrl.u32 %v867, 7
  %v869 = vsub.s32 0, %v868
  %v870 = vrot.slane %v865, %v869
  %v871 = vlaneseq
  %v872 = vshrl.u32 %v871, 7
  %v873 = vsub.s32 1, %v872
  %v874 = vrot.slane %v865, %v873
  %v877 = vsub.f32 %v849, %v870
  %v878 = vsub.f32 %v850, %v874
  %v879 = vmul.f32 %v877, 1.442695
  %v880 = vpow.pop %v879
  %v881 = vmul.f32 %v878, 1.442695
  %v882 = vpow.pop %v881
  %885 = vset.pattern.permute.xlu0 0
  %886 = vperm.xlu0 %885, %v880
  %v887 = vpop.permute.xlu0 %886
  %888 = vset.pattern.permute.xlu0 0
  %889 = vperm.xlu0 %888, %v882
  %v890 = vpop.permute.xlu0 %889
  %v891 = vlaneseq
  %v892 = vshrl.u32 %v891, 7
  %v893 = vsub.s32 %v365, %v892
  %v894 = vrot.slane %v887, %v893
  %v895 = vlaneseq
  %v896 = vshrl.u32 %v895, 7
  %v897 = vsub.s32 %v365, %v896
  %v898 = vrot.slane %v890, %v897
  %v899 = vsel %vm374, %v898, %v894
  %v901 = vsel %vm377, %v899, 0.0
  %902 = vadd.xlane.f32.xlu0 %v901
  %v903 = vpop.xlane.xlu0 %902
  %v904 = vrcp.pop %v903
  %v906 = vlaneseq
  %v907 = vshrl.u32 %v906, 7
  %v908 = vsub.s32 0, %v907
  %v909 = vrot.slane %v904, %v908
  %v910 = vlaneseq
  %v911 = vshrl.u32 %v910, 7
  %v912 = vsub.s32 1, %v911
  %v913 = vrot.slane %v904, %v912
  %v916 = vmul.f32 %v880, %v909
  %v917 = vmul.f32 %v882, %v913
  %s918 = scalar_lea.vmem %s1, 2
  %v919 = vld [vmem:[%s918] sm:$0x3]
  %v921 = vlaneseq
  %v922 = vshrl.u32 %v921, 7
  %v923 = vsub.s32 0, %v922
  %v924 = vrot.slane %v919, %v923
  %926 = vbcast.lane.b32.xlu0 %v924, 256
  %v927 = vpop.permute.xlu0 %926
  %v928 = vlaneseq
  %v929 = vshrl.u32 %v928, 7
  %v930 = vsub.s32 1, %v929
  %v931 = vrot.slane %v919, %v930
  %933 = vbcast.lane.b32.xlu0 %v931, 256
  %v934 = vpop.permute.xlu0 %933
  %v937 = vmul.f32 %v916, %v927
  %v938 = vmul.f32 %v917, %v934
  %939 = vmatprep.subr.mxu0 0.0
  %940 = vmatpush1.msra.mxu0 %v143
  %941 = vmatprep.subr.mxu0 0.0
  %942 = vmatpush1.msra.mxu0 %v144
  %943 = vmatprep.subr.mxu0 0.0
  %944 = vmatpush1.msra.mxu0 %v145
  %945 = vmatprep.subr.mxu0 0.0
  %946 = vmatpush1.msra.mxu0 %v146
  %947 = vmatprep.subr.mxu0 0.0
  %948 = vmatpush1.msra.mxu0 0.0
  %949 = vmatprep.subr.mxu0 0.0
  %950 = vmatpush1.msra.mxu0 0.0
  %951 = vmatprep.subr.mxu0 0.0
  %952 = vmatpush1.msra.mxu0 0.0
  %953 = vmatprep.subr.mxu0 0.0
  %954 = vmatpush1.msra.mxu0 0.0
  %955 = vmatprep.subr.mxu0 0.0
  %956 = vmatpush1.msra.mxu0 0.0
  %957 = vmatprep.subr.mxu0 0.0
  %958 = vmatpush1.msra.mxu0 0.0
  %959 = vmatprep.subr.mxu0 0.0
  %960 = vmatpush1.msra.mxu0 0.0
  %961 = vmatprep.subr.mxu0 0.0
  %962 = vmatpush1.msra.mxu0 0.0
  %963 = vmatprep.subr.mxu0 0.0
  %964 = vmatpush1.msra.mxu0 0.0
  %965 = vmatprep.subr.mxu0 0.0
  %966 = vmatpush1.msra.mxu0 0.0
  %967 = vmatprep.subr.mxu0 0.0
  %968 = vmatpush1.msra.mxu0 0.0
  %969 = vmatprep.subr.mxu0 0.0
  %970 = vmatpush1.msra.mxu0 0.0
  %971 = vmatprep.subr.mxu0 0.0
  %972 = vmatpush1.msra.mxu0 0.0
  %973 = vmatprep.subr.mxu0 0.0
  %974 = vmatpush1.msra.mxu0 0.0
  %975 = vmatprep.subr.mxu0 0.0
  %976 = vmatpush1.msra.mxu0 0.0
  %977 = vmatprep.subr.mxu0 0.0
  %978 = vmatpush1.msra.mxu0 0.0
  %979 = vmatprep.subr.mxu0 0.0
  %980 = vmatpush1.msra.mxu0 0.0
  %981 = vmatprep.subr.mxu0 0.0
  %982 = vmatpush1.msra.mxu0 0.0
  %983 = vmatprep.subr.mxu0 0.0
  %984 = vmatpush1.msra.mxu0 0.0
  %985 = vmatprep.subr.mxu0 0.0
  %986 = vmatpush1.msra.mxu0 0.0
  %987 = vmatprep.subr.mxu0 0.0
  %988 = vmatpush1.msra.mxu0 0.0
  %989 = vmatprep.subr.mxu0 0.0
  %990 = vmatpush1.msra.mxu0 0.0
  %991 = vmatprep.subr.mxu0 0.0
  %992 = vmatpush1.msra.mxu0 0.0
  %993 = vmatprep.subr.mxu0 0.0
  %994 = vmatpush1.msra.mxu0 0.0
  %995 = vmatprep.subr.mxu0 0.0
  %996 = vmatpush1.msra.mxu0 0.0
  %997 = vmatprep.subr.mxu0 0.0
  %998 = vmatpush1.msra.mxu0 0.0
  %999 = vmatprep.subr.mxu0 0.0
  %1000 = vmatpush1.msra.mxu0 0.0
  %1001 = vmatprep.subr.mxu0 0.0
  %1002 = vmatpush1.msra.mxu0 0.0
  %1003 = vmatprep.mubr.f32.mxu0 0.0
  %1004 = vmatmul.mubr.f32.gmra.mrb[0].mxu0 %v731
  %v1005 = vpop.f32.mrb[0].mxu0
  %v1006 = vadd.f32 0.0, %v1005
  %v1007 = vpop.f32.mrb[0].mxu0
  %1008 = vdwg.mxu0
  %1011 = vset.pattern.permute.xlu0 0
  %1012 = vperm.xlu0 %1011, %v937
  %v1013 = vpop.permute.xlu0 %1012
  %1014 = vset.pattern.permute.xlu0 0
  %1015 = vperm.xlu0 %1014, %v938
  %v1016 = vpop.permute.xlu0 %1015
  %v1017 = vlaneseq
  %v1018 = vshrl.u32 %v1017, 7
  %v1019 = vsub.s32 %v365, %v1018
  %v1020 = vrot.slane %v1013, %v1019
  %v1021 = vlaneseq
  %v1022 = vshrl.u32 %v1021, 7
  %v1023 = vsub.s32 %v365, %v1022
  %v1024 = vrot.slane %v1016, %v1023
  %v1025 = vsel %vm374, %v1024, %v1020
  %v1026 = vsel %vm540, %v1025, 0
  %1028 = vmatprep.subr.mxu0 0.0
  %1029 = vmatpush1.msra.mxu0 %v545
  %1030 = vmatprep.subr.mxu0 0.0
  %1031 = vmatpush1.msra.mxu0 0.0
  %1032 = vmatprep.subr.mxu0 0.0
  %1033 = vmatpush1.msra.mxu0 0.0
  %1034 = vmatprep.subr.mxu0 0.0
  %1035 = vmatpush1.msra.mxu0 0.0
  %1036 = vmatprep.subr.mxu0 0.0
  %1037 = vmatpush1.msra.mxu0 0.0
  %1038 = vmatprep.subr.mxu0 0.0
  %1039 = vmatpush1.msra.mxu0 0.0
  %1040 = vmatprep.subr.mxu0 0.0
  %1041 = vmatpush1.msra.mxu0 0.0
  %1042 = vmatprep.subr.mxu0 0.0
  %1043 = vmatpush1.msra.mxu0 0.0
  %1044 = vmatprep.subr.mxu0 0.0
  %1045 = vmatpush1.msra.mxu0 0.0
  %1046 = vmatprep.subr.mxu0 0.0
  %1047 = vmatpush1.msra.mxu0 0.0
  %1048 = vmatprep.subr.mxu0 0.0
  %1049 = vmatpush1.msra.mxu0 0.0
  %1050 = vmatprep.subr.mxu0 0.0
  %1051 = vmatpush1.msra.mxu0 0.0
  %1052 = vmatprep.subr.mxu0 0.0
  %1053 = vmatpush1.msra.mxu0 0.0
  %1054 = vmatprep.subr.mxu0 0.0
  %1055 = vmatpush1.msra.mxu0 0.0
  %1056 = vmatprep.subr.mxu0 0.0
  %1057 = vmatpush1.msra.mxu0 0.0
  %1058 = vmatprep.subr.mxu0 0.0
  %1059 = vmatpush1.msra.mxu0 0.0
  %1060 = vmatprep.subr.mxu0 0.0
  %1061 = vmatpush1.msra.mxu0 0.0
  %1062 = vmatprep.subr.mxu0 0.0
  %1063 = vmatpush1.msra.mxu0 0.0
  %1064 = vmatprep.subr.mxu0 0.0
  %1065 = vmatpush1.msra.mxu0 0.0
  %1066 = vmatprep.subr.mxu0 0.0
  %1067 = vmatpush1.msra.mxu0 0.0
  %1068 = vmatprep.subr.mxu0 0.0
  %1069 = vmatpush1.msra.mxu0 0.0
  %1070 = vmatprep.subr.mxu0 0.0
  %1071 = vmatpush1.msra.mxu0 0.0
  %1072 = vmatprep.subr.mxu0 0.0
  %1073 = vmatpush1.msra.mxu0 0.0
  %1074 = vmatprep.subr.mxu0 0.0
  %1075 = vmatpush1.msra.mxu0 0.0
  %1076 = vmatprep.subr.mxu0 0.0
  %1077 = vmatpush1.msra.mxu0 0.0
  %1078 = vmatprep.subr.mxu0 0.0
  %1079 = vmatpush1.msra.mxu0 0.0
  %1080 = vmatprep.subr.mxu0 0.0
  %1081 = vmatpush1.msra.mxu0 0.0
  %1082 = vmatprep.subr.mxu0 0.0
  %1083 = vmatpush1.msra.mxu0 0.0
  %1084 = vmatprep.subr.mxu0 0.0
  %1085 = vmatpush1.msra.mxu0 0.0
  %1086 = vmatprep.subr.mxu0 0.0
  %1087 = vmatpush1.msra.mxu0 0.0
  %1088 = vmatprep.subr.mxu0 0.0
  %1089 = vmatpush1.msra.mxu0 0.0
  %1090 = vmatprep.subr.mxu0 0.0
  %1091 = vmatpush1.msra.mxu0 0.0
  %1092 = vmatprep.mubr.f32.mxu0 0.0
  %1093 = vmatmul.mubr.f32.gmra.mrb[0].mxu0 %v1026
  %v1094 = vpop.f32.mrb[0].mxu0
  %v1095 = vadd.f32 %v1006, %v1094
  %v1096 = vpop.f32.mrb[0].mxu0
  %1097 = vdwg.mxu0
  %v1098 = vadd.f32 %v1095, %v621
  %v1099 = vxor.u32 %v1098, 2147483648
  %v1100 = vmul.f32 %v1099, 1.442695
  %v1101 = vpow.pop %v1100
  %v1102 = vadd.f32 %v1101, 1.0
  %v1103 = vrcp.pop %v1102
  %v1104 = vmul.f32 1.0, %v1103
  %v1105 = vtanh.pop %v1098
  %v1106 = vmul.f32 %v1104, %v641
  %1108 = vrot.lane.b32.xlu0 %v1105, 64
  %v1109 = vpop.permute.xlu0 %1108
  %v1111 = vmul.f32 %v1104, %v1109
  %1113 = vrot.lane.b32.xlu0 %v1111, 32
  %v1114 = vpop.permute.xlu0 %1113
  %v1116 = vadd.f32 %v1106, %v1114
  %v1117 = vtanh.pop %v1116
  %1119 = vrot.lane.b32.xlu0 %v1117, 64
  %v1120 = vpop.permute.xlu0 %1119
  %v1122 = vmul.f32 %v1104, %v1120
  %s1124 = scalar_lea.vmem %s12, 2
  %1125 = vst.msk [vmem:[%s1124] sm:$0x3] %vm377, %v1025
  %1127 = vrot.lane.b32.xlu0 %v1122, 32
  %v1128 = vpop.permute.xlu0 %1127
  %s1130 = scalar_lea.vmem %s13, 2
  %1131 = vst.msk [vmem:[%s1130] sm:$0x3] %vm654, %v1128
  %1133 = vrot.lane.b32.xlu0 %v1116, 96
  %v1134 = vpop.permute.xlu0 %1133
  %v1135 = vsel %vm148, %v1134, 0
  %1137 = vmatprep.subr.mxu0 0.0
  %1138 = vmatpush1.msra.mxu0 %v135
  %1139 = vmatprep.subr.mxu0 0.0
  %1140 = vmatpush1.msra.mxu0 %v136
  %1141 = vmatprep.subr.mxu0 0.0
  %1142 = vmatpush1.msra.mxu0 %v137
  %1143 = vmatprep.subr.mxu0 0.0
  %1144 = vmatpush1.msra.mxu0 %v138
  %1145 = vmatprep.subr.mxu0 0.0
  %1146 = vmatpush1.msra.mxu0 0.0
  %1147 = vmatprep.subr.mxu0 0.0
  %1148 = vmatpush1.msra.mxu0 0.0
  %1149 = vmatprep.subr.mxu0 0.0
  %1150 = vmatpush1.msra.mxu0 0.0
  %1151 = vmatprep.subr.mxu0 0.0
  %1152 = vmatpush1.msra.mxu0 0.0
  %1153 = vmatprep.subr.mxu0 0.0
  %1154 = vmatpush1.msra.mxu0 0.0
  %1155 = vmatprep.subr.mxu0 0.0
  %1156 = vmatpush1.msra.mxu0 0.0
  %1157 = vmatprep.subr.mxu0 0.0
  %1158 = vmatpush1.msra.mxu0 0.0
  %1159 = vmatprep.subr.mxu0 0.0
  %1160 = vmatpush1.msra.mxu0 0.0
  %1161 = vmatprep.subr.mxu0 0.0
  %1162 = vmatpush1.msra.mxu0 0.0
  %1163 = vmatprep.subr.mxu0 0.0
  %1164 = vmatpush1.msra.mxu0 0.0
  %1165 = vmatprep.subr.mxu0 0.0
  %1166 = vmatpush1.msra.mxu0 0.0
  %1167 = vmatprep.subr.mxu0 0.0
  %1168 = vmatpush1.msra.mxu0 0.0
  %1169 = vmatprep.subr.mxu0 0.0
  %1170 = vmatpush1.msra.mxu0 0.0
  %1171 = vmatprep.subr.mxu0 0.0
  %1172 = vmatpush1.msra.mxu0 0.0
  %1173 = vmatprep.subr.mxu0 0.0
  %1174 = vmatpush1.msra.mxu0 0.0
  %1175 = vmatprep.subr.mxu0 0.0
  %1176 = vmatpush1.msra.mxu0 0.0
  %1177 = vmatprep.subr.mxu0 0.0
  %1178 = vmatpush1.msra.mxu0 0.0
  %1179 = vmatprep.subr.mxu0 0.0
  %1180 = vmatpush1.msra.mxu0 0.0
  %1181 = vmatprep.subr.mxu0 0.0
  %1182 = vmatpush1.msra.mxu0 0.0
  %1183 = vmatprep.subr.mxu0 0.0
  %1184 = vmatpush1.msra.mxu0 0.0
  %1185 = vmatprep.subr.mxu0 0.0
  %1186 = vmatpush1.msra.mxu0 0.0
  %1187 = vmatprep.subr.mxu0 0.0
  %1188 = vmatpush1.msra.mxu0 0.0
  %1189 = vmatprep.subr.mxu0 0.0
  %1190 = vmatpush1.msra.mxu0 0.0
  %1191 = vmatprep.subr.mxu0 0.0
  %1192 = vmatpush1.msra.mxu0 0.0
  %1193 = vmatprep.subr.mxu0 0.0
  %1194 = vmatpush1.msra.mxu0 0.0
  %1195 = vmatprep.subr.mxu0 0.0
  %1196 = vmatpush1.msra.mxu0 0.0
  %1197 = vmatprep.subr.mxu0 0.0
  %1198 = vmatpush1.msra.mxu0 0.0
  %1199 = vmatprep.subr.mxu0 0.0
  %1200 = vmatpush1.msra.mxu0 0.0
  %1201 = vmatprep.mubr.f32.mxu0 0.0
  %1202 = vmatmul.mubr.f32.gmra.mrb[0].mxu0 %v1135
  %v1203 = vpop.f32.mrb[0].mxu0
  %v1204 = vadd.f32 0.0, %v1203
  %v1205 = vpop.f32.mrb[0].mxu0
  %1206 = vdwg.mxu0
  %v1207 = vsel %vm148, %v1128, 0
  %1209 = vmatprep.subr.mxu0 0.0
  %1210 = vmatpush1.msra.mxu0 %v131
  %1211 = vmatprep.subr.mxu0 0.0
  %1212 = vmatpush1.msra.mxu0 %v132
  %1213 = vmatprep.subr.mxu0 0.0
  %1214 = vmatpush1.msra.mxu0 %v133
  %1215 = vmatprep.subr.mxu0 0.0
  %1216 = vmatpush1.msra.mxu0 %v134
  %1217 = vmatprep.subr.mxu0 0.0
  %1218 = vmatpush1.msra.mxu0 0.0
  %1219 = vmatprep.subr.mxu0 0.0
  %1220 = vmatpush1.msra.mxu0 0.0
  %1221 = vmatprep.subr.mxu0 0.0
  %1222 = vmatpush1.msra.mxu0 0.0
  %1223 = vmatprep.subr.mxu0 0.0
  %1224 = vmatpush1.msra.mxu0 0.0
  %1225 = vmatprep.subr.mxu0 0.0
  %1226 = vmatpush1.msra.mxu0 0.0
  %1227 = vmatprep.subr.mxu0 0.0
  %1228 = vmatpush1.msra.mxu0 0.0
  %1229 = vmatprep.subr.mxu0 0.0
  %1230 = vmatpush1.msra.mxu0 0.0
  %1231 = vmatprep.subr.mxu0 0.0
  %1232 = vmatpush1.msra.mxu0 0.0
  %1233 = vmatprep.subr.mxu0 0.0
  %1234 = vmatpush1.msra.mxu0 0.0
  %1235 = vmatprep.subr.mxu0 0.0
  %1236 = vmatpush1.msra.mxu0 0.0
  %1237 = vmatprep.subr.mxu0 0.0
  %1238 = vmatpush1.msra.mxu0 0.0
  %1239 = vmatprep.subr.mxu0 0.0
  %1240 = vmatpush1.msra.mxu0 0.0
  %1241 = vmatprep.subr.mxu0 0.0
  %1242 = vmatpush1.msra.mxu0 0.0
  %1243 = vmatprep.subr.mxu0 0.0
  %1244 = vmatpush1.msra.mxu0 0.0
  %1245 = vmatprep.subr.mxu0 0.0
  %1246 = vmatpush1.msra.mxu0 0.0
  %1247 = vmatprep.subr.mxu0 0.0
  %1248 = vmatpush1.msra.mxu0 0.0
  %1249 = vmatprep.subr.mxu0 0.0
  %1250 = vmatpush1.msra.mxu0 0.0
  %1251 = vmatprep.subr.mxu0 0.0
  %1252 = vmatpush1.msra.mxu0 0.0
  %1253 = vmatprep.subr.mxu0 0.0
  %1254 = vmatpush1.msra.mxu0 0.0
  %1255 = vmatprep.subr.mxu0 0.0
  %1256 = vmatpush1.msra.mxu0 0.0
  %1257 = vmatprep.subr.mxu0 0.0
  %1258 = vmatpush1.msra.mxu0 0.0
  %1259 = vmatprep.subr.mxu0 0.0
  %1260 = vmatpush1.msra.mxu0 0.0
  %1261 = vmatprep.subr.mxu0 0.0
  %1262 = vmatpush1.msra.mxu0 0.0
  %1263 = vmatprep.subr.mxu0 0.0
  %1264 = vmatpush1.msra.mxu0 0.0
  %1265 = vmatprep.subr.mxu0 0.0
  %1266 = vmatpush1.msra.mxu0 0.0
  %1267 = vmatprep.subr.mxu0 0.0
  %1268 = vmatpush1.msra.mxu0 0.0
  %1269 = vmatprep.subr.mxu0 0.0
  %1270 = vmatpush1.msra.mxu0 0.0
  %1271 = vmatprep.subr.mxu0 0.0
  %1272 = vmatpush1.msra.mxu0 0.0
  %1273 = vmatprep.mubr.f32.mxu0 0.0
  %1274 = vmatmul.mubr.f32.gmra.mrb[0].mxu0 %v1207
  %v1275 = vpop.f32.mrb[0].mxu0
  %v1276 = vadd.f32 %v1204, %v1275
  %v1277 = vpop.f32.mrb[0].mxu0
  %1278 = vdwg.mxu0
  %v1279 = vadd.f32 %v1276, %v296
  %v1282 = vunpack.c.l.s4 1966171168
  %v1283 = vunpack.c.0.s8 %v1282
  %v1284 = vlaneseq
  %v1285 = vshrl.u32 %v1284, 7
  %v1286 = vsub.s32 %v1283, %v1285
  %v1287 = vrot.slane %v1279, %v1286
  %v1288 = vcombine.high %v1287, %v1287
  %v1290 = vunpack.c.l.s4 1966171168
  %v1291 = vunpack.c.0.s8 %v1290
  %v1292 = vlaneseq
  %v1293 = vshrl.u32 %v1292, 7
  %v1294 = vsub.s32 %v1291, %v1293
  %v1295 = vrot.slane %v1287, %v1294
  %v1297 = vunpack.c.l.s4 1966171168
  %v1298 = vunpack.c.0.s8 %v1297
  %v1299 = vlaneseq
  %v1300 = vshrl.u32 %v1299, 7
  %v1301 = vsub.s32 %v1298, %v1300
  %v1302 = vrot.slane %v1288, %v1301
  %v1303 = vlaneseq
  %v1304 = vshrl.u32 %v1303, 7
  %v1305 = vsub.s32 0, %v1304
  %v1306 = vrot.slane %v1295, %v1305
  %v1307 = vlaneseq
  %v1308 = vshrl.u32 %v1307, 7
  %v1309 = vsub.s32 0, %v1308
  %v1310 = vrot.slane %v1302, %v1309
  %v1313 = vadd.f32 %v1306, %v125
  %v1314 = vadd.f32 %v1310, %v129
  %v1315 = vtanh.pop %v1313
  %v1316 = vtanh.pop %v1314
  %v1317 = vmul.f32 %v1315, %v340
  %v1318 = vmul.f32 %v1316, %v340
  %v1319 = vsel %vm344, %v1317, 0.0
  %1320 = vadd.xlane.f32.xlu0 %v1319
  %v1321 = vpop.xlane.xlu0 %1320
  %v1322 = vsel %vm344, %v1318, 0.0
  %1323 = vadd.xlane.f32.xlu0 %v1322
  %v1324 = vpop.xlane.xlu0 %1323
  %v1325 = vadd.f32 %v1321, %v358
  %v1326 = vadd.f32 %v1324, %v358
  %v1329 = vlaneseq
  %v1330 = vshrl.u32 %v1329, 7
  %v1331 = vsub.s32 %v365, %v1330
  %v1332 = vrot.slane %v1325, %v1331
  %v1333 = vlaneseq
  %v1334 = vshrl.u32 %v1333, 7
  %v1335 = vsub.s32 %v365, %v1334
  %v1336 = vrot.slane %v1326, %v1335
  %v1337 = vsel %vm374, %v1336, %v1332
  %v1339 = vsel %vm377, %v1337, -inf
  %1340 = vmax.xlane.f32.xlu0 %v1339
  %v1341 = vpop.xlane.xlu0 %1340
  %v1343 = vlaneseq
  %v1344 = vshrl.u32 %v1343, 7
  %v1345 = vsub.s32 0, %v1344
  %v1346 = vrot.slane %v1341, %v1345
  %v1347 = vlaneseq
  %v1348 = vshrl.u32 %v1347, 7
  %v1349 = vsub.s32 1, %v1348
  %v1350 = vrot.slane %v1341, %v1349
  %v1353 = vsub.f32 %v1325, %v1346
  %v1354 = vsub.f32 %v1326, %v1350
  %v1355 = vmul.f32 %v1353, 1.442695
  %v1356 = vpow.pop %v1355
  %v1357 = vmul.f32 %v1354, 1.442695
  %v1358 = vpow.pop %v1357
  %1361 = vset.pattern.permute.xlu0 0
  %1362 = vperm.xlu0 %1361, %v1356
  %v1363 = vpop.permute.xlu0 %1362
  %1364 = vset.pattern.permute.xlu0 0
  %1365 = vperm.xlu0 %1364, %v1358
  %v1366 = vpop.permute.xlu0 %1365
  %v1367 = vlaneseq
  %v1368 = vshrl.u32 %v1367, 7
  %v1369 = vsub.s32 %v365, %v1368
  %v1370 = vrot.slane %v1363, %v1369
  %v1371 = vlaneseq
  %v1372 = vshrl.u32 %v1371, 7
  %v1373 = vsub.s32 %v365, %v1372
  %v1374 = vrot.slane %v1366, %v1373
  %v1375 = vsel %vm374, %v1374, %v1370
  %v1377 = vsel %vm377, %v1375, 0.0
  %1378 = vadd.xlane.f32.xlu0 %v1377
  %v1379 = vpop.xlane.xlu0 %1378
  %v1380 = vrcp.pop %v1379
  %v1382 = vlaneseq
  %v1383 = vshrl.u32 %v1382, 7
  %v1384 = vsub.s32 0, %v1383
  %v1385 = vrot.slane %v1380, %v1384
  %v1386 = vlaneseq
  %v1387 = vshrl.u32 %v1386, 7
  %v1388 = vsub.s32 1, %v1387
  %v1389 = vrot.slane %v1380, %v1388
  %v1392 = vmul.f32 %v1356, %v1385
  %v1393 = vmul.f32 %v1358, %v1389
  %s1394 = scalar_lea.vmem %s1, 4
  %v1395 = vld [vmem:[%s1394] sm:$0x3]
  %v1397 = vlaneseq
  %v1398 = vshrl.u32 %v1397, 7
  %v1399 = vsub.s32 0, %v1398
  %v1400 = vrot.slane %v1395, %v1399
  %1402 = vbcast.lane.b32.xlu0 %v1400, 256
  %v1403 = vpop.permute.xlu0 %1402
  %v1404 = vlaneseq
  %v1405 = vshrl.u32 %v1404, 7
  %v1406 = vsub.s32 1, %v1405
  %v1407 = vrot.slane %v1395, %v1406
  %1409 = vbcast.lane.b32.xlu0 %v1407, 256
  %v1410 = vpop.permute.xlu0 %1409
  %v1413 = vmul.f32 %v1392, %v1403
  %v1414 = vmul.f32 %v1393, %v1410
  %1415 = vmatprep.subr.mxu0 0.0
  %1416 = vmatpush1.msra.mxu0 %v143
  %1417 = vmatprep.subr.mxu0 0.0
  %1418 = vmatpush1.msra.mxu0 %v144
  %1419 = vmatprep.subr.mxu0 0.0
  %1420 = vmatpush1.msra.mxu0 %v145
  %1421 = vmatprep.subr.mxu0 0.0
  %1422 = vmatpush1.msra.mxu0 %v146
  %1423 = vmatprep.subr.mxu0 0.0
  %1424 = vmatpush1.msra.mxu0 0.0
  %1425 = vmatprep.subr.mxu0 0.0
  %1426 = vmatpush1.msra.mxu0 0.0
  %1427 = vmatprep.subr.mxu0 0.0
  %1428 = vmatpush1.msra.mxu0 0.0
  %1429 = vmatprep.subr.mxu0 0.0
  %1430 = vmatpush1.msra.mxu0 0.0
  %1431 = vmatprep.subr.mxu0 0.0
  %1432 = vmatpush1.msra.mxu0 0.0
  %1433 = vmatprep.subr.mxu0 0.0
  %1434 = vmatpush1.msra.mxu0 0.0
  %1435 = vmatprep.subr.mxu0 0.0
  %1436 = vmatpush1.msra.mxu0 0.0
  %1437 = vmatprep.subr.mxu0 0.0
  %1438 = vmatpush1.msra.mxu0 0.0
  %1439 = vmatprep.subr.mxu0 0.0
  %1440 = vmatpush1.msra.mxu0 0.0
  %1441 = vmatprep.subr.mxu0 0.0
  %1442 = vmatpush1.msra.mxu0 0.0
  %1443 = vmatprep.subr.mxu0 0.0
  %1444 = vmatpush1.msra.mxu0 0.0
  %1445 = vmatprep.subr.mxu0 0.0
  %1446 = vmatpush1.msra.mxu0 0.0
  %1447 = vmatprep.subr.mxu0 0.0
  %1448 = vmatpush1.msra.mxu0 0.0
  %1449 = vmatprep.subr.mxu0 0.0
  %1450 = vmatpush1.msra.mxu0 0.0
  %1451 = vmatprep.subr.mxu0 0.0
  %1452 = vmatpush1.msra.mxu0 0.0
  %1453 = vmatprep.subr.mxu0 0.0
  %1454 = vmatpush1.msra.mxu0 0.0
  %1455 = vmatprep.subr.mxu0 0.0
  %1456 = vmatpush1.msra.mxu0 0.0
  %1457 = vmatprep.subr.mxu0 0.0
  %1458 = vmatpush1.msra.mxu0 0.0
  %1459 = vmatprep.subr.mxu0 0.0
  %1460 = vmatpush1.msra.mxu0 0.0
  %1461 = vmatprep.subr.mxu0 0.0
  %1462 = vmatpush1.msra.mxu0 0.0
  %1463 = vmatprep.subr.mxu0 0.0
  %1464 = vmatpush1.msra.mxu0 0.0
  %1465 = vmatprep.subr.mxu0 0.0
  %1466 = vmatpush1.msra.mxu0 0.0
  %1467 = vmatprep.subr.mxu0 0.0
  %1468 = vmatpush1.msra.mxu0 0.0
  %1469 = vmatprep.subr.mxu0 0.0
  %1470 = vmatpush1.msra.mxu0 0.0
  %1471 = vmatprep.subr.mxu0 0.0
  %1472 = vmatpush1.msra.mxu0 0.0
  %1473 = vmatprep.subr.mxu0 0.0
  %1474 = vmatpush1.msra.mxu0 0.0
  %1475 = vmatprep.subr.mxu0 0.0
  %1476 = vmatpush1.msra.mxu0 0.0
  %1477 = vmatprep.subr.mxu0 0.0
  %1478 = vmatpush1.msra.mxu0 0.0
  %1479 = vmatprep.mubr.f32.mxu0 0.0
  %1480 = vmatmul.mubr.f32.gmra.mrb[0].mxu0 %v1207
  %v1481 = vpop.f32.mrb[0].mxu0
  %v1482 = vadd.f32 0.0, %v1481
  %v1483 = vpop.f32.mrb[0].mxu0
  %1484 = vdwg.mxu0
  %1487 = vset.pattern.permute.xlu0 0
  %1488 = vperm.xlu0 %1487, %v1413
  %v1489 = vpop.permute.xlu0 %1488
  %1490 = vset.pattern.permute.xlu0 0
  %1491 = vperm.xlu0 %1490, %v1414
  %v1492 = vpop.permute.xlu0 %1491
  %v1493 = vlaneseq
  %v1494 = vshrl.u32 %v1493, 7
  %v1495 = vsub.s32 %v365, %v1494
  %v1496 = vrot.slane %v1489, %v1495
  %v1497 = vlaneseq
  %v1498 = vshrl.u32 %v1497, 7
  %v1499 = vsub.s32 %v365, %v1498
  %v1500 = vrot.slane %v1492, %v1499
  %v1501 = vsel %vm374, %v1500, %v1496
  %v1502 = vsel %vm540, %v1501, 0
  %1504 = vmatprep.subr.mxu0 0.0
  %1505 = vmatpush1.msra.mxu0 %v545
  %1506 = vmatprep.subr.mxu0 0.0
  %1507 = vmatpush1.msra.mxu0 0.0
  %1508 = vmatprep.subr.mxu0 0.0
  %1509 = vmatpush1.msra.mxu0 0.0
  %1510 = vmatprep.subr.mxu0 0.0
  %1511 = vmatpush1.msra.mxu0 0.0
  %1512 = vmatprep.subr.mxu0 0.0
  %1513 = vmatpush1.msra.mxu0 0.0
  %1514 = vmatprep.subr.mxu0 0.0
  %1515 = vmatpush1.msra.mxu0 0.0
  %1516 = vmatprep.subr.mxu0 0.0
  %1517 = vmatpush1.msra.mxu0 0.0
  %1518 = vmatprep.subr.mxu0 0.0
  %1519 = vmatpush1.msra.mxu0 0.0
  %1520 = vmatprep.subr.mxu0 0.0
  %1521 = vmatpush1.msra.mxu0 0.0
  %1522 = vmatprep.subr.mxu0 0.0
  %1523 = vmatpush1.msra.mxu0 0.0
  %1524 = vmatprep.subr.mxu0 0.0
  %1525 = vmatpush1.msra.mxu0 0.0
  %1526 = vmatprep.subr.mxu0 0.0
  %1527 = vmatpush1.msra.mxu0 0.0
  %1528 = vmatprep.subr.mxu0 0.0
  %1529 = vmatpush1.msra.mxu0 0.0
  %1530 = vmatprep.subr.mxu0 0.0
  %1531 = vmatpush1.msra.mxu0 0.0
  %1532 = vmatprep.subr.mxu0 0.0
  %1533 = vmatpush1.msra.mxu0 0.0
  %1534 = vmatprep.subr.mxu0 0.0
  %1535 = vmatpush1.msra.mxu0 0.0
  %1536 = vmatprep.subr.mxu0 0.0
  %1537 = vmatpush1.msra.mxu0 0.0
  %1538 = vmatprep.subr.mxu0 0.0
  %1539 = vmatpush1.msra.mxu0 0.0
  %1540 = vmatprep.subr.mxu0 0.0
  %1541 = vmatpush1.msra.mxu0 0.0
  %1542 = vmatprep.subr.mxu0 0.0
  %1543 = vmatpush1.msra.mxu0 0.0
  %1544 = vmatprep.subr.mxu0 0.0
  %1545 = vmatpush1.msra.mxu0 0.0
  %1546 = vmatprep.subr.mxu0 0.0
  %1547 = vmatpush1.msra.mxu0 0.0
  %1548 = vmatprep.subr.mxu0 0.0
  %1549 = vmatpush1.msra.mxu0 0.0
  %1550 = vmatprep.subr.mxu0 0.0
  %1551 = vmatpush1.msra.mxu0 0.0
  %1552 = vmatprep.subr.mxu0 0.0
  %1553 = vmatpush1.msra.mxu0 0.0
  %1554 = vmatprep.subr.mxu0 0.0
  %1555 = vmatpush1.msra.mxu0 0.0
  %1556 = vmatprep.subr.mxu0 0.0
  %1557 = vmatpush1.msra.mxu0 0.0
  %1558 = vmatprep.subr.mxu0 0.0
  %1559 = vmatpush1.msra.mxu0 0.0
  %1560 = vmatprep.subr.mxu0 0.0
  %1561 = vmatpush1.msra.mxu0 0.0
  %1562 = vmatprep.subr.mxu0 0.0
  %1563 = vmatpush1.msra.mxu0 0.0
  %1564 = vmatprep.subr.mxu0 0.0
  %1565 = vmatpush1.msra.mxu0 0.0
  %1566 = vmatprep.subr.mxu0 0.0
  %1567 = vmatpush1.msra.mxu0 0.0
  %1568 = vmatprep.mubr.f32.mxu0 0.0
  %1569 = vmatmul.mubr.f32.gmra.mrb[0].mxu0 %v1502
  %v1570 = vpop.f32.mrb[0].mxu0
  %v1571 = vadd.f32 %v1482, %v1570
  %v1572 = vpop.f32.mrb[0].mxu0
  %1573 = vdwg.mxu0
  %v1574 = vadd.f32 %v1571, %v621
  %v1575 = vxor.u32 %v1574, 2147483648
  %v1576 = vmul.f32 %v1575, 1.442695
  %v1577 = vpow.pop %v1576
  %v1578 = vadd.f32 %v1577, 1.0
  %v1579 = vrcp.pop %v1578
  %v1580 = vmul.f32 1.0, %v1579
  %v1581 = vtanh.pop %v1574
  %v1582 = vmul.f32 %v1580, %v1116
  %1584 = vrot.lane.b32.xlu0 %v1581, 64
  %v1585 = vpop.permute.xlu0 %1584
  %v1587 = vmul.f32 %v1580, %v1585
  %1589 = vrot.lane.b32.xlu0 %v1587, 32
  %v1590 = vpop.permute.xlu0 %1589
  %v1592 = vadd.f32 %v1582, %v1590
  %v1593 = vtanh.pop %v1592
  %1595 = vrot.lane.b32.xlu0 %v1593, 64
  %v1596 = vpop.permute.xlu0 %1595
  %v1598 = vmul.f32 %v1580, %v1596
  %s1600 = scalar_lea.vmem %s12, 4
  %1601 = vst.msk [vmem:[%s1600] sm:$0x3] %vm377, %v1501
  %1603 = vrot.lane.b32.xlu0 %v1598, 32
  %v1604 = vpop.permute.xlu0 %1603
  %s1606 = scalar_lea.vmem %s13, 4
  %1607 = vst.msk [vmem:[%s1606] sm:$0x3] %vm654, %v1604
  %1609 = vrot.lane.b32.xlu0 %v1592, 96
  %v1610 = vpop.permute.xlu0 %1609
  %v1611 = vsel %vm148, %v1610, 0
  %1613 = vmatprep.subr.mxu0 0.0
  %1614 = vmatpush1.msra.mxu0 %v135
  %1615 = vmatprep.subr.mxu0 0.0
  %1616 = vmatpush1.msra.mxu0 %v136
  %1617 = vmatprep.subr.mxu0 0.0
  %1618 = vmatpush1.msra.mxu0 %v137
  %1619 = vmatprep.subr.mxu0 0.0
  %1620 = vmatpush1.msra.mxu0 %v138
  %1621 = vmatprep.subr.mxu0 0.0
  %1622 = vmatpush1.msra.mxu0 0.0
  %1623 = vmatprep.subr.mxu0 0.0
  %1624 = vmatpush1.msra.mxu0 0.0
  %1625 = vmatprep.subr.mxu0 0.0
  %1626 = vmatpush1.msra.mxu0 0.0
  %1627 = vmatprep.subr.mxu0 0.0
  %1628 = vmatpush1.msra.mxu0 0.0
  %1629 = vmatprep.subr.mxu0 0.0
  %1630 = vmatpush1.msra.mxu0 0.0
  %1631 = vmatprep.subr.mxu0 0.0
  %1632 = vmatpush1.msra.mxu0 0.0
  %1633 = vmatprep.subr.mxu0 0.0
  %1634 = vmatpush1.msra.mxu0 0.0
  %1635 = vmatprep.subr.mxu0 0.0
  %1636 = vmatpush1.msra.mxu0 0.0
  %1637 = vmatprep.subr.mxu0 0.0
  %1638 = vmatpush1.msra.mxu0 0.0
  %1639 = vmatprep.subr.mxu0 0.0
  %1640 = vmatpush1.msra.mxu0 0.0
  %1641 = vmatprep.subr.mxu0 0.0
  %1642 = vmatpush1.msra.mxu0 0.0
  %1643 = vmatprep.subr.mxu0 0.0
  %1644 = vmatpush1.msra.mxu0 0.0
  %1645 = vmatprep.subr.mxu0 0.0
  %1646 = vmatpush1.msra.mxu0 0.0
  %1647 = vmatprep.subr.mxu0 0.0
  %1648 = vmatpush1.msra.mxu0 0.0
  %1649 = vmatprep.subr.mxu0 0.0
  %1650 = vmatpush1.msra.mxu0 0.0
  %1651 = vmatprep.subr.mxu0 0.0
  %1652 = vmatpush1.msra.mxu0 0.0
  %1653 = vmatprep.subr.mxu0 0.0
  %1654 = vmatpush1.msra.mxu0 0.0
  %1655 = vmatprep.subr.mxu0 0.0
  %1656 = vmatpush1.msra.mxu0 0.0
  %1657 = vmatprep.subr.mxu0 0.0
  %1658 = vmatpush1.msra.mxu0 0.0
  %1659 = vmatprep.subr.mxu0 0.0
  %1660 = vmatpush1.msra.mxu0 0.0
  %1661 = vmatprep.subr.mxu0 0.0
  %1662 = vmatpush1.msra.mxu0 0.0
  %1663 = vmatprep.subr.mxu0 0.0
  %1664 = vmatpush1.msra.mxu0 0.0
  %1665 = vmatprep.subr.mxu0 0.0
  %1666 = vmatpush1.msra.mxu0 0.0
  %1667 = vmatprep.subr.mxu0 0.0
  %1668 = vmatpush1.msra.mxu0 0.0
  %1669 = vmatprep.subr.mxu0 0.0
  %1670 = vmatpush1.msra.mxu0 0.0
  %1671 = vmatprep.subr.mxu0 0.0
  %1672 = vmatpush1.msra.mxu0 0.0
  %1673 = vmatprep.subr.mxu0 0.0
  %1674 = vmatpush1.msra.mxu0 0.0
  %1675 = vmatprep.subr.mxu0 0.0
  %1676 = vmatpush1.msra.mxu0 0.0
  %1677 = vmatprep.mubr.f32.mxu0 0.0
  %1678 = vmatmul.mubr.f32.gmra.mrb[0].mxu0 %v1611
  %v1679 = vpop.f32.mrb[0].mxu0
  %v1680 = vadd.f32 0.0, %v1679
  %v1681 = vpop.f32.mrb[0].mxu0
  %1682 = vdwg.mxu0
  %v1683 = vsel %vm148, %v1604, 0
  %1685 = vmatprep.subr.mxu0 0.0
  %1686 = vmatpush1.msra.mxu0 %v131
  %1687 = vmatprep.subr.mxu0 0.0
  %1688 = vmatpush1.msra.mxu0 %v132
  %1689 = vmatprep.subr.mxu0 0.0
  %1690 = vmatpush1.msra.mxu0 %v133
  %1691 = vmatprep.subr.mxu0 0.0
  %1692 = vmatpush1.msra.mxu0 %v134
  %1693 = vmatprep.subr.mxu0 0.0
  %1694 = vmatpush1.msra.mxu0 0.0
  %1695 = vmatprep.subr.mxu0 0.0
  %1696 = vmatpush1.msra.mxu0 0.0
  %1697 = vmatprep.subr.mxu0 0.0
  %1698 = vmatpush1.msra.mxu0 0.0
  %1699 = vmatprep.subr.mxu0 0.0
  %1700 = vmatpush1.msra.mxu0 0.0
  %1701 = vmatprep.subr.mxu0 0.0
  %1702 = vmatpush1.msra.mxu0 0.0
  %1703 = vmatprep.subr.mxu0 0.0
  %1704 = vmatpush1.msra.mxu0 0.0
  %1705 = vmatprep.subr.mxu0 0.0
  %1706 = vmatpush1.msra.mxu0 0.0
  %1707 = vmatprep.subr.mxu0 0.0
  %1708 = vmatpush1.msra.mxu0 0.0
  %1709 = vmatprep.subr.mxu0 0.0
  %1710 = vmatpush1.msra.mxu0 0.0
  %1711 = vmatprep.subr.mxu0 0.0
  %1712 = vmatpush1.msra.mxu0 0.0
  %1713 = vmatprep.subr.mxu0 0.0
  %1714 = vmatpush1.msra.mxu0 0.0
  %1715 = vmatprep.subr.mxu0 0.0
  %1716 = vmatpush1.msra.mxu0 0.0
  %1717 = vmatprep.subr.mxu0 0.0
  %1718 = vmatpush1.msra.mxu0 0.0
  %1719 = vmatprep.subr.mxu0 0.0
  %1720 = vmatpush1.msra.mxu0 0.0
  %1721 = vmatprep.subr.mxu0 0.0
  %1722 = vmatpush1.msra.mxu0 0.0
  %1723 = vmatprep.subr.mxu0 0.0
  %1724 = vmatpush1.msra.mxu0 0.0
  %1725 = vmatprep.subr.mxu0 0.0
  %1726 = vmatpush1.msra.mxu0 0.0
  %1727 = vmatprep.subr.mxu0 0.0
  %1728 = vmatpush1.msra.mxu0 0.0
  %1729 = vmatprep.subr.mxu0 0.0
  %1730 = vmatpush1.msra.mxu0 0.0
  %1731 = vmatprep.subr.mxu0 0.0
  %1732 = vmatpush1.msra.mxu0 0.0
  %1733 = vmatprep.subr.mxu0 0.0
  %1734 = vmatpush1.msra.mxu0 0.0
  %1735 = vmatprep.subr.mxu0 0.0
  %1736 = vmatpush1.msra.mxu0 0.0
  %1737 = vmatprep.subr.mxu0 0.0
  %1738 = vmatpush1.msra.mxu0 0.0
  %1739 = vmatprep.subr.mxu0 0.0
  %1740 = vmatpush1.msra.mxu0 0.0
  %1741 = vmatprep.subr.mxu0 0.0
  %1742 = vmatpush1.msra.mxu0 0.0
  %1743 = vmatprep.subr.mxu0 0.0
  %1744 = vmatpush1.msra.mxu0 0.0
  %1745 = vmatprep.subr.mxu0 0.0
  %1746 = vmatpush1.msra.mxu0 0.0
  %1747 = vmatprep.subr.mxu0 0.0
  %1748 = vmatpush1.msra.mxu0 0.0
  %1749 = vmatprep.mubr.f32.mxu0 0.0
  %1750 = vmatmul.mubr.f32.gmra.mrb[0].mxu0 %v1683
  %v1751 = vpop.f32.mrb[0].mxu0
  %v1752 = vadd.f32 %v1680, %v1751
  %v1753 = vpop.f32.mrb[0].mxu0
  %1754 = vdwg.mxu0
  %v1755 = vadd.f32 %v1752, %v296
  %v1758 = vunpack.c.l.s4 1966171168
  %v1759 = vunpack.c.0.s8 %v1758
  %v1760 = vlaneseq
  %v1761 = vshrl.u32 %v1760, 7
  %v1762 = vsub.s32 %v1759, %v1761
  %v1763 = vrot.slane %v1755, %v1762
  %v1764 = vcombine.high %v1763, %v1763
  %v1766 = vunpack.c.l.s4 1966171168
  %v1767 = vunpack.c.0.s8 %v1766
  %v1768 = vlaneseq
  %v1769 = vshrl.u32 %v1768, 7
  %v1770 = vsub.s32 %v1767, %v1769
  %v1771 = vrot.slane %v1763, %v1770
  %v1773 = vunpack.c.l.s4 1966171168
  %v1774 = vunpack.c.0.s8 %v1773
  %v1775 = vlaneseq
  %v1776 = vshrl.u32 %v1775, 7
  %v1777 = vsub.s32 %v1774, %v1776
  %v1778 = vrot.slane %v1764, %v1777
  %v1779 = vlaneseq
  %v1780 = vshrl.u32 %v1779, 7
  %v1781 = vsub.s32 0, %v1780
  %v1782 = vrot.slane %v1771, %v1781
  %v1783 = vlaneseq
  %v1784 = vshrl.u32 %v1783, 7
  %v1785 = vsub.s32 0, %v1784
  %v1786 = vrot.slane %v1778, %v1785
  %v1789 = vadd.f32 %v1782, %v125
  %v1790 = vadd.f32 %v1786, %v129
  %v1791 = vtanh.pop %v1789
  %v1792 = vtanh.pop %v1790
  %v1793 = vmul.f32 %v1791, %v340
  %v1794 = vmul.f32 %v1792, %v340
  %v1795 = vsel %vm344, %v1793, 0.0
  %1796 = vadd.xlane.f32.xlu0 %v1795
  %v1797 = vpop.xlane.xlu0 %1796
  %v1798 = vsel %vm344, %v1794, 0.0
  %1799 = vadd.xlane.f32.xlu0 %v1798
  %v1800 = vpop.xlane.xlu0 %1799
  %v1801 = vadd.f32 %v1797, %v358
  %v1802 = vadd.f32 %v1800, %v358
  %v1805 = vlaneseq
  %v1806 = vshrl.u32 %v1805, 7
  %v1807 = vsub.s32 %v365, %v1806
  %v1808 = vrot.slane %v1801, %v1807
  %v1809 = vlaneseq
  %v1810 = vshrl.u32 %v1809, 7
  %v1811 = vsub.s32 %v365, %v1810
  %v1812 = vrot.slane %v1802, %v1811
  %v1813 = vsel %vm374, %v1812, %v1808
  %v1815 = vsel %vm377, %v1813, -inf
  %1816 = vmax.xlane.f32.xlu0 %v1815
  %v1817 = vpop.xlane.xlu0 %1816
  %v1819 = vlaneseq
  %v1820 = vshrl.u32 %v1819, 7
  %v1821 = vsub.s32 0, %v1820
  %v1822 = vrot.slane %v1817, %v1821
  %v1823 = vlaneseq
  %v1824 = vshrl.u32 %v1823, 7
  %v1825 = vsub.s32 1, %v1824
  %v1826 = vrot.slane %v1817, %v1825
  %v1829 = vsub.f32 %v1801, %v1822
  %v1830 = vsub.f32 %v1802, %v1826
  %v1831 = vmul.f32 %v1829, 1.442695
  %v1832 = vpow.pop %v1831
  %v1833 = vmul.f32 %v1830, 1.442695
  %v1834 = vpow.pop %v1833
  %1837 = vset.pattern.permute.xlu0 0
  %1838 = vperm.xlu0 %1837, %v1832
  %v1839 = vpop.permute.xlu0 %1838
  %1840 = vset.pattern.permute.xlu0 0
  %1841 = vperm.xlu0 %1840, %v1834
  %v1842 = vpop.permute.xlu0 %1841
  %v1843 = vlaneseq
  %v1844 = vshrl.u32 %v1843, 7
  %v1845 = vsub.s32 %v365, %v1844
  %v1846 = vrot.slane %v1839, %v1845
  %v1847 = vlaneseq
  %v1848 = vshrl.u32 %v1847, 7
  %v1849 = vsub.s32 %v365, %v1848
  %v1850 = vrot.slane %v1842, %v1849
  %v1851 = vsel %vm374, %v1850, %v1846
  %v1853 = vsel %vm377, %v1851, 0.0
  %1854 = vadd.xlane.f32.xlu0 %v1853
  %v1855 = vpop.xlane.xlu0 %1854
  %v1856 = vrcp.pop %v1855
  %v1858 = vlaneseq
  %v1859 = vshrl.u32 %v1858, 7
  %v1860 = vsub.s32 0, %v1859
  %v1861 = vrot.slane %v1856, %v1860
  %v1862 = vlaneseq
  %v1863 = vshrl.u32 %v1862, 7
  %v1864 = vsub.s32 1, %v1863
  %v1865 = vrot.slane %v1856, %v1864
  %v1868 = vmul.f32 %v1832, %v1861
  %v1869 = vmul.f32 %v1834, %v1865
  %s1870 = scalar_lea.vmem %s1, 6
  %v1871 = vld [vmem:[%s1870] sm:$0x3]
  %v1873 = vlaneseq
  %v1874 = vshrl.u32 %v1873, 7
  %v1875 = vsub.s32 0, %v1874
  %v1876 = vrot.slane %v1871, %v1875
  %1878 = vbcast.lane.b32.xlu0 %v1876, 256
  %v1879 = vpop.permute.xlu0 %1878
  %v1880 = vlaneseq
  %v1881 = vshrl.u32 %v1880, 7
  %v1882 = vsub.s32 1, %v1881
  %v1883 = vrot.slane %v1871, %v1882
  %1885 = vbcast.lane.b32.xlu0 %v1883, 256
  %v1886 = vpop.permute.xlu0 %1885
  %v1889 = vmul.f32 %v1868, %v1879
  %v1890 = vmul.f32 %v1869, %v1886
  %1891 = vmatprep.subr.mxu0 0.0
  %1892 = vmatpush1.msra.mxu0 %v143
  %1893 = vmatprep.subr.mxu0 0.0
  %1894 = vmatpush1.msra.mxu0 %v144
  %1895 = vmatprep.subr.mxu0 0.0
  %1896 = vmatpush1.msra.mxu0 %v145
  %1897 = vmatprep.subr.mxu0 0.0
  %1898 = vmatpush1.msra.mxu0 %v146
  %1899 = vmatprep.subr.mxu0 0.0
  %1900 = vmatpush1.msra.mxu0 0.0
  %1901 = vmatprep.subr.mxu0 0.0
  %1902 = vmatpush1.msra.mxu0 0.0
  %1903 = vmatprep.subr.mxu0 0.0
  %1904 = vmatpush1.msra.mxu0 0.0
  %1905 = vmatprep.subr.mxu0 0.0
  %1906 = vmatpush1.msra.mxu0 0.0
  %1907 = vmatprep.subr.mxu0 0.0
  %1908 = vmatpush1.msra.mxu0 0.0
  %1909 = vmatprep.subr.mxu0 0.0
  %1910 = vmatpush1.msra.mxu0 0.0
  %1911 = vmatprep.subr.mxu0 0.0
  %1912 = vmatpush1.msra.mxu0 0.0
  %1913 = vmatprep.subr.mxu0 0.0
  %1914 = vmatpush1.msra.mxu0 0.0
  %1915 = vmatprep.subr.mxu0 0.0
  %1916 = vmatpush1.msra.mxu0 0.0
  %1917 = vmatprep.subr.mxu0 0.0
  %1918 = vmatpush1.msra.mxu0 0.0
  %1919 = vmatprep.subr.mxu0 0.0
  %1920 = vmatpush1.msra.mxu0 0.0
  %1921 = vmatprep.subr.mxu0 0.0
  %1922 = vmatpush1.msra.mxu0 0.0
  %1923 = vmatprep.subr.mxu0 0.0
  %1924 = vmatpush1.msra.mxu0 0.0
  %1925 = vmatprep.subr.mxu0 0.0
  %1926 = vmatpush1.msra.mxu0 0.0
  %1927 = vmatprep.subr.mxu0 0.0
  %1928 = vmatpush1.msra.mxu0 0.0
  %1929 = vmatprep.subr.mxu0 0.0
  %1930 = vmatpush1.msra.mxu0 0.0
  %1931 = vmatprep.subr.mxu0 0.0
  %1932 = vmatpush1.msra.mxu0 0.0
  %1933 = vmatprep.subr.mxu0 0.0
  %1934 = vmatpush1.msra.mxu0 0.0
  %1935 = vmatprep.subr.mxu0 0.0
  %1936 = vmatpush1.msra.mxu0 0.0
  %1937 = vmatprep.subr.mxu0 0.0
  %1938 = vmatpush1.msra.mxu0 0.0
  %1939 = vmatprep.subr.mxu0 0.0
  %1940 = vmatpush1.msra.mxu0 0.0
  %1941 = vmatprep.subr.mxu0 0.0
  %1942 = vmatpush1.msra.mxu0 0.0
  %1943 = vmatprep.subr.mxu0 0.0
  %1944 = vmatpush1.msra.mxu0 0.0
  %1945 = vmatprep.subr.mxu0 0.0
  %1946 = vmatpush1.msra.mxu0 0.0
  %1947 = vmatprep.subr.mxu0 0.0
  %1948 = vmatpush1.msra.mxu0 0.0
  %1949 = vmatprep.subr.mxu0 0.0
  %1950 = vmatpush1.msra.mxu0 0.0
  %1951 = vmatprep.subr.mxu0 0.0
  %1952 = vmatpush1.msra.mxu0 0.0
  %1953 = vmatprep.subr.mxu0 0.0
  %1954 = vmatpush1.msra.mxu0 0.0
  %1955 = vmatprep.mubr.f32.mxu0 0.0
  %1956 = vmatmul.mubr.f32.gmra.mrb[0].mxu0 %v1683
  %v1957 = vpop.f32.mrb[0].mxu0
  %v1958 = vadd.f32 0.0, %v1957
  %v1959 = vpop.f32.mrb[0].mxu0
  %1960 = vdwg.mxu0
  %1963 = vset.pattern.permute.xlu0 0
  %1964 = vperm.xlu0 %1963, %v1889
  %v1965 = vpop.permute.xlu0 %1964
  %1966 = vset.pattern.permute.xlu0 0
  %1967 = vperm.xlu0 %1966, %v1890
  %v1968 = vpop.permute.xlu0 %1967
  %v1969 = vlaneseq
  %v1970 = vshrl.u32 %v1969, 7
  %v1971 = vsub.s32 %v365, %v1970
  %v1972 = vrot.slane %v1965, %v1971
  %v1973 = vlaneseq
  %v1974 = vshrl.u32 %v1973, 7
  %v1975 = vsub.s32 %v365, %v1974
  %v1976 = vrot.slane %v1968, %v1975
  %v1977 = vsel %vm374, %v1976, %v1972
  %v1978 = vsel %vm540, %v1977, 0
  %1980 = vmatprep.subr.mxu0 0.0
  %1981 = vmatpush1.msra.mxu0 %v545
  %1982 = vmatprep.subr.mxu0 0.0
  %1983 = vmatpush1.msra.mxu0 0.0
  %1984 = vmatprep.subr.mxu0 0.0
  %1985 = vmatpush1.msra.mxu0 0.0
  %1986 = vmatprep.subr.mxu0 0.0
  %1987 = vmatpush1.msra.mxu0 0.0
  %1988 = vmatprep.subr.mxu0 0.0
  %1989 = vmatpush1.msra.mxu0 0.0
  %1990 = vmatprep.subr.mxu0 0.0
  %1991 = vmatpush1.msra.mxu0 0.0
  %1992 = vmatprep.subr.mxu0 0.0
  %1993 = vmatpush1.msra.mxu0 0.0
  %1994 = vmatprep.subr.mxu0 0.0
  %1995 = vmatpush1.msra.mxu0 0.0
  %1996 = vmatprep.subr.mxu0 0.0
  %1997 = vmatpush1.msra.mxu0 0.0
  %1998 = vmatprep.subr.mxu0 0.0
  %1999 = vmatpush1.msra.mxu0 0.0
  %2000 = vmatprep.subr.mxu0 0.0
  %2001 = vmatpush1.msra.mxu0 0.0
  %2002 = vmatprep.subr.mxu0 0.0
  %2003 = vmatpush1.msra.mxu0 0.0
  %2004 = vmatprep.subr.mxu0 0.0
  %2005 = vmatpush1.msra.mxu0 0.0
  %2006 = vmatprep.subr.mxu0 0.0
  %2007 = vmatpush1.msra.mxu0 0.0
  %2008 = vmatprep.subr.mxu0 0.0
  %2009 = vmatpush1.msra.mxu0 0.0
  %2010 = vmatprep.subr.mxu0 0.0
  %2011 = vmatpush1.msra.mxu0 0.0
  %2012 = vmatprep.subr.mxu0 0.0
  %2013 = vmatpush1.msra.mxu0 0.0
  %2014 = vmatprep.subr.mxu0 0.0
  %2015 = vmatpush1.msra.mxu0 0.0
  %2016 = vmatprep.subr.mxu0 0.0
  %2017 = vmatpush1.msra.mxu0 0.0
  %2018 = vmatprep.subr.mxu0 0.0
  %2019 = vmatpush1.msra.mxu0 0.0
  %2020 = vmatprep.subr.mxu0 0.0
  %2021 = vmatpush1.msra.mxu0 0.0
  %2022 = vmatprep.subr.mxu0 0.0
  %2023 = vmatpush1.msra.mxu0 0.0
  %2024 = vmatprep.subr.mxu0 0.0
  %2025 = vmatpush1.msra.mxu0 0.0
  %2026 = vmatprep.subr.mxu0 0.0
  %2027 = vmatpush1.msra.mxu0 0.0
  %2028 = vmatprep.subr.mxu0 0.0
  %2029 = vmatpush1.msra.mxu0 0.0
  %2030 = vmatprep.subr.mxu0 0.0
  %2031 = vmatpush1.msra.mxu0 0.0
  %2032 = vmatprep.subr.mxu0 0.0
  %2033 = vmatpush1.msra.mxu0 0.0
  %2034 = vmatprep.subr.mxu0 0.0
  %2035 = vmatpush1.msra.mxu0 0.0
  %2036 = vmatprep.subr.mxu0 0.0
  %2037 = vmatpush1.msra.mxu0 0.0
  %2038 = vmatprep.subr.mxu0 0.0
  %2039 = vmatpush1.msra.mxu0 0.0
  %2040 = vmatprep.subr.mxu0 0.0
  %2041 = vmatpush1.msra.mxu0 0.0
  %2042 = vmatprep.subr.mxu0 0.0
  %2043 = vmatpush1.msra.mxu0 0.0
  %2044 = vmatprep.mubr.f32.mxu0 0.0
  %2045 = vmatmul.mubr.f32.gmra.mrb[0].mxu0 %v1978
  %v2046 = vpop.f32.mrb[0].mxu0
  %v2047 = vadd.f32 %v1958, %v2046
  %v2048 = vpop.f32.mrb[0].mxu0
  %2049 = vdwg.mxu0
  %v2050 = vadd.f32 %v2047, %v621
  %v2051 = vxor.u32 %v2050, 2147483648
  %v2052 = vmul.f32 %v2051, 1.442695
  %v2053 = vpow.pop %v2052
  %v2054 = vadd.f32 %v2053, 1.0
  %v2055 = vrcp.pop %v2054
  %v2056 = vmul.f32 1.0, %v2055
  %v2057 = vtanh.pop %v2050
  %v2058 = vmul.f32 %v2056, %v1592
  %2060 = vrot.lane.b32.xlu0 %v2057, 64
  %v2061 = vpop.permute.xlu0 %2060
  %v2063 = vmul.f32 %v2056, %v2061
  %2065 = vrot.lane.b32.xlu0 %v2063, 32
  %v2066 = vpop.permute.xlu0 %2065
  %v2068 = vadd.f32 %v2058, %v2066
  %v2069 = vtanh.pop %v2068
  %2071 = vrot.lane.b32.xlu0 %v2069, 64
  %v2072 = vpop.permute.xlu0 %2071
  %v2074 = vmul.f32 %v2056, %v2072
  %s2076 = scalar_lea.vmem %s12, 6
  %2077 = vst.msk [vmem:[%s2076] sm:$0x3] %vm377, %v1977
  %2079 = vrot.lane.b32.xlu0 %v2074, 32
  %v2080 = vpop.permute.xlu0 %2079
  %s2082 = scalar_lea.vmem %s13, 6
  %2083 = vst.msk [vmem:[%s2082] sm:$0x3] %vm654, %v2080
  %2085 = vrot.lane.b32.xlu0 %v2068, 96
  %v2086 = vpop.permute.xlu0 %2085
  %v2087 = vsel %vm148, %v2086, 0
  %2089 = vmatprep.subr.mxu0 0.0
  %2090 = vmatpush1.msra.mxu0 %v135
  %2091 = vmatprep.subr.mxu0 0.0
  %2092 = vmatpush1.msra.mxu0 %v136
  %2093 = vmatprep.subr.mxu0 0.0
  %2094 = vmatpush1.msra.mxu0 %v137
  %2095 = vmatprep.subr.mxu0 0.0
  %2096 = vmatpush1.msra.mxu0 %v138
  %2097 = vmatprep.subr.mxu0 0.0
  %2098 = vmatpush1.msra.mxu0 0.0
  %2099 = vmatprep.subr.mxu0 0.0
  %2100 = vmatpush1.msra.mxu0 0.0
  %2101 = vmatprep.subr.mxu0 0.0
  %2102 = vmatpush1.msra.mxu0 0.0
  %2103 = vmatprep.subr.mxu0 0.0
  %2104 = vmatpush1.msra.mxu0 0.0
  %2105 = vmatprep.subr.mxu0 0.0
  %2106 = vmatpush1.msra.mxu0 0.0
  %2107 = vmatprep.subr.mxu0 0.0
  %2108 = vmatpush1.msra.mxu0 0.0
  %2109 = vmatprep.subr.mxu0 0.0
  %2110 = vmatpush1.msra.mxu0 0.0
  %2111 = vmatprep.subr.mxu0 0.0
  %2112 = vmatpush1.msra.mxu0 0.0
  %2113 = vmatprep.subr.mxu0 0.0
  %2114 = vmatpush1.msra.mxu0 0.0
  %2115 = vmatprep.subr.mxu0 0.0
  %2116 = vmatpush1.msra.mxu0 0.0
  %2117 = vmatprep.subr.mxu0 0.0
  %2118 = vmatpush1.msra.mxu0 0.0
  %2119 = vmatprep.subr.mxu0 0.0
  %2120 = vmatpush1.msra.mxu0 0.0
  %2121 = vmatprep.subr.mxu0 0.0
  %2122 = vmatpush1.msra.mxu0 0.0
  %2123 = vmatprep.subr.mxu0 0.0
  %2124 = vmatpush1.msra.mxu0 0.0
  %2125 = vmatprep.subr.mxu0 0.0
  %2126 = vmatpush1.msra.mxu0 0.0
  %2127 = vmatprep.subr.mxu0 0.0
  %2128 = vmatpush1.msra.mxu0 0.0
  %2129 = vmatprep.subr.mxu0 0.0
  %2130 = vmatpush1.msra.mxu0 0.0
  %2131 = vmatprep.subr.mxu0 0.0
  %2132 = vmatpush1.msra.mxu0 0.0
  %2133 = vmatprep.subr.mxu0 0.0
  %2134 = vmatpush1.msra.mxu0 0.0
  %2135 = vmatprep.subr.mxu0 0.0
  %2136 = vmatpush1.msra.mxu0 0.0
  %2137 = vmatprep.subr.mxu0 0.0
  %2138 = vmatpush1.msra.mxu0 0.0
  %2139 = vmatprep.subr.mxu0 0.0
  %2140 = vmatpush1.msra.mxu0 0.0
  %2141 = vmatprep.subr.mxu0 0.0
  %2142 = vmatpush1.msra.mxu0 0.0
  %2143 = vmatprep.subr.mxu0 0.0
  %2144 = vmatpush1.msra.mxu0 0.0
  %2145 = vmatprep.subr.mxu0 0.0
  %2146 = vmatpush1.msra.mxu0 0.0
  %2147 = vmatprep.subr.mxu0 0.0
  %2148 = vmatpush1.msra.mxu0 0.0
  %2149 = vmatprep.subr.mxu0 0.0
  %2150 = vmatpush1.msra.mxu0 0.0
  %2151 = vmatprep.subr.mxu0 0.0
  %2152 = vmatpush1.msra.mxu0 0.0
  %2153 = vmatprep.mubr.f32.mxu0 0.0
  %2154 = vmatmul.mubr.f32.gmra.mrb[0].mxu0 %v2087
  %v2155 = vpop.f32.mrb[0].mxu0
  %v2156 = vadd.f32 0.0, %v2155
  %v2157 = vpop.f32.mrb[0].mxu0
  %2158 = vdwg.mxu0
  %v2159 = vsel %vm148, %v2080, 0
  %2161 = vmatprep.subr.mxu0 0.0
  %2162 = vmatpush1.msra.mxu0 %v131
  %2163 = vmatprep.subr.mxu0 0.0
  %2164 = vmatpush1.msra.mxu0 %v132
  %2165 = vmatprep.subr.mxu0 0.0
  %2166 = vmatpush1.msra.mxu0 %v133
  %2167 = vmatprep.subr.mxu0 0.0
  %2168 = vmatpush1.msra.mxu0 %v134
  %2169 = vmatprep.subr.mxu0 0.0
  %2170 = vmatpush1.msra.mxu0 0.0
  %2171 = vmatprep.subr.mxu0 0.0
  %2172 = vmatpush1.msra.mxu0 0.0
  %2173 = vmatprep.subr.mxu0 0.0
  %2174 = vmatpush1.msra.mxu0 0.0
  %2175 = vmatprep.subr.mxu0 0.0
  %2176 = vmatpush1.msra.mxu0 0.0
  %2177 = vmatprep.subr.mxu0 0.0
  %2178 = vmatpush1.msra.mxu0 0.0
  %2179 = vmatprep.subr.mxu0 0.0
  %2180 = vmatpush1.msra.mxu0 0.0
  %2181 = vmatprep.subr.mxu0 0.0
  %2182 = vmatpush1.msra.mxu0 0.0
  %2183 = vmatprep.subr.mxu0 0.0
  %2184 = vmatpush1.msra.mxu0 0.0
  %2185 = vmatprep.subr.mxu0 0.0
  %2186 = vmatpush1.msra.mxu0 0.0
  %2187 = vmatprep.subr.mxu0 0.0
  %2188 = vmatpush1.msra.mxu0 0.0
  %2189 = vmatprep.subr.mxu0 0.0
  %2190 = vmatpush1.msra.mxu0 0.0
  %2191 = vmatprep.subr.mxu0 0.0
  %2192 = vmatpush1.msra.mxu0 0.0
  %2193 = vmatprep.subr.mxu0 0.0
  %2194 = vmatpush1.msra.mxu0 0.0
  %2195 = vmatprep.subr.mxu0 0.0
  %2196 = vmatpush1.msra.mxu0 0.0
  %2197 = vmatprep.subr.mxu0 0.0
  %2198 = vmatpush1.msra.mxu0 0.0
  %2199 = vmatprep.subr.mxu0 0.0
  %2200 = vmatpush1.msra.mxu0 0.0
  %2201 = vmatprep.subr.mxu0 0.0
  %2202 = vmatpush1.msra.mxu0 0.0
  %2203 = vmatprep.subr.mxu0 0.0
  %2204 = vmatpush1.msra.mxu0 0.0
  %2205 = vmatprep.subr.mxu0 0.0
  %2206 = vmatpush1.msra.mxu0 0.0
  %2207 = vmatprep.subr.mxu0 0.0
  %2208 = vmatpush1.msra.mxu0 0.0
  %2209 = vmatprep.subr.mxu0 0.0
  %2210 = vmatpush1.msra.mxu0 0.0
  %2211 = vmatprep.subr.mxu0 0.0
  %2212 = vmatpush1.msra.mxu0 0.0
  %2213 = vmatprep.subr.mxu0 0.0
  %2214 = vmatpush1.msra.mxu0 0.0
  %2215 = vmatprep.subr.mxu0 0.0
  %2216 = vmatpush1.msra.mxu0 0.0
  %2217 = vmatprep.subr.mxu0 0.0
  %2218 = vmatpush1.msra.mxu0 0.0
  %2219 = vmatprep.subr.mxu0 0.0
  %2220 = vmatpush1.msra.mxu0 0.0
  %2221 = vmatprep.subr.mxu0 0.0
  %2222 = vmatpush1.msra.mxu0 0.0
  %2223 = vmatprep.subr.mxu0 0.0
  %2224 = vmatpush1.msra.mxu0 0.0
  %2225 = vmatprep.mubr.f32.mxu0 0.0
  %2226 = vmatmul.mubr.f32.gmra.mrb[0].mxu0 %v2159
  %v2227 = vpop.f32.mrb[0].mxu0
  %v2228 = vadd.f32 %v2156, %v2227
  %v2229 = vpop.f32.mrb[0].mxu0
  %2230 = vdwg.mxu0
  %v2231 = vadd.f32 %v2228, %v296
  %v2234 = vunpack.c.l.s4 1966171168
  %v2235 = vunpack.c.0.s8 %v2234
  %v2236 = vlaneseq
  %v2237 = vshrl.u32 %v2236, 7
  %v2238 = vsub.s32 %v2235, %v2237
  %v2239 = vrot.slane %v2231, %v2238
  %v2240 = vcombine.high %v2239, %v2239
  %v2242 = vunpack.c.l.s4 1966171168
  %v2243 = vunpack.c.0.s8 %v2242
  %v2244 = vlaneseq
  %v2245 = vshrl.u32 %v2244, 7
  %v2246 = vsub.s32 %v2243, %v2245
  %v2247 = vrot.slane %v2239, %v2246
  %v2249 = vunpack.c.l.s4 1966171168
  %v2250 = vunpack.c.0.s8 %v2249
  %v2251 = vlaneseq
  %v2252 = vshrl.u32 %v2251, 7
  %v2253 = vsub.s32 %v2250, %v2252
  %v2254 = vrot.slane %v2240, %v2253
  %v2255 = vlaneseq
  %v2256 = vshrl.u32 %v2255, 7
  %v2257 = vsub.s32 0, %v2256
  %v2258 = vrot.slane %v2247, %v2257
  %v2259 = vlaneseq
  %v2260 = vshrl.u32 %v2259, 7
  %v2261 = vsub.s32 0, %v2260
  %v2262 = vrot.slane %v2254, %v2261
  %v2265 = vadd.f32 %v2258, %v125
  %v2266 = vadd.f32 %v2262, %v129
  %v2267 = vtanh.pop %v2265
  %v2268 = vtanh.pop %v2266
  %v2269 = vmul.f32 %v2267, %v340
  %v2270 = vmul.f32 %v2268, %v340
  %v2271 = vsel %vm344, %v2269, 0.0
  %2272 = vadd.xlane.f32.xlu0 %v2271
  %v2273 = vpop.xlane.xlu0 %2272
  %v2274 = vsel %vm344, %v2270, 0.0
  %2275 = vadd.xlane.f32.xlu0 %v2274
  %v2276 = vpop.xlane.xlu0 %2275
  %v2277 = vadd.f32 %v2273, %v358
  %v2278 = vadd.f32 %v2276, %v358
  %v2281 = vlaneseq
  %v2282 = vshrl.u32 %v2281, 7
  %v2283 = vsub.s32 %v365, %v2282
  %v2284 = vrot.slane %v2277, %v2283
  %v2285 = vlaneseq
  %v2286 = vshrl.u32 %v2285, 7
  %v2287 = vsub.s32 %v365, %v2286
  %v2288 = vrot.slane %v2278, %v2287
  %v2289 = vsel %vm374, %v2288, %v2284
  %v2291 = vsel %vm377, %v2289, -inf
  %2292 = vmax.xlane.f32.xlu0 %v2291
  %v2293 = vpop.xlane.xlu0 %2292
  %v2295 = vlaneseq
  %v2296 = vshrl.u32 %v2295, 7
  %v2297 = vsub.s32 0, %v2296
  %v2298 = vrot.slane %v2293, %v2297
  %v2299 = vlaneseq
  %v2300 = vshrl.u32 %v2299, 7
  %v2301 = vsub.s32 1, %v2300
  %v2302 = vrot.slane %v2293, %v2301
  %v2305 = vsub.f32 %v2277, %v2298
  %v2306 = vsub.f32 %v2278, %v2302
  %v2307 = vmul.f32 %v2305, 1.442695
  %v2308 = vpow.pop %v2307
  %v2309 = vmul.f32 %v2306, 1.442695
  %v2310 = vpow.pop %v2309
  %2313 = vset.pattern.permute.xlu0 0
  %2314 = vperm.xlu0 %2313, %v2308
  %v2315 = vpop.permute.xlu0 %2314
  %2316 = vset.pattern.permute.xlu0 0
  %2317 = vperm.xlu0 %2316, %v2310
  %v2318 = vpop.permute.xlu0 %2317
  %v2319 = vlaneseq
  %v2320 = vshrl.u32 %v2319, 7
  %v2321 = vsub.s32 %v365, %v2320
  %v2322 = vrot.slane %v2315, %v2321
  %v2323 = vlaneseq
  %v2324 = vshrl.u32 %v2323, 7
  %v2325 = vsub.s32 %v365, %v2324
  %v2326 = vrot.slane %v2318, %v2325
  %v2327 = vsel %vm374, %v2326, %v2322
  %v2329 = vsel %vm377, %v2327, 0.0
  %2330 = vadd.xlane.f32.xlu0 %v2329
  %v2331 = vpop.xlane.xlu0 %2330
  %v2332 = vrcp.pop %v2331
  %v2334 = vlaneseq
  %v2335 = vshrl.u32 %v2334, 7
  %v2336 = vsub.s32 0, %v2335
  %v2337 = vrot.slane %v2332, %v2336
  %v2338 = vlaneseq
  %v2339 = vshrl.u32 %v2338, 7
  %v2340 = vsub.s32 1, %v2339
  %v2341 = vrot.slane %v2332, %v2340
  %v2344 = vmul.f32 %v2308, %v2337
  %v2345 = vmul.f32 %v2310, %v2341
  %s2346 = scalar_lea.vmem %s1, 8
  %v2347 = vld [vmem:[%s2346] sm:$0x3]
  %v2349 = vlaneseq
  %v2350 = vshrl.u32 %v2349, 7
  %v2351 = vsub.s32 0, %v2350
  %v2352 = vrot.slane %v2347, %v2351
  %2354 = vbcast.lane.b32.xlu0 %v2352, 256
  %v2355 = vpop.permute.xlu0 %2354
  %v2356 = vlaneseq
  %v2357 = vshrl.u32 %v2356, 7
  %v2358 = vsub.s32 1, %v2357
  %v2359 = vrot.slane %v2347, %v2358
  %2361 = vbcast.lane.b32.xlu0 %v2359, 256
  %v2362 = vpop.permute.xlu0 %2361
  %v2365 = vmul.f32 %v2344, %v2355
  %v2366 = vmul.f32 %v2345, %v2362
  %2367 = vmatprep.subr.mxu0 0.0
  %2368 = vmatpush1.msra.mxu0 %v143
  %2369 = vmatprep.subr.mxu0 0.0
  %2370 = vmatpush1.msra.mxu0 %v144
  %2371 = vmatprep.subr.mxu0 0.0
  %2372 = vmatpush1.msra.mxu0 %v145
  %2373 = vmatprep.subr.mxu0 0.0
  %2374 = vmatpush1.msra.mxu0 %v146
  %2375 = vmatprep.subr.mxu0 0.0
  %2376 = vmatpush1.msra.mxu0 0.0
  %2377 = vmatprep.subr.mxu0 0.0
  %2378 = vmatpush1.msra.mxu0 0.0
  %2379 = vmatprep.subr.mxu0 0.0
  %2380 = vmatpush1.msra.mxu0 0.0
  %2381 = vmatprep.subr.mxu0 0.0
  %2382 = vmatpush1.msra.mxu0 0.0
  %2383 = vmatprep.subr.mxu0 0.0
  %2384 = vmatpush1.msra.mxu0 0.0
  %2385 = vmatprep.subr.mxu0 0.0
  %2386 = vmatpush1.msra.mxu0 0.0
  %2387 = vmatprep.subr.mxu0 0.0
  %2388 = vmatpush1.msra.mxu0 0.0
  %2389 = vmatprep.subr.mxu0 0.0
  %2390 = vmatpush1.msra.mxu0 0.0
  %2391 = vmatprep.subr.mxu0 0.0
  %2392 = vmatpush1.msra.mxu0 0.0
  %2393 = vmatprep.subr.mxu0 0.0
  %2394 = vmatpush1.msra.mxu0 0.0
  %2395 = vmatprep.subr.mxu0 0.0
  %2396 = vmatpush1.msra.mxu0 0.0
  %2397 = vmatprep.subr.mxu0 0.0
  %2398 = vmatpush1.msra.mxu0 0.0
  %2399 = vmatprep.subr.mxu0 0.0
  %2400 = vmatpush1.msra.mxu0 0.0
  %2401 = vmatprep.subr.mxu0 0.0
  %2402 = vmatpush1.msra.mxu0 0.0
  %2403 = vmatprep.subr.mxu0 0.0
  %2404 = vmatpush1.msra.mxu0 0.0
  %2405 = vmatprep.subr.mxu0 0.0
  %2406 = vmatpush1.msra.mxu0 0.0
  %2407 = vmatprep.subr.mxu0 0.0
  %2408 = vmatpush1.msra.mxu0 0.0
  %2409 = vmatprep.subr.mxu0 0.0
  %2410 = vmatpush1.msra.mxu0 0.0
  %2411 = vmatprep.subr.mxu0 0.0
  %2412 = vmatpush1.msra.mxu0 0.0
  %2413 = vmatprep.subr.mxu0 0.0
  %2414 = vmatpush1.msra.mxu0 0.0
  %2415 = vmatprep.subr.mxu0 0.0
  %2416 = vmatpush1.msra.mxu0 0.0
  %2417 = vmatprep.subr.mxu0 0.0
  %2418 = vmatpush1.msra.mxu0 0.0
  %2419 = vmatprep.subr.mxu0 0.0
  %2420 = vmatpush1.msra.mxu0 0.0
  %2421 = vmatprep.subr.mxu0 0.0
  %2422 = vmatpush1.msra.mxu0 0.0
  %2423 = vmatprep.subr.mxu0 0.0
  %2424 = vmatpush1.msra.mxu0 0.0
  %2425 = vmatprep.subr.mxu0 0.0
  %2426 = vmatpush1.msra.mxu0 0.0
  %2427 = vmatprep.subr.mxu0 0.0
  %2428 = vmatpush1.msra.mxu0 0.0
  %2429 = vmatprep.subr.mxu0 0.0
  %2430 = vmatpush1.msra.mxu0 0.0
  %2431 = vmatprep.mubr.f32.mxu0 0.0
  %2432 = vmatmul.mubr.f32.gmra.mrb[0].mxu0 %v2159
  %v2433 = vpop.f32.mrb[0].mxu0
  %v2434 = vadd.f32 0.0, %v2433
  %v2435 = vpop.f32.mrb[0].mxu0
  %2436 = vdwg.mxu0
  %2439 = vset.pattern.permute.xlu0 0
  %2440 = vperm.xlu0 %2439, %v2365
  %v2441 = vpop.permute.xlu0 %2440
  %2442 = vset.pattern.permute.xlu0 0
  %2443 = vperm.xlu0 %2442, %v2366
  %v2444 = vpop.permute.xlu0 %2443
  %v2445 = vlaneseq
  %v2446 = vshrl.u32 %v2445, 7
  %v2447 = vsub.s32 %v365, %v2446
  %v2448 = vrot.slane %v2441, %v2447
  %v2449 = vlaneseq
  %v2450 = vshrl.u32 %v2449, 7
  %v2451 = vsub.s32 %v365, %v2450
  %v2452 = vrot.slane %v2444, %v2451
  %v2453 = vsel %vm374, %v2452, %v2448
  %v2454 = vsel %vm540, %v2453, 0
  %2456 = vmatprep.subr.mxu0 0.0
  %2457 = vmatpush1.msra.mxu0 %v545
  %2458 = vmatprep.subr.mxu0 0.0
  %2459 = vmatpush1.msra.mxu0 0.0
  %2460 = vmatprep.subr.mxu0 0.0
  %2461 = vmatpush1.msra.mxu0 0.0
  %2462 = vmatprep.subr.mxu0 0.0
  %2463 = vmatpush1.msra.mxu0 0.0
  %2464 = vmatprep.subr.mxu0 0.0
  %2465 = vmatpush1.msra.mxu0 0.0
  %2466 = vmatprep.subr.mxu0 0.0
  %2467 = vmatpush1.msra.mxu0 0.0
  %2468 = vmatprep.subr.mxu0 0.0
  %2469 = vmatpush1.msra.mxu0 0.0
  %2470 = vmatprep.subr.mxu0 0.0
  %2471 = vmatpush1.msra.mxu0 0.0
  %2472 = vmatprep.subr.mxu0 0.0
  %2473 = vmatpush1.msra.mxu0 0.0
  %2474 = vmatprep.subr.mxu0 0.0
  %2475 = vmatpush1.msra.mxu0 0.0
  %2476 = vmatprep.subr.mxu0 0.0
  %2477 = vmatpush1.msra.mxu0 0.0
  %2478 = vmatprep.subr.mxu0 0.0
  %2479 = vmatpush1.msra.mxu0 0.0
  %2480 = vmatprep.subr.mxu0 0.0
  %2481 = vmatpush1.msra.mxu0 0.0
  %2482 = vmatprep.subr.mxu0 0.0
  %2483 = vmatpush1.msra.mxu0 0.0
  %2484 = vmatprep.subr.mxu0 0.0
  %2485 = vmatpush1.msra.mxu0 0.0
  %2486 = vmatprep.subr.mxu0 0.0
  %2487 = vmatpush1.msra.mxu0 0.0
  %2488 = vmatprep.subr.mxu0 0.0
  %2489 = vmatpush1.msra.mxu0 0.0
  %2490 = vmatprep.subr.mxu0 0.0
  %2491 = vmatpush1.msra.mxu0 0.0
  %2492 = vmatprep.subr.mxu0 0.0
  %2493 = vmatpush1.msra.mxu0 0.0
  %2494 = vmatprep.subr.mxu0 0.0
  %2495 = vmatpush1.msra.mxu0 0.0
  %2496 = vmatprep.subr.mxu0 0.0
  %2497 = vmatpush1.msra.mxu0 0.0
  %2498 = vmatprep.subr.mxu0 0.0
  %2499 = vmatpush1.msra.mxu0 0.0
  %2500 = vmatprep.subr.mxu0 0.0
  %2501 = vmatpush1.msra.mxu0 0.0
  %2502 = vmatprep.subr.mxu0 0.0
  %2503 = vmatpush1.msra.mxu0 0.0
  %2504 = vmatprep.subr.mxu0 0.0
  %2505 = vmatpush1.msra.mxu0 0.0
  %2506 = vmatprep.subr.mxu0 0.0
  %2507 = vmatpush1.msra.mxu0 0.0
  %2508 = vmatprep.subr.mxu0 0.0
  %2509 = vmatpush1.msra.mxu0 0.0
  %2510 = vmatprep.subr.mxu0 0.0
  %2511 = vmatpush1.msra.mxu0 0.0
  %2512 = vmatprep.subr.mxu0 0.0
  %2513 = vmatpush1.msra.mxu0 0.0
  %2514 = vmatprep.subr.mxu0 0.0
  %2515 = vmatpush1.msra.mxu0 0.0
  %2516 = vmatprep.subr.mxu0 0.0
  %2517 = vmatpush1.msra.mxu0 0.0
  %2518 = vmatprep.subr.mxu0 0.0
  %2519 = vmatpush1.msra.mxu0 0.0
  %2520 = vmatprep.mubr.f32.mxu0 0.0
  %2521 = vmatmul.mubr.f32.gmra.mrb[0].mxu0 %v2454
  %v2522 = vpop.f32.mrb[0].mxu0
  %v2523 = vadd.f32 %v2434, %v2522
  %v2524 = vpop.f32.mrb[0].mxu0
  %2525 = vdwg.mxu0
  %v2526 = vadd.f32 %v2523, %v621
  %v2527 = vxor.u32 %v2526, 2147483648
  %v2528 = vmul.f32 %v2527, 1.442695
  %v2529 = vpow.pop %v2528
  %v2530 = vadd.f32 %v2529, 1.0
  %v2531 = vrcp.pop %v2530
  %v2532 = vmul.f32 1.0, %v2531
  %v2533 = vtanh.pop %v2526
  %v2534 = vmul.f32 %v2532, %v2068
  %2536 = vrot.lane.b32.xlu0 %v2533, 64
  %v2537 = vpop.permute.xlu0 %2536
  %v2539 = vmul.f32 %v2532, %v2537
  %2541 = vrot.lane.b32.xlu0 %v2539, 32
  %v2542 = vpop.permute.xlu0 %2541
  %v2544 = vadd.f32 %v2534, %v2542
  %v2545 = vtanh.pop %v2544
  %2547 = vrot.lane.b32.xlu0 %v2545, 64
  %v2548 = vpop.permute.xlu0 %2547
  %v2550 = vmul.f32 %v2532, %v2548
  %s2552 = scalar_lea.vmem %s12, 8
  %2553 = vst.msk [vmem:[%s2552] sm:$0x3] %vm377, %v2453
  %2555 = vrot.lane.b32.xlu0 %v2550, 32
  %v2556 = vpop.permute.xlu0 %2555
  %s2558 = scalar_lea.vmem %s13, 8
  %2559 = vst.msk [vmem:[%s2558] sm:$0x3] %vm654, %v2556
  %2561 = vrot.lane.b32.xlu0 %v2544, 96
  %v2562 = vpop.permute.xlu0 %2561
  %v2563 = vsel %vm148, %v2562, 0
  %2565 = vmatprep.subr.mxu0 0.0
  %2566 = vmatpush1.msra.mxu0 %v135
  %2567 = vmatprep.subr.mxu0 0.0
  %2568 = vmatpush1.msra.mxu0 %v136
  %2569 = vmatprep.subr.mxu0 0.0
  %2570 = vmatpush1.msra.mxu0 %v137
  %2571 = vmatprep.subr.mxu0 0.0
  %2572 = vmatpush1.msra.mxu0 %v138
  %2573 = vmatprep.subr.mxu0 0.0
  %2574 = vmatpush1.msra.mxu0 0.0
  %2575 = vmatprep.subr.mxu0 0.0
  %2576 = vmatpush1.msra.mxu0 0.0
  %2577 = vmatprep.subr.mxu0 0.0
  %2578 = vmatpush1.msra.mxu0 0.0
  %2579 = vmatprep.subr.mxu0 0.0
  %2580 = vmatpush1.msra.mxu0 0.0
  %2581 = vmatprep.subr.mxu0 0.0
  %2582 = vmatpush1.msra.mxu0 0.0
  %2583 = vmatprep.subr.mxu0 0.0
  %2584 = vmatpush1.msra.mxu0 0.0
  %2585 = vmatprep.subr.mxu0 0.0
  %2586 = vmatpush1.msra.mxu0 0.0
  %2587 = vmatprep.subr.mxu0 0.0
  %2588 = vmatpush1.msra.mxu0 0.0
  %2589 = vmatprep.subr.mxu0 0.0
  %2590 = vmatpush1.msra.mxu0 0.0
  %2591 = vmatprep.subr.mxu0 0.0
  %2592 = vmatpush1.msra.mxu0 0.0
  %2593 = vmatprep.subr.mxu0 0.0
  %2594 = vmatpush1.msra.mxu0 0.0
  %2595 = vmatprep.subr.mxu0 0.0
  %2596 = vmatpush1.msra.mxu0 0.0
  %2597 = vmatprep.subr.mxu0 0.0
  %2598 = vmatpush1.msra.mxu0 0.0
  %2599 = vmatprep.subr.mxu0 0.0
  %2600 = vmatpush1.msra.mxu0 0.0
  %2601 = vmatprep.subr.mxu0 0.0
  %2602 = vmatpush1.msra.mxu0 0.0
  %2603 = vmatprep.subr.mxu0 0.0
  %2604 = vmatpush1.msra.mxu0 0.0
  %2605 = vmatprep.subr.mxu0 0.0
  %2606 = vmatpush1.msra.mxu0 0.0
  %2607 = vmatprep.subr.mxu0 0.0
  %2608 = vmatpush1.msra.mxu0 0.0
  %2609 = vmatprep.subr.mxu0 0.0
  %2610 = vmatpush1.msra.mxu0 0.0
  %2611 = vmatprep.subr.mxu0 0.0
  %2612 = vmatpush1.msra.mxu0 0.0
  %2613 = vmatprep.subr.mxu0 0.0
  %2614 = vmatpush1.msra.mxu0 0.0
  %2615 = vmatprep.subr.mxu0 0.0
  %2616 = vmatpush1.msra.mxu0 0.0
  %2617 = vmatprep.subr.mxu0 0.0
  %2618 = vmatpush1.msra.mxu0 0.0
  %2619 = vmatprep.subr.mxu0 0.0
  %2620 = vmatpush1.msra.mxu0 0.0
  %2621 = vmatprep.subr.mxu0 0.0
  %2622 = vmatpush1.msra.mxu0 0.0
  %2623 = vmatprep.subr.mxu0 0.0
  %2624 = vmatpush1.msra.mxu0 0.0
  %2625 = vmatprep.subr.mxu0 0.0
  %2626 = vmatpush1.msra.mxu0 0.0
  %2627 = vmatprep.subr.mxu0 0.0
  %2628 = vmatpush1.msra.mxu0 0.0
  %2629 = vmatprep.mubr.f32.mxu0 0.0
  %2630 = vmatmul.mubr.f32.gmra.mrb[0].mxu0 %v2563
  %v2631 = vpop.f32.mrb[0].mxu0
  %v2632 = vadd.f32 0.0, %v2631
  %v2633 = vpop.f32.mrb[0].mxu0
  %2634 = vdwg.mxu0
  %v2635 = vsel %vm148, %v2556, 0
  %2637 = vmatprep.subr.mxu0 0.0
  %2638 = vmatpush1.msra.mxu0 %v131
  %2639 = vmatprep.subr.mxu0 0.0
  %2640 = vmatpush1.msra.mxu0 %v132
  %2641 = vmatprep.subr.mxu0 0.0
  %2642 = vmatpush1.msra.mxu0 %v133
  %2643 = vmatprep.subr.mxu0 0.0
  %2644 = vmatpush1.msra.mxu0 %v134
  %2645 = vmatprep.subr.mxu0 0.0
  %2646 = vmatpush1.msra.mxu0 0.0
  %2647 = vmatprep.subr.mxu0 0.0
  %2648 = vmatpush1.msra.mxu0 0.0
  %2649 = vmatprep.subr.mxu0 0.0
  %2650 = vmatpush1.msra.mxu0 0.0
  %2651 = vmatprep.subr.mxu0 0.0
  %2652 = vmatpush1.msra.mxu0 0.0
  %2653 = vmatprep.subr.mxu0 0.0
  %2654 = vmatpush1.msra.mxu0 0.0
  %2655 = vmatprep.subr.mxu0 0.0
  %2656 = vmatpush1.msra.mxu0 0.0
  %2657 = vmatprep.subr.mxu0 0.0
  %2658 = vmatpush1.msra.mxu0 0.0
  %2659 = vmatprep.subr.mxu0 0.0
  %2660 = vmatpush1.msra.mxu0 0.0
  %2661 = vmatprep.subr.mxu0 0.0
  %2662 = vmatpush1.msra.mxu0 0.0
  %2663 = vmatprep.subr.mxu0 0.0
  %2664 = vmatpush1.msra.mxu0 0.0
  %2665 = vmatprep.subr.mxu0 0.0
  %2666 = vmatpush1.msra.mxu0 0.0
  %2667 = vmatprep.subr.mxu0 0.0
  %2668 = vmatpush1.msra.mxu0 0.0
  %2669 = vmatprep.subr.mxu0 0.0
  %2670 = vmatpush1.msra.mxu0 0.0
  %2671 = vmatprep.subr.mxu0 0.0
  %2672 = vmatpush1.msra.mxu0 0.0
  %2673 = vmatprep.subr.mxu0 0.0
  %2674 = vmatpush1.msra.mxu0 0.0
  %2675 = vmatprep.subr.mxu0 0.0
  %2676 = vmatpush1.msra.mxu0 0.0
  %2677 = vmatprep.subr.mxu0 0.0
  %2678 = vmatpush1.msra.mxu0 0.0
  %2679 = vmatprep.subr.mxu0 0.0
  %2680 = vmatpush1.msra.mxu0 0.0
  %2681 = vmatprep.subr.mxu0 0.0
  %2682 = vmatpush1.msra.mxu0 0.0
  %2683 = vmatprep.subr.mxu0 0.0
  %2684 = vmatpush1.msra.mxu0 0.0
  %2685 = vmatprep.subr.mxu0 0.0
  %2686 = vmatpush1.msra.mxu0 0.0
  %2687 = vmatprep.subr.mxu0 0.0
  %2688 = vmatpush1.msra.mxu0 0.0
  %2689 = vmatprep.subr.mxu0 0.0
  %2690 = vmatpush1.msra.mxu0 0.0
  %2691 = vmatprep.subr.mxu0 0.0
  %2692 = vmatpush1.msra.mxu0 0.0
  %2693 = vmatprep.subr.mxu0 0.0
  %2694 = vmatpush1.msra.mxu0 0.0
  %2695 = vmatprep.subr.mxu0 0.0
  %2696 = vmatpush1.msra.mxu0 0.0
  %2697 = vmatprep.subr.mxu0 0.0
  %2698 = vmatpush1.msra.mxu0 0.0
  %2699 = vmatprep.subr.mxu0 0.0
  %2700 = vmatpush1.msra.mxu0 0.0
  %2701 = vmatprep.mubr.f32.mxu0 0.0
  %2702 = vmatmul.mubr.f32.gmra.mrb[0].mxu0 %v2635
  %v2703 = vpop.f32.mrb[0].mxu0
  %v2704 = vadd.f32 %v2632, %v2703
  %v2705 = vpop.f32.mrb[0].mxu0
  %2706 = vdwg.mxu0
  %v2707 = vadd.f32 %v2704, %v296
  %v2710 = vunpack.c.l.s4 1966171168
  %v2711 = vunpack.c.0.s8 %v2710
  %v2712 = vlaneseq
  %v2713 = vshrl.u32 %v2712, 7
  %v2714 = vsub.s32 %v2711, %v2713
  %v2715 = vrot.slane %v2707, %v2714
  %v2716 = vcombine.high %v2715, %v2715
  %v2718 = vunpack.c.l.s4 1966171168
  %v2719 = vunpack.c.0.s8 %v2718
  %v2720 = vlaneseq
  %v2721 = vshrl.u32 %v2720, 7
  %v2722 = vsub.s32 %v2719, %v2721
  %v2723 = vrot.slane %v2715, %v2722
  %v2725 = vunpack.c.l.s4 1966171168
  %v2726 = vunpack.c.0.s8 %v2725
  %v2727 = vlaneseq
  %v2728 = vshrl.u32 %v2727, 7
  %v2729 = vsub.s32 %v2726, %v2728
  %v2730 = vrot.slane %v2716, %v2729
  %v2731 = vlaneseq
  %v2732 = vshrl.u32 %v2731, 7
  %v2733 = vsub.s32 0, %v2732
  %v2734 = vrot.slane %v2723, %v2733
  %v2735 = vlaneseq
  %v2736 = vshrl.u32 %v2735, 7
  %v2737 = vsub.s32 0, %v2736
  %v2738 = vrot.slane %v2730, %v2737
  %v2741 = vadd.f32 %v2734, %v125
  %v2742 = vadd.f32 %v2738, %v129
  %v2743 = vtanh.pop %v2741
  %v2744 = vtanh.pop %v2742
  %v2745 = vmul.f32 %v2743, %v340
  %v2746 = vmul.f32 %v2744, %v340
  %v2747 = vsel %vm344, %v2745, 0.0
  %2748 = vadd.xlane.f32.xlu0 %v2747
  %v2749 = vpop.xlane.xlu0 %2748
  %v2750 = vsel %vm344, %v2746, 0.0
  %2751 = vadd.xlane.f32.xlu0 %v2750
  %v2752 = vpop.xlane.xlu0 %2751
  %v2753 = vadd.f32 %v2749, %v358
  %v2754 = vadd.f32 %v2752, %v358
  %v2757 = vlaneseq
  %v2758 = vshrl.u32 %v2757, 7
  %v2759 = vsub.s32 %v365, %v2758
  %v2760 = vrot.slane %v2753, %v2759
  %v2761 = vlaneseq
  %v2762 = vshrl.u32 %v2761, 7
  %v2763 = vsub.s32 %v365, %v2762
  %v2764 = vrot.slane %v2754, %v2763
  %v2765 = vsel %vm374, %v2764, %v2760
  %v2767 = vsel %vm377, %v2765, -inf
  %2768 = vmax.xlane.f32.xlu0 %v2767
  %v2769 = vpop.xlane.xlu0 %2768
  %v2771 = vlaneseq
  %v2772 = vshrl.u32 %v2771, 7
  %v2773 = vsub.s32 0, %v2772
  %v2774 = vrot.slane %v2769, %v2773
  %v2775 = vlaneseq
  %v2776 = vshrl.u32 %v2775, 7
  %v2777 = vsub.s32 1, %v2776
  %v2778 = vrot.slane %v2769, %v2777
  %v2781 = vsub.f32 %v2753, %v2774
  %v2782 = vsub.f32 %v2754, %v2778
  %v2783 = vmul.f32 %v2781, 1.442695
  %v2784 = vpow.pop %v2783
  %v2785 = vmul.f32 %v2782, 1.442695
  %v2786 = vpow.pop %v2785
  %2789 = vset.pattern.permute.xlu0 0
  %2790 = vperm.xlu0 %2789, %v2784
  %v2791 = vpop.permute.xlu0 %2790
  %2792 = vset.pattern.permute.xlu0 0
  %2793 = vperm.xlu0 %2792, %v2786
  %v2794 = vpop.permute.xlu0 %2793
  %v2795 = vlaneseq
  %v2796 = vshrl.u32 %v2795, 7
  %v2797 = vsub.s32 %v365, %v2796
  %v2798 = vrot.slane %v2791, %v2797
  %v2799 = vlaneseq
  %v2800 = vshrl.u32 %v2799, 7
  %v2801 = vsub.s32 %v365, %v2800
  %v2802 = vrot.slane %v2794, %v2801
  %v2803 = vsel %vm374, %v2802, %v2798
  %v2805 = vsel %vm377, %v2803, 0.0
  %2806 = vadd.xlane.f32.xlu0 %v2805
  %v2807 = vpop.xlane.xlu0 %2806
  %v2808 = vrcp.pop %v2807
  %v2810 = vlaneseq
  %v2811 = vshrl.u32 %v2810, 7
  %v2812 = vsub.s32 0, %v2811
  %v2813 = vrot.slane %v2808, %v2812
  %v2814 = vlaneseq
  %v2815 = vshrl.u32 %v2814, 7
  %v2816 = vsub.s32 1, %v2815
  %v2817 = vrot.slane %v2808, %v2816
  %v2820 = vmul.f32 %v2784, %v2813
  %v2821 = vmul.f32 %v2786, %v2817
  %s2822 = scalar_lea.vmem %s1, 10
  %v2823 = vld [vmem:[%s2822] sm:$0x3]
  %v2825 = vlaneseq
  %v2826 = vshrl.u32 %v2825, 7
  %v2827 = vsub.s32 0, %v2826
  %v2828 = vrot.slane %v2823, %v2827
  %2830 = vbcast.lane.b32.xlu0 %v2828, 256
  %v2831 = vpop.permute.xlu0 %2830
  %v2832 = vlaneseq
  %v2833 = vshrl.u32 %v2832, 7
  %v2834 = vsub.s32 1, %v2833
  %v2835 = vrot.slane %v2823, %v2834
  %2837 = vbcast.lane.b32.xlu0 %v2835, 256
  %v2838 = vpop.permute.xlu0 %2837
  %v2841 = vmul.f32 %v2820, %v2831
  %v2842 = vmul.f32 %v2821, %v2838
  %2843 = vmatprep.subr.mxu0 0.0
  %2844 = vmatpush1.msra.mxu0 %v143
  %2845 = vmatprep.subr.mxu0 0.0
  %2846 = vmatpush1.msra.mxu0 %v144
  %2847 = vmatprep.subr.mxu0 0.0
  %2848 = vmatpush1.msra.mxu0 %v145
  %2849 = vmatprep.subr.mxu0 0.0
  %2850 = vmatpush1.msra.mxu0 %v146
  %2851 = vmatprep.subr.mxu0 0.0
  %2852 = vmatpush1.msra.mxu0 0.0
  %2853 = vmatprep.subr.mxu0 0.0
  %2854 = vmatpush1.msra.mxu0 0.0
  %2855 = vmatprep.subr.mxu0 0.0
  %2856 = vmatpush1.msra.mxu0 0.0
  %2857 = vmatprep.subr.mxu0 0.0
  %2858 = vmatpush1.msra.mxu0 0.0
  %2859 = vmatprep.subr.mxu0 0.0
  %2860 = vmatpush1.msra.mxu0 0.0
  %2861 = vmatprep.subr.mxu0 0.0
  %2862 = vmatpush1.msra.mxu0 0.0
  %2863 = vmatprep.subr.mxu0 0.0
  %2864 = vmatpush1.msra.mxu0 0.0
  %2865 = vmatprep.subr.mxu0 0.0
  %2866 = vmatpush1.msra.mxu0 0.0
  %2867 = vmatprep.subr.mxu0 0.0
  %2868 = vmatpush1.msra.mxu0 0.0
  %2869 = vmatprep.subr.mxu0 0.0
  %2870 = vmatpush1.msra.mxu0 0.0
  %2871 = vmatprep.subr.mxu0 0.0
  %2872 = vmatpush1.msra.mxu0 0.0
  %2873 = vmatprep.subr.mxu0 0.0
  %2874 = vmatpush1.msra.mxu0 0.0
  %2875 = vmatprep.subr.mxu0 0.0
  %2876 = vmatpush1.msra.mxu0 0.0
  %2877 = vmatprep.subr.mxu0 0.0
  %2878 = vmatpush1.msra.mxu0 0.0
  %2879 = vmatprep.subr.mxu0 0.0
  %2880 = vmatpush1.msra.mxu0 0.0
  %2881 = vmatprep.subr.mxu0 0.0
  %2882 = vmatpush1.msra.mxu0 0.0
  %2883 = vmatprep.subr.mxu0 0.0
  %2884 = vmatpush1.msra.mxu0 0.0
  %2885 = vmatprep.subr.mxu0 0.0
  %2886 = vmatpush1.msra.mxu0 0.0
  %2887 = vmatprep.subr.mxu0 0.0
  %2888 = vmatpush1.msra.mxu0 0.0
  %2889 = vmatprep.subr.mxu0 0.0
  %2890 = vmatpush1.msra.mxu0 0.0
  %2891 = vmatprep.subr.mxu0 0.0
  %2892 = vmatpush1.msra.mxu0 0.0
  %2893 = vmatprep.subr.mxu0 0.0
  %2894 = vmatpush1.msra.mxu0 0.0
  %2895 = vmatprep.subr.mxu0 0.0
  %2896 = vmatpush1.msra.mxu0 0.0
  %2897 = vmatprep.subr.mxu0 0.0
  %2898 = vmatpush1.msra.mxu0 0.0
  %2899 = vmatprep.subr.mxu0 0.0
  %2900 = vmatpush1.msra.mxu0 0.0
  %2901 = vmatprep.subr.mxu0 0.0
  %2902 = vmatpush1.msra.mxu0 0.0
  %2903 = vmatprep.subr.mxu0 0.0
  %2904 = vmatpush1.msra.mxu0 0.0
  %2905 = vmatprep.subr.mxu0 0.0
  %2906 = vmatpush1.msra.mxu0 0.0
  %2907 = vmatprep.mubr.f32.mxu0 0.0
  %2908 = vmatmul.mubr.f32.gmra.mrb[0].mxu0 %v2635
  %v2909 = vpop.f32.mrb[0].mxu0
  %v2910 = vadd.f32 0.0, %v2909
  %v2911 = vpop.f32.mrb[0].mxu0
  %2912 = vdwg.mxu0
  %2915 = vset.pattern.permute.xlu0 0
  %2916 = vperm.xlu0 %2915, %v2841
  %v2917 = vpop.permute.xlu0 %2916
  %2918 = vset.pattern.permute.xlu0 0
  %2919 = vperm.xlu0 %2918, %v2842
  %v2920 = vpop.permute.xlu0 %2919
  %v2921 = vlaneseq
  %v2922 = vshrl.u32 %v2921, 7
  %v2923 = vsub.s32 %v365, %v2922
  %v2924 = vrot.slane %v2917, %v2923
  %v2925 = vlaneseq
  %v2926 = vshrl.u32 %v2925, 7
  %v2927 = vsub.s32 %v365, %v2926
  %v2928 = vrot.slane %v2920, %v2927
  %v2929 = vsel %vm374, %v2928, %v2924
  %v2930 = vsel %vm540, %v2929, 0
  %2932 = vmatprep.subr.mxu0 0.0
  %2933 = vmatpush1.msra.mxu0 %v545
  %2934 = vmatprep.subr.mxu0 0.0
  %2935 = vmatpush1.msra.mxu0 0.0
  %2936 = vmatprep.subr.mxu0 0.0
  %2937 = vmatpush1.msra.mxu0 0.0
  %2938 = vmatprep.subr.mxu0 0.0
  %2939 = vmatpush1.msra.mxu0 0.0
  %2940 = vmatprep.subr.mxu0 0.0
  %2941 = vmatpush1.msra.mxu0 0.0
  %2942 = vmatprep.subr.mxu0 0.0
  %2943 = vmatpush1.msra.mxu0 0.0
  %2944 = vmatprep.subr.mxu0 0.0
  %2945 = vmatpush1.msra.mxu0 0.0
  %2946 = vmatprep.subr.mxu0 0.0
  %2947 = vmatpush1.msra.mxu0 0.0
  %2948 = vmatprep.subr.mxu0 0.0
  %2949 = vmatpush1.msra.mxu0 0.0
  %2950 = vmatprep.subr.mxu0 0.0
  %2951 = vmatpush1.msra.mxu0 0.0
  %2952 = vmatprep.subr.mxu0 0.0
  %2953 = vmatpush1.msra.mxu0 0.0
  %2954 = vmatprep.subr.mxu0 0.0
  %2955 = vmatpush1.msra.mxu0 0.0
  %2956 = vmatprep.subr.mxu0 0.0
  %2957 = vmatpush1.msra.mxu0 0.0
  %2958 = vmatprep.subr.mxu0 0.0
  %2959 = vmatpush1.msra.mxu0 0.0
  %2960 = vmatprep.subr.mxu0 0.0
  %2961 = vmatpush1.msra.mxu0 0.0
  %2962 = vmatprep.subr.mxu0 0.0
  %2963 = vmatpush1.msra.mxu0 0.0
  %2964 = vmatprep.subr.mxu0 0.0
  %2965 = vmatpush1.msra.mxu0 0.0
  %2966 = vmatprep.subr.mxu0 0.0
  %2967 = vmatpush1.msra.mxu0 0.0
  %2968 = vmatprep.subr.mxu0 0.0
  %2969 = vmatpush1.msra.mxu0 0.0
  %2970 = vmatprep.subr.mxu0 0.0
  %2971 = vmatpush1.msra.mxu0 0.0
  %2972 = vmatprep.subr.mxu0 0.0
  %2973 = vmatpush1.msra.mxu0 0.0
  %2974 = vmatprep.subr.mxu0 0.0
  %2975 = vmatpush1.msra.mxu0 0.0
  %2976 = vmatprep.subr.mxu0 0.0
  %2977 = vmatpush1.msra.mxu0 0.0
  %2978 = vmatprep.subr.mxu0 0.0
  %2979 = vmatpush1.msra.mxu0 0.0
  %2980 = vmatprep.subr.mxu0 0.0
  %2981 = vmatpush1.msra.mxu0 0.0
  %2982 = vmatprep.subr.mxu0 0.0
  %2983 = vmatpush1.msra.mxu0 0.0
  %2984 = vmatprep.subr.mxu0 0.0
  %2985 = vmatpush1.msra.mxu0 0.0
  %2986 = vmatprep.subr.mxu0 0.0
  %2987 = vmatpush1.msra.mxu0 0.0
  %2988 = vmatprep.subr.mxu0 0.0
  %2989 = vmatpush1.msra.mxu0 0.0
  %2990 = vmatprep.subr.mxu0 0.0
  %2991 = vmatpush1.msra.mxu0 0.0
  %2992 = vmatprep.subr.mxu0 0.0
  %2993 = vmatpush1.msra.mxu0 0.0
  %2994 = vmatprep.subr.mxu0 0.0
  %2995 = vmatpush1.msra.mxu0 0.0
  %2996 = vmatprep.mubr.f32.mxu0 0.0
  %2997 = vmatmul.mubr.f32.gmra.mrb[0].mxu0 %v2930
  %v2998 = vpop.f32.mrb[0].mxu0
  %v2999 = vadd.f32 %v2910, %v2998
  %v3000 = vpop.f32.mrb[0].mxu0
  %3001 = vdwg.mxu0
  %v3002 = vadd.f32 %v2999, %v621
  %v3003 = vxor.u32 %v3002, 2147483648
  %v3004 = vmul.f32 %v3003, 1.442695
  %v3005 = vpow.pop %v3004
  %v3006 = vadd.f32 %v3005, 1.0
  %v3007 = vrcp.pop %v3006
  %v3008 = vmul.f32 1.0, %v3007
  %v3009 = vtanh.pop %v3002
  %v3010 = vmul.f32 %v3008, %v2544
  %3012 = vrot.lane.b32.xlu0 %v3009, 64
  %v3013 = vpop.permute.xlu0 %3012
  %v3015 = vmul.f32 %v3008, %v3013
  %3017 = vrot.lane.b32.xlu0 %v3015, 32
  %v3018 = vpop.permute.xlu0 %3017
  %v3020 = vadd.f32 %v3010, %v3018
  %v3021 = vtanh.pop %v3020
  %3023 = vrot.lane.b32.xlu0 %v3021, 64
  %v3024 = vpop.permute.xlu0 %3023
  %v3026 = vmul.f32 %v3008, %v3024
  %s3028 = scalar_lea.vmem %s12, 10
  %3029 = vst.msk [vmem:[%s3028] sm:$0x3] %vm377, %v2929
  %3031 = vrot.lane.b32.xlu0 %v3026, 32
  %v3032 = vpop.permute.xlu0 %3031
  %s3034 = scalar_lea.vmem %s13, 10
  %3035 = vst.msk [vmem:[%s3034] sm:$0x3] %vm654, %v3032
  %3037 = vrot.lane.b32.xlu0 %v3020, 96
  %v3038 = vpop.permute.xlu0 %3037
  %v3039 = vsel %vm148, %v3038, 0
  %3041 = vmatprep.subr.mxu0 0.0
  %3042 = vmatpush1.msra.mxu0 %v135
  %3043 = vmatprep.subr.mxu0 0.0
  %3044 = vmatpush1.msra.mxu0 %v136
  %3045 = vmatprep.subr.mxu0 0.0
  %3046 = vmatpush1.msra.mxu0 %v137
  %3047 = vmatprep.subr.mxu0 0.0
  %3048 = vmatpush1.msra.mxu0 %v138
  %3049 = vmatprep.subr.mxu0 0.0
  %3050 = vmatpush1.msra.mxu0 0.0
  %3051 = vmatprep.subr.mxu0 0.0
  %3052 = vmatpush1.msra.mxu0 0.0
  %3053 = vmatprep.subr.mxu0 0.0
  %3054 = vmatpush1.msra.mxu0 0.0
  %3055 = vmatprep.subr.mxu0 0.0
  %3056 = vmatpush1.msra.mxu0 0.0
  %3057 = vmatprep.subr.mxu0 0.0
  %3058 = vmatpush1.msra.mxu0 0.0
  %3059 = vmatprep.subr.mxu0 0.0
  %3060 = vmatpush1.msra.mxu0 0.0
  %3061 = vmatprep.subr.mxu0 0.0
  %3062 = vmatpush1.msra.mxu0 0.0
  %3063 = vmatprep.subr.mxu0 0.0
  %3064 = vmatpush1.msra.mxu0 0.0
  %3065 = vmatprep.subr.mxu0 0.0
  %3066 = vmatpush1.msra.mxu0 0.0
  %3067 = vmatprep.subr.mxu0 0.0
  %3068 = vmatpush1.msra.mxu0 0.0
  %3069 = vmatprep.subr.mxu0 0.0
  %3070 = vmatpush1.msra.mxu0 0.0
  %3071 = vmatprep.subr.mxu0 0.0
  %3072 = vmatpush1.msra.mxu0 0.0
  %3073 = vmatprep.subr.mxu0 0.0
  %3074 = vmatpush1.msra.mxu0 0.0
  %3075 = vmatprep.subr.mxu0 0.0
  %3076 = vmatpush1.msra.mxu0 0.0
  %3077 = vmatprep.subr.mxu0 0.0
  %3078 = vmatpush1.msra.mxu0 0.0
  %3079 = vmatprep.subr.mxu0 0.0
  %3080 = vmatpush1.msra.mxu0 0.0
  %3081 = vmatprep.subr.mxu0 0.0
  %3082 = vmatpush1.msra.mxu0 0.0
  %3083 = vmatprep.subr.mxu0 0.0
  %3084 = vmatpush1.msra.mxu0 0.0
  %3085 = vmatprep.subr.mxu0 0.0
  %3086 = vmatpush1.msra.mxu0 0.0
  %3087 = vmatprep.subr.mxu0 0.0
  %3088 = vmatpush1.msra.mxu0 0.0
  %3089 = vmatprep.subr.mxu0 0.0
  %3090 = vmatpush1.msra.mxu0 0.0
  %3091 = vmatprep.subr.mxu0 0.0
  %3092 = vmatpush1.msra.mxu0 0.0
  %3093 = vmatprep.subr.mxu0 0.0
  %3094 = vmatpush1.msra.mxu0 0.0
  %3095 = vmatprep.subr.mxu0 0.0
  %3096 = vmatpush1.msra.mxu0 0.0
  %3097 = vmatprep.subr.mxu0 0.0
  %3098 = vmatpush1.msra.mxu0 0.0
  %3099 = vmatprep.subr.mxu0 0.0
  %3100 = vmatpush1.msra.mxu0 0.0
  %3101 = vmatprep.subr.mxu0 0.0
  %3102 = vmatpush1.msra.mxu0 0.0
  %3103 = vmatprep.subr.mxu0 0.0
  %3104 = vmatpush1.msra.mxu0 0.0
  %3105 = vmatprep.mubr.f32.mxu0 0.0
  %3106 = vmatmul.mubr.f32.gmra.mrb[0].mxu0 %v3039
  %v3107 = vpop.f32.mrb[0].mxu0
  %v3108 = vadd.f32 0.0, %v3107
  %v3109 = vpop.f32.mrb[0].mxu0
  %3110 = vdwg.mxu0
  %v3111 = vsel %vm148, %v3032, 0
  %3113 = vmatprep.subr.mxu0 0.0
  %3114 = vmatpush1.msra.mxu0 %v131
  %3115 = vmatprep.subr.mxu0 0.0
  %3116 = vmatpush1.msra.mxu0 %v132
  %3117 = vmatprep.subr.mxu0 0.0
  %3118 = vmatpush1.msra.mxu0 %v133
  %3119 = vmatprep.subr.mxu0 0.0
  %3120 = vmatpush1.msra.mxu0 %v134
  %3121 = vmatprep.subr.mxu0 0.0
  %3122 = vmatpush1.msra.mxu0 0.0
  %3123 = vmatprep.subr.mxu0 0.0
  %3124 = vmatpush1.msra.mxu0 0.0
  %3125 = vmatprep.subr.mxu0 0.0
  %3126 = vmatpush1.msra.mxu0 0.0
  %3127 = vmatprep.subr.mxu0 0.0
  %3128 = vmatpush1.msra.mxu0 0.0
  %3129 = vmatprep.subr.mxu0 0.0
  %3130 = vmatpush1.msra.mxu0 0.0
  %3131 = vmatprep.subr.mxu0 0.0
  %3132 = vmatpush1.msra.mxu0 0.0
  %3133 = vmatprep.subr.mxu0 0.0
  %3134 = vmatpush1.msra.mxu0 0.0
  %3135 = vmatprep.subr.mxu0 0.0
  %3136 = vmatpush1.msra.mxu0 0.0
  %3137 = vmatprep.subr.mxu0 0.0
  %3138 = vmatpush1.msra.mxu0 0.0
  %3139 = vmatprep.subr.mxu0 0.0
  %3140 = vmatpush1.msra.mxu0 0.0
  %3141 = vmatprep.subr.mxu0 0.0
  %3142 = vmatpush1.msra.mxu0 0.0
  %3143 = vmatprep.subr.mxu0 0.0
  %3144 = vmatpush1.msra.mxu0 0.0
  %3145 = vmatprep.subr.mxu0 0.0
  %3146 = vmatpush1.msra.mxu0 0.0
  %3147 = vmatprep.subr.mxu0 0.0
  %3148 = vmatpush1.msra.mxu0 0.0
  %3149 = vmatprep.subr.mxu0 0.0
  %3150 = vmatpush1.msra.mxu0 0.0
  %3151 = vmatprep.subr.mxu0 0.0
  %3152 = vmatpush1.msra.mxu0 0.0
  %3153 = vmatprep.subr.mxu0 0.0
  %3154 = vmatpush1.msra.mxu0 0.0
  %3155 = vmatprep.subr.mxu0 0.0
  %3156 = vmatpush1.msra.mxu0 0.0
  %3157 = vmatprep.subr.mxu0 0.0
  %3158 = vmatpush1.msra.mxu0 0.0
  %3159 = vmatprep.subr.mxu0 0.0
  %3160 = vmatpush1.msra.mxu0 0.0
  %3161 = vmatprep.subr.mxu0 0.0
  %3162 = vmatpush1.msra.mxu0 0.0
  %3163 = vmatprep.subr.mxu0 0.0
  %3164 = vmatpush1.msra.mxu0 0.0
  %3165 = vmatprep.subr.mxu0 0.0
  %3166 = vmatpush1.msra.mxu0 0.0
  %3167 = vmatprep.subr.mxu0 0.0
  %3168 = vmatpush1.msra.mxu0 0.0
  %3169 = vmatprep.subr.mxu0 0.0
  %3170 = vmatpush1.msra.mxu0 0.0
  %3171 = vmatprep.subr.mxu0 0.0
  %3172 = vmatpush1.msra.mxu0 0.0
  %3173 = vmatprep.subr.mxu0 0.0
  %3174 = vmatpush1.msra.mxu0 0.0
  %3175 = vmatprep.subr.mxu0 0.0
  %3176 = vmatpush1.msra.mxu0 0.0
  %3177 = vmatprep.mubr.f32.mxu0 0.0
  %3178 = vmatmul.mubr.f32.gmra.mrb[0].mxu0 %v3111
  %v3179 = vpop.f32.mrb[0].mxu0
  %v3180 = vadd.f32 %v3108, %v3179
  %v3181 = vpop.f32.mrb[0].mxu0
  %3182 = vdwg.mxu0
  %v3183 = vadd.f32 %v3180, %v296
  %v3186 = vunpack.c.l.s4 1966171168
  %v3187 = vunpack.c.0.s8 %v3186
  %v3188 = vlaneseq
  %v3189 = vshrl.u32 %v3188, 7
  %v3190 = vsub.s32 %v3187, %v3189
  %v3191 = vrot.slane %v3183, %v3190
  %v3192 = vcombine.high %v3191, %v3191
  %v3194 = vunpack.c.l.s4 1966171168
  %v3195 = vunpack.c.0.s8 %v3194
  %v3196 = vlaneseq
  %v3197 = vshrl.u32 %v3196, 7
  %v3198 = vsub.s32 %v3195, %v3197
  %v3199 = vrot.slane %v3191, %v3198
  %v3201 = vunpack.c.l.s4 1966171168
  %v3202 = vunpack.c.0.s8 %v3201
  %v3203 = vlaneseq
  %v3204 = vshrl.u32 %v3203, 7
  %v3205 = vsub.s32 %v3202, %v3204
  %v3206 = vrot.slane %v3192, %v3205
  %v3207 = vlaneseq
  %v3208 = vshrl.u32 %v3207, 7
  %v3209 = vsub.s32 0, %v3208
  %v3210 = vrot.slane %v3199, %v3209
  %v3211 = vlaneseq
  %v3212 = vshrl.u32 %v3211, 7
  %v3213 = vsub.s32 0, %v3212
  %v3214 = vrot.slane %v3206, %v3213
  %v3217 = vadd.f32 %v3210, %v125
  %v3218 = vadd.f32 %v3214, %v129
  %v3219 = vtanh.pop %v3217
  %v3220 = vtanh.pop %v3218
  %v3221 = vmul.f32 %v3219, %v340
  %v3222 = vmul.f32 %v3220, %v340
  %v3223 = vsel %vm344, %v3221, 0.0
  %3224 = vadd.xlane.f32.xlu0 %v3223
  %v3225 = vpop.xlane.xlu0 %3224
  %v3226 = vsel %vm344, %v3222, 0.0
  %3227 = vadd.xlane.f32.xlu0 %v3226
  %v3228 = vpop.xlane.xlu0 %3227
  %v3229 = vadd.f32 %v3225, %v358
  %v3230 = vadd.f32 %v3228, %v358
  %v3233 = vlaneseq
  %v3234 = vshrl.u32 %v3233, 7
  %v3235 = vsub.s32 %v365, %v3234
  %v3236 = vrot.slane %v3229, %v3235
  %v3237 = vlaneseq
  %v3238 = vshrl.u32 %v3237, 7
  %v3239 = vsub.s32 %v365, %v3238
  %v3240 = vrot.slane %v3230, %v3239
  %v3241 = vsel %vm374, %v3240, %v3236
  %v3243 = vsel %vm377, %v3241, -inf
  %3244 = vmax.xlane.f32.xlu0 %v3243
  %v3245 = vpop.xlane.xlu0 %3244
  %v3247 = vlaneseq
  %v3248 = vshrl.u32 %v3247, 7
  %v3249 = vsub.s32 0, %v3248
  %v3250 = vrot.slane %v3245, %v3249
  %v3251 = vlaneseq
  %v3252 = vshrl.u32 %v3251, 7
  %v3253 = vsub.s32 1, %v3252
  %v3254 = vrot.slane %v3245, %v3253
  %v3257 = vsub.f32 %v3229, %v3250
  %v3258 = vsub.f32 %v3230, %v3254
  %v3259 = vmul.f32 %v3257, 1.442695
  %v3260 = vpow.pop %v3259
  %v3261 = vmul.f32 %v3258, 1.442695
  %v3262 = vpow.pop %v3261
  %3265 = vset.pattern.permute.xlu0 0
  %3266 = vperm.xlu0 %3265, %v3260
  %v3267 = vpop.permute.xlu0 %3266
  %3268 = vset.pattern.permute.xlu0 0
  %3269 = vperm.xlu0 %3268, %v3262
  %v3270 = vpop.permute.xlu0 %3269
  %v3271 = vlaneseq
  %v3272 = vshrl.u32 %v3271, 7
  %v3273 = vsub.s32 %v365, %v3272
  %v3274 = vrot.slane %v3267, %v3273
  %v3275 = vlaneseq
  %v3276 = vshrl.u32 %v3275, 7
  %v3277 = vsub.s32 %v365, %v3276
  %v3278 = vrot.slane %v3270, %v3277
  %v3279 = vsel %vm374, %v3278, %v3274
  %v3281 = vsel %vm377, %v3279, 0.0
  %3282 = vadd.xlane.f32.xlu0 %v3281
  %v3283 = vpop.xlane.xlu0 %3282
  %v3284 = vrcp.pop %v3283
  %v3286 = vlaneseq
  %v3287 = vshrl.u32 %v3286, 7
  %v3288 = vsub.s32 0, %v3287
  %v3289 = vrot.slane %v3284, %v3288
  %v3290 = vlaneseq
  %v3291 = vshrl.u32 %v3290, 7
  %v3292 = vsub.s32 1, %v3291
  %v3293 = vrot.slane %v3284, %v3292
  %v3296 = vmul.f32 %v3260, %v3289
  %v3297 = vmul.f32 %v3262, %v3293
  %s3298 = scalar_lea.vmem %s1, 12
  %v3299 = vld [vmem:[%s3298] sm:$0x3]
  %v3301 = vlaneseq
  %v3302 = vshrl.u32 %v3301, 7
  %v3303 = vsub.s32 0, %v3302
  %v3304 = vrot.slane %v3299, %v3303
  %3306 = vbcast.lane.b32.xlu0 %v3304, 256
  %v3307 = vpop.permute.xlu0 %3306
  %v3308 = vlaneseq
  %v3309 = vshrl.u32 %v3308, 7
  %v3310 = vsub.s32 1, %v3309
  %v3311 = vrot.slane %v3299, %v3310
  %3313 = vbcast.lane.b32.xlu0 %v3311, 256
  %v3314 = vpop.permute.xlu0 %3313
  %v3317 = vmul.f32 %v3296, %v3307
  %v3318 = vmul.f32 %v3297, %v3314
  %3319 = vmatprep.subr.mxu0 0.0
  %3320 = vmatpush1.msra.mxu0 %v143
  %3321 = vmatprep.subr.mxu0 0.0
  %3322 = vmatpush1.msra.mxu0 %v144
  %3323 = vmatprep.subr.mxu0 0.0
  %3324 = vmatpush1.msra.mxu0 %v145
  %3325 = vmatprep.subr.mxu0 0.0
  %3326 = vmatpush1.msra.mxu0 %v146
  %3327 = vmatprep.subr.mxu0 0.0
  %3328 = vmatpush1.msra.mxu0 0.0
  %3329 = vmatprep.subr.mxu0 0.0
  %3330 = vmatpush1.msra.mxu0 0.0
  %3331 = vmatprep.subr.mxu0 0.0
  %3332 = vmatpush1.msra.mxu0 0.0
  %3333 = vmatprep.subr.mxu0 0.0
  %3334 = vmatpush1.msra.mxu0 0.0
  %3335 = vmatprep.subr.mxu0 0.0
  %3336 = vmatpush1.msra.mxu0 0.0
  %3337 = vmatprep.subr.mxu0 0.0
  %3338 = vmatpush1.msra.mxu0 0.0
  %3339 = vmatprep.subr.mxu0 0.0
  %3340 = vmatpush1.msra.mxu0 0.0
  %3341 = vmatprep.subr.mxu0 0.0
  %3342 = vmatpush1.msra.mxu0 0.0
  %3343 = vmatprep.subr.mxu0 0.0
  %3344 = vmatpush1.msra.mxu0 0.0
  %3345 = vmatprep.subr.mxu0 0.0
  %3346 = vmatpush1.msra.mxu0 0.0
  %3347 = vmatprep.subr.mxu0 0.0
  %3348 = vmatpush1.msra.mxu0 0.0
  %3349 = vmatprep.subr.mxu0 0.0
  %3350 = vmatpush1.msra.mxu0 0.0
  %3351 = vmatprep.subr.mxu0 0.0
  %3352 = vmatpush1.msra.mxu0 0.0
  %3353 = vmatprep.subr.mxu0 0.0
  %3354 = vmatpush1.msra.mxu0 0.0
  %3355 = vmatprep.subr.mxu0 0.0
  %3356 = vmatpush1.msra.mxu0 0.0
  %3357 = vmatprep.subr.mxu0 0.0
  %3358 = vmatpush1.msra.mxu0 0.0
  %3359 = vmatprep.subr.mxu0 0.0
  %3360 = vmatpush1.msra.mxu0 0.0
  %3361 = vmatprep.subr.mxu0 0.0
  %3362 = vmatpush1.msra.mxu0 0.0
  %3363 = vmatprep.subr.mxu0 0.0
  %3364 = vmatpush1.msra.mxu0 0.0
  %3365 = vmatprep.subr.mxu0 0.0
  %3366 = vmatpush1.msra.mxu0 0.0
  %3367 = vmatprep.subr.mxu0 0.0
  %3368 = vmatpush1.msra.mxu0 0.0
  %3369 = vmatprep.subr.mxu0 0.0
  %3370 = vmatpush1.msra.mxu0 0.0
  %3371 = vmatprep.subr.mxu0 0.0
  %3372 = vmatpush1.msra.mxu0 0.0
  %3373 = vmatprep.subr.mxu0 0.0
  %3374 = vmatpush1.msra.mxu0 0.0
  %3375 = vmatprep.subr.mxu0 0.0
  %3376 = vmatpush1.msra.mxu0 0.0
  %3377 = vmatprep.subr.mxu0 0.0
  %3378 = vmatpush1.msra.mxu0 0.0
  %3379 = vmatprep.subr.mxu0 0.0
  %3380 = vmatpush1.msra.mxu0 0.0
  %3381 = vmatprep.subr.mxu0 0.0
  %3382 = vmatpush1.msra.mxu0 0.0
  %3383 = vmatprep.mubr.f32.mxu0 0.0
  %3384 = vmatmul.mubr.f32.gmra.mrb[0].mxu0 %v3111
  %v3385 = vpop.f32.mrb[0].mxu0
  %v3386 = vadd.f32 0.0, %v3385
  %v3387 = vpop.f32.mrb[0].mxu0
  %3388 = vdwg.mxu0
  %3391 = vset.pattern.permute.xlu0 0
  %3392 = vperm.xlu0 %3391, %v3317
  %v3393 = vpop.permute.xlu0 %3392
  %3394 = vset.pattern.permute.xlu0 0
  %3395 = vperm.xlu0 %3394, %v3318
  %v3396 = vpop.permute.xlu0 %3395
  %v3397 = vlaneseq
  %v3398 = vshrl.u32 %v3397, 7
  %v3399 = vsub.s32 %v365, %v3398
  %v3400 = vrot.slane %v3393, %v3399
  %v3401 = vlaneseq
  %v3402 = vshrl.u32 %v3401, 7
  %v3403 = vsub.s32 %v365, %v3402
  %v3404 = vrot.slane %v3396, %v3403
  %v3405 = vsel %vm374, %v3404, %v3400
  %v3406 = vsel %vm540, %v3405, 0
  %3408 = vmatprep.subr.mxu0 0.0
  %3409 = vmatpush1.msra.mxu0 %v545
  %3410 = vmatprep.subr.mxu0 0.0
  %3411 = vmatpush1.msra.mxu0 0.0
  %3412 = vmatprep.subr.mxu0 0.0
  %3413 = vmatpush1.msra.mxu0 0.0
  %3414 = vmatprep.subr.mxu0 0.0
  %3415 = vmatpush1.msra.mxu0 0.0
  %3416 = vmatprep.subr.mxu0 0.0
  %3417 = vmatpush1.msra.mxu0 0.0
  %3418 = vmatprep.subr.mxu0 0.0
  %3419 = vmatpush1.msra.mxu0 0.0
  %3420 = vmatprep.subr.mxu0 0.0
  %3421 = vmatpush1.msra.mxu0 0.0
  %3422 = vmatprep.subr.mxu0 0.0
  %3423 = vmatpush1.msra.mxu0 0.0
  %3424 = vmatprep.subr.mxu0 0.0
  %3425 = vmatpush1.msra.mxu0 0.0
  %3426 = vmatprep.subr.mxu0 0.0
  %3427 = vmatpush1.msra.mxu0 0.0
  %3428 = vmatprep.subr.mxu0 0.0
  %3429 = vmatpush1.msra.mxu0 0.0
  %3430 = vmatprep.subr.mxu0 0.0
  %3431 = vmatpush1.msra.mxu0 0.0
  %3432 = vmatprep.subr.mxu0 0.0
  %3433 = vmatpush1.msra.mxu0 0.0
  %3434 = vmatprep.subr.mxu0 0.0
  %3435 = vmatpush1.msra.mxu0 0.0
  %3436 = vmatprep.subr.mxu0 0.0
  %3437 = vmatpush1.msra.mxu0 0.0
  %3438 = vmatprep.subr.mxu0 0.0
  %3439 = vmatpush1.msra.mxu0 0.0
  %3440 = vmatprep.subr.mxu0 0.0
  %3441 = vmatpush1.msra.mxu0 0.0
  %3442 = vmatprep.subr.mxu0 0.0
  %3443 = vmatpush1.msra.mxu0 0.0
  %3444 = vmatprep.subr.mxu0 0.0
  %3445 = vmatpush1.msra.mxu0 0.0
  %3446 = vmatprep.subr.mxu0 0.0
  %3447 = vmatpush1.msra.mxu0 0.0
  %3448 = vmatprep.subr.mxu0 0.0
  %3449 = vmatpush1.msra.mxu0 0.0
  %3450 = vmatprep.subr.mxu0 0.0
  %3451 = vmatpush1.msra.mxu0 0.0
  %3452 = vmatprep.subr.mxu0 0.0
  %3453 = vmatpush1.msra.mxu0 0.0
  %3454 = vmatprep.subr.mxu0 0.0
  %3455 = vmatpush1.msra.mxu0 0.0
  %3456 = vmatprep.subr.mxu0 0.0
  %3457 = vmatpush1.msra.mxu0 0.0
  %3458 = vmatprep.subr.mxu0 0.0
  %3459 = vmatpush1.msra.mxu0 0.0
  %3460 = vmatprep.subr.mxu0 0.0
  %3461 = vmatpush1.msra.mxu0 0.0
  %3462 = vmatprep.subr.mxu0 0.0
  %3463 = vmatpush1.msra.mxu0 0.0
  %3464 = vmatprep.subr.mxu0 0.0
  %3465 = vmatpush1.msra.mxu0 0.0
  %3466 = vmatprep.subr.mxu0 0.0
  %3467 = vmatpush1.msra.mxu0 0.0
  %3468 = vmatprep.subr.mxu0 0.0
  %3469 = vmatpush1.msra.mxu0 0.0
  %3470 = vmatprep.subr.mxu0 0.0
  %3471 = vmatpush1.msra.mxu0 0.0
  %3472 = vmatprep.mubr.f32.mxu0 0.0
  %3473 = vmatmul.mubr.f32.gmra.mrb[0].mxu0 %v3406
  %v3474 = vpop.f32.mrb[0].mxu0
  %v3475 = vadd.f32 %v3386, %v3474
  %v3476 = vpop.f32.mrb[0].mxu0
  %3477 = vdwg.mxu0
  %v3478 = vadd.f32 %v3475, %v621
  %v3479 = vxor.u32 %v3478, 2147483648
  %v3480 = vmul.f32 %v3479, 1.442695
  %v3481 = vpow.pop %v3480
  %v3482 = vadd.f32 %v3481, 1.0
  %v3483 = vrcp.pop %v3482
  %v3484 = vmul.f32 1.0, %v3483
  %v3485 = vtanh.pop %v3478
  %v3486 = vmul.f32 %v3484, %v3020
  %3488 = vrot.lane.b32.xlu0 %v3485, 64
  %v3489 = vpop.permute.xlu0 %3488
  %v3491 = vmul.f32 %v3484, %v3489
  %3493 = vrot.lane.b32.xlu0 %v3491, 32
  %v3494 = vpop.permute.xlu0 %3493
  %v3496 = vadd.f32 %v3486, %v3494
  %v3497 = vtanh.pop %v3496
  %3499 = vrot.lane.b32.xlu0 %v3497, 64
  %v3500 = vpop.permute.xlu0 %3499
  %v3502 = vmul.f32 %v3484, %v3500
  %s3504 = scalar_lea.vmem %s12, 12
  %3505 = vst.msk [vmem:[%s3504] sm:$0x3] %vm377, %v3405
  %3507 = vrot.lane.b32.xlu0 %v3502, 32
  %v3508 = vpop.permute.xlu0 %3507
  %s3510 = scalar_lea.vmem %s13, 12
  %3511 = vst.msk [vmem:[%s3510] sm:$0x3] %vm654, %v3508
  %3513 = vrot.lane.b32.xlu0 %v3496, 96
  %v3514 = vpop.permute.xlu0 %3513
  %v3515 = vsel %vm148, %v3514, 0
  %3517 = vmatprep.subr.mxu0 0.0
  %3518 = vmatpush1.msra.mxu0 %v135
  %3519 = vmatprep.subr.mxu0 0.0
  %3520 = vmatpush1.msra.mxu0 %v136
  %3521 = vmatprep.subr.mxu0 0.0
  %3522 = vmatpush1.msra.mxu0 %v137
  %3523 = vmatprep.subr.mxu0 0.0
  %3524 = vmatpush1.msra.mxu0 %v138
  %3525 = vmatprep.subr.mxu0 0.0
  %3526 = vmatpush1.msra.mxu0 0.0
  %3527 = vmatprep.subr.mxu0 0.0
  %3528 = vmatpush1.msra.mxu0 0.0
  %3529 = vmatprep.subr.mxu0 0.0
  %3530 = vmatpush1.msra.mxu0 0.0
  %3531 = vmatprep.subr.mxu0 0.0
  %3532 = vmatpush1.msra.mxu0 0.0
  %3533 = vmatprep.subr.mxu0 0.0
  %3534 = vmatpush1.msra.mxu0 0.0
  %3535 = vmatprep.subr.mxu0 0.0
  %3536 = vmatpush1.msra.mxu0 0.0
  %3537 = vmatprep.subr.mxu0 0.0
  %3538 = vmatpush1.msra.mxu0 0.0
  %3539 = vmatprep.subr.mxu0 0.0
  %3540 = vmatpush1.msra.mxu0 0.0
  %3541 = vmatprep.subr.mxu0 0.0
  %3542 = vmatpush1.msra.mxu0 0.0
  %3543 = vmatprep.subr.mxu0 0.0
  %3544 = vmatpush1.msra.mxu0 0.0
  %3545 = vmatprep.subr.mxu0 0.0
  %3546 = vmatpush1.msra.mxu0 0.0
  %3547 = vmatprep.subr.mxu0 0.0
  %3548 = vmatpush1.msra.mxu0 0.0
  %3549 = vmatprep.subr.mxu0 0.0
  %3550 = vmatpush1.msra.mxu0 0.0
  %3551 = vmatprep.subr.mxu0 0.0
  %3552 = vmatpush1.msra.mxu0 0.0
  %3553 = vmatprep.subr.mxu0 0.0
  %3554 = vmatpush1.msra.mxu0 0.0
  %3555 = vmatprep.subr.mxu0 0.0
  %3556 = vmatpush1.msra.mxu0 0.0
  %3557 = vmatprep.subr.mxu0 0.0
  %3558 = vmatpush1.msra.mxu0 0.0
  %3559 = vmatprep.subr.mxu0 0.0
  %3560 = vmatpush1.msra.mxu0 0.0
  %3561 = vmatprep.subr.mxu0 0.0
  %3562 = vmatpush1.msra.mxu0 0.0
  %3563 = vmatprep.subr.mxu0 0.0
  %3564 = vmatpush1.msra.mxu0 0.0
  %3565 = vmatprep.subr.mxu0 0.0
  %3566 = vmatpush1.msra.mxu0 0.0
  %3567 = vmatprep.subr.mxu0 0.0
  %3568 = vmatpush1.msra.mxu0 0.0
  %3569 = vmatprep.subr.mxu0 0.0
  %3570 = vmatpush1.msra.mxu0 0.0
  %3571 = vmatprep.subr.mxu0 0.0
  %3572 = vmatpush1.msra.mxu0 0.0
  %3573 = vmatprep.subr.mxu0 0.0
  %3574 = vmatpush1.msra.mxu0 0.0
  %3575 = vmatprep.subr.mxu0 0.0
  %3576 = vmatpush1.msra.mxu0 0.0
  %3577 = vmatprep.subr.mxu0 0.0
  %3578 = vmatpush1.msra.mxu0 0.0
  %3579 = vmatprep.subr.mxu0 0.0
  %3580 = vmatpush1.msra.mxu0 0.0
  %3581 = vmatprep.mubr.f32.mxu0 0.0
  %3582 = vmatmul.mubr.f32.gmra.mrb[0].mxu0 %v3515
  %v3583 = vpop.f32.mrb[0].mxu0
  %v3584 = vadd.f32 0.0, %v3583
  %v3585 = vpop.f32.mrb[0].mxu0
  %3586 = vdwg.mxu0
  %v3587 = vsel %vm148, %v3508, 0
  %3589 = vmatprep.subr.mxu0 0.0
  %3590 = vmatpush1.msra.mxu0 %v131
  %3591 = vmatprep.subr.mxu0 0.0
  %3592 = vmatpush1.msra.mxu0 %v132
  %3593 = vmatprep.subr.mxu0 0.0
  %3594 = vmatpush1.msra.mxu0 %v133
  %3595 = vmatprep.subr.mxu0 0.0
  %3596 = vmatpush1.msra.mxu0 %v134
  %3597 = vmatprep.subr.mxu0 0.0
  %3598 = vmatpush1.msra.mxu0 0.0
  %3599 = vmatprep.subr.mxu0 0.0
  %3600 = vmatpush1.msra.mxu0 0.0
  %3601 = vmatprep.subr.mxu0 0.0
  %3602 = vmatpush1.msra.mxu0 0.0
  %3603 = vmatprep.subr.mxu0 0.0
  %3604 = vmatpush1.msra.mxu0 0.0
  %3605 = vmatprep.subr.mxu0 0.0
  %3606 = vmatpush1.msra.mxu0 0.0
  %3607 = vmatprep.subr.mxu0 0.0
  %3608 = vmatpush1.msra.mxu0 0.0
  %3609 = vmatprep.subr.mxu0 0.0
  %3610 = vmatpush1.msra.mxu0 0.0
  %3611 = vmatprep.subr.mxu0 0.0
  %3612 = vmatpush1.msra.mxu0 0.0
  %3613 = vmatprep.subr.mxu0 0.0
  %3614 = vmatpush1.msra.mxu0 0.0
  %3615 = vmatprep.subr.mxu0 0.0
  %3616 = vmatpush1.msra.mxu0 0.0
  %3617 = vmatprep.subr.mxu0 0.0
  %3618 = vmatpush1.msra.mxu0 0.0
  %3619 = vmatprep.subr.mxu0 0.0
  %3620 = vmatpush1.msra.mxu0 0.0
  %3621 = vmatprep.subr.mxu0 0.0
  %3622 = vmatpush1.msra.mxu0 0.0
  %3623 = vmatprep.subr.mxu0 0.0
  %3624 = vmatpush1.msra.mxu0 0.0
  %3625 = vmatprep.subr.mxu0 0.0
  %3626 = vmatpush1.msra.mxu0 0.0
  %3627 = vmatprep.subr.mxu0 0.0
  %3628 = vmatpush1.msra.mxu0 0.0
  %3629 = vmatprep.subr.mxu0 0.0
  %3630 = vmatpush1.msra.mxu0 0.0
  %3631 = vmatprep.subr.mxu0 0.0
  %3632 = vmatpush1.msra.mxu0 0.0
  %3633 = vmatprep.subr.mxu0 0.0
  %3634 = vmatpush1.msra.mxu0 0.0
  %3635 = vmatprep.subr.mxu0 0.0
  %3636 = vmatpush1.msra.mxu0 0.0
  %3637 = vmatprep.subr.mxu0 0.0
  %3638 = vmatpush1.msra.mxu0 0.0
  %3639 = vmatprep.subr.mxu0 0.0
  %3640 = vmatpush1.msra.mxu0 0.0
  %3641 = vmatprep.subr.mxu0 0.0
  %3642 = vmatpush1.msra.mxu0 0.0
  %3643 = vmatprep.subr.mxu0 0.0
  %3644 = vmatpush1.msra.mxu0 0.0
  %3645 = vmatprep.subr.mxu0 0.0
  %3646 = vmatpush1.msra.mxu0 0.0
  %3647 = vmatprep.subr.mxu0 0.0
  %3648 = vmatpush1.msra.mxu0 0.0
  %3649 = vmatprep.subr.mxu0 0.0
  %3650 = vmatpush1.msra.mxu0 0.0
  %3651 = vmatprep.subr.mxu0 0.0
  %3652 = vmatpush1.msra.mxu0 0.0
  %3653 = vmatprep.mubr.f32.mxu0 0.0
  %3654 = vmatmul.mubr.f32.gmra.mrb[0].mxu0 %v3587
  %v3655 = vpop.f32.mrb[0].mxu0
  %v3656 = vadd.f32 %v3584, %v3655
  %v3657 = vpop.f32.mrb[0].mxu0
  %3658 = vdwg.mxu0
  %v3659 = vadd.f32 %v3656, %v296
  %v3662 = vunpack.c.l.s4 1966171168
  %v3663 = vunpack.c.0.s8 %v3662
  %v3664 = vlaneseq
  %v3665 = vshrl.u32 %v3664, 7
  %v3666 = vsub.s32 %v3663, %v3665
  %v3667 = vrot.slane %v3659, %v3666
  %v3668 = vcombine.high %v3667, %v3667
  %v3670 = vunpack.c.l.s4 1966171168
  %v3671 = vunpack.c.0.s8 %v3670
  %v3672 = vlaneseq
  %v3673 = vshrl.u32 %v3672, 7
  %v3674 = vsub.s32 %v3671, %v3673
  %v3675 = vrot.slane %v3667, %v3674
  %v3677 = vunpack.c.l.s4 1966171168
  %v3678 = vunpack.c.0.s8 %v3677
  %v3679 = vlaneseq
  %v3680 = vshrl.u32 %v3679, 7
  %v3681 = vsub.s32 %v3678, %v3680
  %v3682 = vrot.slane %v3668, %v3681
  %v3683 = vlaneseq
  %v3684 = vshrl.u32 %v3683, 7
  %v3685 = vsub.s32 0, %v3684
  %v3686 = vrot.slane %v3675, %v3685
  %v3687 = vlaneseq
  %v3688 = vshrl.u32 %v3687, 7
  %v3689 = vsub.s32 0, %v3688
  %v3690 = vrot.slane %v3682, %v3689
  %v3693 = vadd.f32 %v3686, %v125
  %v3694 = vadd.f32 %v3690, %v129
  %v3695 = vtanh.pop %v3693
  %v3696 = vtanh.pop %v3694
  %v3697 = vmul.f32 %v3695, %v340
  %v3698 = vmul.f32 %v3696, %v340
  %v3699 = vsel %vm344, %v3697, 0.0
  %3700 = vadd.xlane.f32.xlu0 %v3699
  %v3701 = vpop.xlane.xlu0 %3700
  %v3702 = vsel %vm344, %v3698, 0.0
  %3703 = vadd.xlane.f32.xlu0 %v3702
  %v3704 = vpop.xlane.xlu0 %3703
  %v3705 = vadd.f32 %v3701, %v358
  %v3706 = vadd.f32 %v3704, %v358
  %v3709 = vlaneseq
  %v3710 = vshrl.u32 %v3709, 7
  %v3711 = vsub.s32 %v365, %v3710
  %v3712 = vrot.slane %v3705, %v3711
  %v3713 = vlaneseq
  %v3714 = vshrl.u32 %v3713, 7
  %v3715 = vsub.s32 %v365, %v3714
  %v3716 = vrot.slane %v3706, %v3715
  %v3717 = vsel %vm374, %v3716, %v3712
  %v3719 = vsel %vm377, %v3717, -inf
  %3720 = vmax.xlane.f32.xlu0 %v3719
  %v3721 = vpop.xlane.xlu0 %3720
  %v3723 = vlaneseq
  %v3724 = vshrl.u32 %v3723, 7
  %v3725 = vsub.s32 0, %v3724
  %v3726 = vrot.slane %v3721, %v3725
  %v3727 = vlaneseq
  %v3728 = vshrl.u32 %v3727, 7
  %v3729 = vsub.s32 1, %v3728
  %v3730 = vrot.slane %v3721, %v3729
  %v3733 = vsub.f32 %v3705, %v3726
  %v3734 = vsub.f32 %v3706, %v3730
  %v3735 = vmul.f32 %v3733, 1.442695
  %v3736 = vpow.pop %v3735
  %v3737 = vmul.f32 %v3734, 1.442695
  %v3738 = vpow.pop %v3737
  %3741 = vset.pattern.permute.xlu0 0
  %3742 = vperm.xlu0 %3741, %v3736
  %v3743 = vpop.permute.xlu0 %3742
  %3744 = vset.pattern.permute.xlu0 0
  %3745 = vperm.xlu0 %3744, %v3738
  %v3746 = vpop.permute.xlu0 %3745
  %v3747 = vlaneseq
  %v3748 = vshrl.u32 %v3747, 7
  %v3749 = vsub.s32 %v365, %v3748
  %v3750 = vrot.slane %v3743, %v3749
  %v3751 = vlaneseq
  %v3752 = vshrl.u32 %v3751, 7
  %v3753 = vsub.s32 %v365, %v3752
  %v3754 = vrot.slane %v3746, %v3753
  %v3755 = vsel %vm374, %v3754, %v3750
  %v3757 = vsel %vm377, %v3755, 0.0
  %3758 = vadd.xlane.f32.xlu0 %v3757
  %v3759 = vpop.xlane.xlu0 %3758
  %v3760 = vrcp.pop %v3759
  %v3762 = vlaneseq
  %v3763 = vshrl.u32 %v3762, 7
  %v3764 = vsub.s32 0, %v3763
  %v3765 = vrot.slane %v3760, %v3764
  %v3766 = vlaneseq
  %v3767 = vshrl.u32 %v3766, 7
  %v3768 = vsub.s32 1, %v3767
  %v3769 = vrot.slane %v3760, %v3768
  %v3772 = vmul.f32 %v3736, %v3765
  %v3773 = vmul.f32 %v3738, %v3769
  %s3774 = scalar_lea.vmem %s1, 14
  %v3775 = vld [vmem:[%s3774] sm:$0x3]
  %v3777 = vlaneseq
  %v3778 = vshrl.u32 %v3777, 7
  %v3779 = vsub.s32 0, %v3778
  %v3780 = vrot.slane %v3775, %v3779
  %3782 = vbcast.lane.b32.xlu0 %v3780, 256
  %v3783 = vpop.permute.xlu0 %3782
  %v3784 = vlaneseq
  %v3785 = vshrl.u32 %v3784, 7
  %v3786 = vsub.s32 1, %v3785
  %v3787 = vrot.slane %v3775, %v3786
  %3789 = vbcast.lane.b32.xlu0 %v3787, 256
  %v3790 = vpop.permute.xlu0 %3789
  %v3793 = vmul.f32 %v3772, %v3783
  %v3794 = vmul.f32 %v3773, %v3790
  %3795 = vmatprep.subr.mxu0 0.0
  %3796 = vmatpush1.msra.mxu0 %v143
  %3797 = vmatprep.subr.mxu0 0.0
  %3798 = vmatpush1.msra.mxu0 %v144
  %3799 = vmatprep.subr.mxu0 0.0
  %3800 = vmatpush1.msra.mxu0 %v145
  %3801 = vmatprep.subr.mxu0 0.0
  %3802 = vmatpush1.msra.mxu0 %v146
  %3803 = vmatprep.subr.mxu0 0.0
  %3804 = vmatpush1.msra.mxu0 0.0
  %3805 = vmatprep.subr.mxu0 0.0
  %3806 = vmatpush1.msra.mxu0 0.0
  %3807 = vmatprep.subr.mxu0 0.0
  %3808 = vmatpush1.msra.mxu0 0.0
  %3809 = vmatprep.subr.mxu0 0.0
  %3810 = vmatpush1.msra.mxu0 0.0
  %3811 = vmatprep.subr.mxu0 0.0
  %3812 = vmatpush1.msra.mxu0 0.0
  %3813 = vmatprep.subr.mxu0 0.0
  %3814 = vmatpush1.msra.mxu0 0.0
  %3815 = vmatprep.subr.mxu0 0.0
  %3816 = vmatpush1.msra.mxu0 0.0
  %3817 = vmatprep.subr.mxu0 0.0
  %3818 = vmatpush1.msra.mxu0 0.0
  %3819 = vmatprep.subr.mxu0 0.0
  %3820 = vmatpush1.msra.mxu0 0.0
  %3821 = vmatprep.subr.mxu0 0.0
  %3822 = vmatpush1.msra.mxu0 0.0
  %3823 = vmatprep.subr.mxu0 0.0
  %3824 = vmatpush1.msra.mxu0 0.0
  %3825 = vmatprep.subr.mxu0 0.0
  %3826 = vmatpush1.msra.mxu0 0.0
  %3827 = vmatprep.subr.mxu0 0.0
  %3828 = vmatpush1.msra.mxu0 0.0
  %3829 = vmatprep.subr.mxu0 0.0
  %3830 = vmatpush1.msra.mxu0 0.0
  %3831 = vmatprep.subr.mxu0 0.0
  %3832 = vmatpush1.msra.mxu0 0.0
  %3833 = vmatprep.subr.mxu0 0.0
  %3834 = vmatpush1.msra.mxu0 0.0
  %3835 = vmatprep.subr.mxu0 0.0
  %3836 = vmatpush1.msra.mxu0 0.0
  %3837 = vmatprep.subr.mxu0 0.0
  %3838 = vmatpush1.msra.mxu0 0.0
  %3839 = vmatprep.subr.mxu0 0.0
  %3840 = vmatpush1.msra.mxu0 0.0
  %3841 = vmatprep.subr.mxu0 0.0
  %3842 = vmatpush1.msra.mxu0 0.0
  %3843 = vmatprep.subr.mxu0 0.0
  %3844 = vmatpush1.msra.mxu0 0.0
  %3845 = vmatprep.subr.mxu0 0.0
  %3846 = vmatpush1.msra.mxu0 0.0
  %3847 = vmatprep.subr.mxu0 0.0
  %3848 = vmatpush1.msra.mxu0 0.0
  %3849 = vmatprep.subr.mxu0 0.0
  %3850 = vmatpush1.msra.mxu0 0.0
  %3851 = vmatprep.subr.mxu0 0.0
  %3852 = vmatpush1.msra.mxu0 0.0
  %3853 = vmatprep.subr.mxu0 0.0
  %3854 = vmatpush1.msra.mxu0 0.0
  %3855 = vmatprep.subr.mxu0 0.0
  %3856 = vmatpush1.msra.mxu0 0.0
  %3857 = vmatprep.subr.mxu0 0.0
  %3858 = vmatpush1.msra.mxu0 0.0
  %3859 = vmatprep.mubr.f32.mxu0 0.0
  %3860 = vmatmul.mubr.f32.gmra.mrb[0].mxu0 %v3587
  %v3861 = vpop.f32.mrb[0].mxu0
  %v3862 = vadd.f32 0.0, %v3861
  %v3863 = vpop.f32.mrb[0].mxu0
  %3864 = vdwg.mxu0
  %3867 = vset.pattern.permute.xlu0 0
  %3868 = vperm.xlu0 %3867, %v3793
  %v3869 = vpop.permute.xlu0 %3868
  %3870 = vset.pattern.permute.xlu0 0
  %3871 = vperm.xlu0 %3870, %v3794
  %v3872 = vpop.permute.xlu0 %3871
  %v3873 = vlaneseq
  %v3874 = vshrl.u32 %v3873, 7
  %v3875 = vsub.s32 %v365, %v3874
  %v3876 = vrot.slane %v3869, %v3875
  %v3877 = vlaneseq
  %v3878 = vshrl.u32 %v3877, 7
  %v3879 = vsub.s32 %v365, %v3878
  %v3880 = vrot.slane %v3872, %v3879
  %v3881 = vsel %vm374, %v3880, %v3876
  %v3882 = vsel %vm540, %v3881, 0
  %3884 = vmatprep.subr.mxu0 0.0
  %3885 = vmatpush1.msra.mxu0 %v545
  %3886 = vmatprep.subr.mxu0 0.0
  %3887 = vmatpush1.msra.mxu0 0.0
  %3888 = vmatprep.subr.mxu0 0.0
  %3889 = vmatpush1.msra.mxu0 0.0
  %3890 = vmatprep.subr.mxu0 0.0
  %3891 = vmatpush1.msra.mxu0 0.0
  %3892 = vmatprep.subr.mxu0 0.0
  %3893 = vmatpush1.msra.mxu0 0.0
  %3894 = vmatprep.subr.mxu0 0.0
  %3895 = vmatpush1.msra.mxu0 0.0
  %3896 = vmatprep.subr.mxu0 0.0
  %3897 = vmatpush1.msra.mxu0 0.0
  %3898 = vmatprep.subr.mxu0 0.0
  %3899 = vmatpush1.msra.mxu0 0.0
  %3900 = vmatprep.subr.mxu0 0.0
  %3901 = vmatpush1.msra.mxu0 0.0
  %3902 = vmatprep.subr.mxu0 0.0
  %3903 = vmatpush1.msra.mxu0 0.0
  %3904 = vmatprep.subr.mxu0 0.0
  %3905 = vmatpush1.msra.mxu0 0.0
  %3906 = vmatprep.subr.mxu0 0.0
  %3907 = vmatpush1.msra.mxu0 0.0
  %3908 = vmatprep.subr.mxu0 0.0
  %3909 = vmatpush1.msra.mxu0 0.0
  %3910 = vmatprep.subr.mxu0 0.0
  %3911 = vmatpush1.msra.mxu0 0.0
  %3912 = vmatprep.subr.mxu0 0.0
  %3913 = vmatpush1.msra.mxu0 0.0
  %3914 = vmatprep.subr.mxu0 0.0
  %3915 = vmatpush1.msra.mxu0 0.0
  %3916 = vmatprep.subr.mxu0 0.0
  %3917 = vmatpush1.msra.mxu0 0.0
  %3918 = vmatprep.subr.mxu0 0.0
  %3919 = vmatpush1.msra.mxu0 0.0
  %3920 = vmatprep.subr.mxu0 0.0
  %3921 = vmatpush1.msra.mxu0 0.0
  %3922 = vmatprep.subr.mxu0 0.0
  %3923 = vmatpush1.msra.mxu0 0.0
  %3924 = vmatprep.subr.mxu0 0.0
  %3925 = vmatpush1.msra.mxu0 0.0
  %3926 = vmatprep.subr.mxu0 0.0
  %3927 = vmatpush1.msra.mxu0 0.0
  %3928 = vmatprep.subr.mxu0 0.0
  %3929 = vmatpush1.msra.mxu0 0.0
  %3930 = vmatprep.subr.mxu0 0.0
  %3931 = vmatpush1.msra.mxu0 0.0
  %3932 = vmatprep.subr.mxu0 0.0
  %3933 = vmatpush1.msra.mxu0 0.0
  %3934 = vmatprep.subr.mxu0 0.0
  %3935 = vmatpush1.msra.mxu0 0.0
  %3936 = vmatprep.subr.mxu0 0.0
  %3937 = vmatpush1.msra.mxu0 0.0
  %3938 = vmatprep.subr.mxu0 0.0
  %3939 = vmatpush1.msra.mxu0 0.0
  %3940 = vmatprep.subr.mxu0 0.0
  %3941 = vmatpush1.msra.mxu0 0.0
  %3942 = vmatprep.subr.mxu0 0.0
  %3943 = vmatpush1.msra.mxu0 0.0
  %3944 = vmatprep.subr.mxu0 0.0
  %3945 = vmatpush1.msra.mxu0 0.0
  %3946 = vmatprep.subr.mxu0 0.0
  %3947 = vmatpush1.msra.mxu0 0.0
  %3948 = vmatprep.mubr.f32.mxu0 0.0
  %3949 = vmatmul.mubr.f32.gmra.mrb[0].mxu0 %v3882
  %v3950 = vpop.f32.mrb[0].mxu0
  %v3951 = vadd.f32 %v3862, %v3950
  %v3952 = vpop.f32.mrb[0].mxu0
  %3953 = vdwg.mxu0
  %v3954 = vadd.f32 %v3951, %v621
  %v3955 = vxor.u32 %v3954, 2147483648
  %v3956 = vmul.f32 %v3955, 1.442695
  %v3957 = vpow.pop %v3956
  %v3958 = vadd.f32 %v3957, 1.0
  %v3959 = vrcp.pop %v3958
  %v3960 = vmul.f32 1.0, %v3959
  %v3961 = vtanh.pop %v3954
  %v3962 = vmul.f32 %v3960, %v3496
  %3964 = vrot.lane.b32.xlu0 %v3961, 64
  %v3965 = vpop.permute.xlu0 %3964
  %v3967 = vmul.f32 %v3960, %v3965
  %3969 = vrot.lane.b32.xlu0 %v3967, 32
  %v3970 = vpop.permute.xlu0 %3969
  %v3972 = vadd.f32 %v3962, %v3970
  %v3973 = vtanh.pop %v3972
  %3975 = vrot.lane.b32.xlu0 %v3973, 64
  %v3976 = vpop.permute.xlu0 %3975
  %v3978 = vmul.f32 %v3960, %v3976
  %s3980 = scalar_lea.vmem %s12, 14
  %3981 = vst.msk [vmem:[%s3980] sm:$0x3] %vm377, %v3881
  %3983 = vrot.lane.b32.xlu0 %v3978, 32
  %v3984 = vpop.permute.xlu0 %3983
  %s3986 = scalar_lea.vmem %s13, 14
  %3987 = vst.msk [vmem:[%s3986] sm:$0x3] %vm654, %v3984
  // Predicated region
  $region50: #{encoder_forward.1} parent=0 // pred_check
    _
  $region51: #{encoder_forward.1} parent=0 // pred_check_branch
    %3989 = sbr.rel (0) target = $region53
  $region52: #{encoder_forward.1} parent=0 // pred_region
    _
  $region53: #{encoder_forward.1} parent=0 // pred_fallthru
    _
  // Predicated region
  $region54: #{encoder_forward.1} parent=0 // pred_check
    _
  $region55: #{encoder_forward.1} parent=0 // pred_check_branch
    %3991 = sbr.rel (0) target = $region57
  $region56: #{encoder_forward.1} parent=0 // pred_region
    _
  $region57: #{encoder_forward.1} parent=0 // pred_fallthru
    _
  // Predicated region
  $region58: #{encoder_forward.1} parent=0 // pred_check
    _
  $region59: #{encoder_forward.1} parent=0 // pred_check_branch
    %3993 = sbr.rel (0) target = $region61
  $region60: #{encoder_forward.1} parent=0 // pred_region
    _
  $region61: #{encoder_forward.1} parent=0 // pred_fallthru
    _
  // Predicated region
  $region62: #{encoder_forward.1} parent=0 // pred_check
    _
  $region63: #{encoder_forward.1} parent=0 // pred_check_branch
    %3995 = sbr.rel (0) target = $region65
  $region64: #{encoder_forward.1} parent=0 // pred_region
    _
  $region65: #{encoder_forward.1} parent=0 // pred_fallthru
    _

</llo_original>
